<compile_context>
chip_gen: v6e
topology: v6e:2x2x1
jax: 0.10.0
libtpu: 0.0.40
codegen_flags: <defaults>
</compile_context>

<pallas_src>
import functools

import jax
import jax.numpy as jnp
from jax.experimental import pallas as pl
from jax.experimental.pallas import tpu as pltpu

K = 9            # directional conv kernel length
PAD = K // 2     # = 4


# ----------------------------------------------------------------------------
# Fused Pallas kernel: 4 directional convs + concat + 1x1 conv + BN + ReLU
# ----------------------------------------------------------------------------
def _lam_fused_kernel(xp_ref, wconv_ref, wc_ref, s_ref, t_ref, o_ref, *, H, W):
    """One batch element per grid step.

    xp_ref   : (1, H+2P, W+2P, Cin)  zero-padded, channel-last input
    wconv_ref: (4, K*Cin, Cq)        unfolded per-direction conv weights
    wc_ref   : (4*Cq, Cout)          1x1 conv weight
    s_ref    : (1, Cout)             folded BN scale
    t_ref    : (1, Cout)             folded BN shift (conv biases folded in)
    o_ref    : (1, Cout, H*W)        output, channels-major (lane-dense stores)
    """
    x = xp_ref[0]                        # (Hp, Wp, Cin)
    C = x.shape[-1]
    HW = H * W
    P2 = 2 * PAD

    # (row, col) tap offsets into the padded input for each direction.
    branch_offsets = (
        (lambda k: PAD, lambda k: k),        # deconv1: (1, 9) along W
        (lambda k: k, lambda k: PAD),        # deconv2: (9, 1) along H
        (lambda k: k, lambda k: P2 - k),     # deconv3 o h_transform (anti-diag)
        (lambda k: P2 - k, lambda k: k),     # deconv4 o v_transform (anti-diag)
    )

    mids = []
    for i, (row0, col0) in enumerate(branch_offsets):
        # Unfold the K taps into one (H*W, K*Cin) activation matrix and run a
        # single MXU contraction per direction.
        taps = [
            x[row0(k):row0(k) + H, col0(k):col0(k) + W, :].reshape(HW, C)
            for k in range(K)
        ]
        u = jnp.concatenate(taps, axis=-1)                     # (H*W, K*Cin)
        mids.append(jnp.dot(u, wconv_ref[i],
                            preferred_element_type=jnp.float32))

    mid = jnp.concatenate(mids, axis=-1)                       # (H*W, 4*Cq)
    z = jnp.dot(mid, wc_ref[...], preferred_element_type=jnp.float32)
    z = jnp.maximum(z * s_ref[...] + t_ref[...], 0.0)          # BN(eval) + ReLU
    o_ref[0] = z.T.astype(o_ref.dtype)                         # (Cout, H*W)


def lam_forward_pallas(x, p):
    """x: (B, Cin, H, W) NCHW float32 -> (B, Cout, H, W)."""
    B, C, H, W = x.shape
    assert H == W, "LAM shear transforms require square spatial maps"
    wconv = p["wconv"]                   # (4, K*C, Cq)
    wc = p["wc_io"]                      # (4*Cq, Cout)
    Cq = wconv.shape[-1]
    Cout = wc.shape[-1]
    Hp, Wp = H + 2 * PAD, W + 2 * PAD

    # Only XLA-side glue: one channel-last transpose + one zero pad of x.
    xcl = jnp.transpose(x, (0, 2, 3, 1))
    xp = jnp.pad(xcl, ((0, 0), (PAD, PAD), (PAD, PAD), (0, 0)))

    kernel = functools.partial(_lam_fused_kernel, H=H, W=W)
    out = pl.pallas_call(
        kernel,
        out_shape=jax.ShapeDtypeStruct((B, Cout, H * W), jnp.float32),
        grid=(B,),
        in_specs=[
            pl.BlockSpec((1, Hp, Wp, C), lambda b: (b, 0, 0, 0)),
            pl.BlockSpec((4, K * C, Cq), lambda b: (0, 0, 0)),
            pl.BlockSpec((4 * Cq, Cout), lambda b: (0, 0)),
            pl.BlockSpec((1, Cout), lambda b: (0, 0)),
            pl.BlockSpec((1, Cout), lambda b: (0, 0)),
        ],
        out_specs=pl.BlockSpec((1, Cout, H * W), lambda b: (b, 0, 0)),
        compiler_params=pltpu.CompilerParams(
            dimension_semantics=("parallel",)),
    )(xp, wconv, wc, p["bn_scale_k"], p["bn_shift_k"])
    return out.reshape(B, Cout, H, W)                          # free reshape


# ----------------------------------------------------------------------------
# Shear transforms (used only by the pure-JAX reference; assume H == W,
# exactly like the PyTorch module).
# ----------------------------------------------------------------------------
def h_transform(x):
    B, C, H, W = x.shape
    x = jnp.pad(x, ((0, 0), (0, 0), (0, 0), (0, W)))
    x = x.reshape(B, C, -1)[..., :-W]
    return x.reshape(B, C, H, 2 * W - 1)


def inv_h_transform(x):
    B, C, H, _ = x.shape
    x = x.reshape(B, C, -1)
    x = jnp.pad(x, ((0, 0), (0, 0), (0, H)))
    x = x.reshape(B, C, H, 2 * H)
    return x[..., :H]


def v_transform(x):
    x = jnp.transpose(x, (0, 1, 3, 2))
    B, C, W, H = x.shape
    x = jnp.pad(x, ((0, 0), (0, 0), (0, 0), (0, H)))
    x = x.reshape(B, C, -1)[..., :-H]
    x = x.reshape(B, C, W, 2 * H - 1)
    return jnp.transpose(x, (0, 1, 3, 2))


def inv_v_transform(x):
    x = jnp.transpose(x, (0, 1, 3, 2))
    B, C, W, _ = x.shape
    x = x.reshape(B, C, -1)
    x = jnp.pad(x, ((0, 0), (0, 0), (0, W)))
    x = x.reshape(B, C, W, 2 * W)
    x = x[..., :W]
    return jnp.transpose(x, (0, 1, 3, 2))


# ----------------------------------------------------------------------------
# Pure-JAX reference (faithful to the PyTorch module, for correctness check)
# ----------------------------------------------------------------------------
def _torch_conv(x, w, b, pad):
    y = jax.lax.conv_general_dilated(
        x, w, window_strides=(1, 1),
        padding=((pad[0], pad[0]), (pad[1], pad[1])),
        dimension_numbers=("NCHW", "OIHW", "NCHW"))
    if b is not None:
        y = y + b[None, :, None, None]
    return y


def lam_forward_ref(x, p):
    x1 = _torch_conv(x, p["w1_t"], p["b1"], (0, 4))
    x2 = _torch_conv(x, p["w2_t"], p["b2"], (4, 0))
    x3 = inv_h_transform(_torch_conv(h_transform(x), p["w3_t"], p["b3"], (4, 0)))
    x4 = inv_v_transform(_torch_conv(v_transform(x), p["w4_t"], p["b4"], (0, 4)))
    xc = jnp.concatenate([x1, x2, x3, x4], axis=1)
    y = _torch_conv(xc, p["wc_t"], None, (0, 0))
    inv_std = 1.0 / jnp.sqrt(p["bn_var"] + p["bn_eps"])
    y = (y - p["bn_mean"][None, :, None, None]) * inv_std[None, :, None, None]
    y = y * p["bn_gamma"][None, :, None, None] + p["bn_beta"][None, :, None, None]
    return jnp.maximum(y, 0.0)


# ----------------------------------------------------------------------------
# Deterministic parameter init (PyTorch layouts + fused kernel layouts)
# ----------------------------------------------------------------------------
def make_params(key, in_channels, out_channels):
    C, O = in_channels, out_channels
    Cq, Cm = C // 8, C // 2
    ks = jax.random.split(key, 14)
    f32 = jnp.float32

    def rnd(k, shape, s=0.1):
        return (s * jax.random.normal(k, shape)).astype(f32)

    p = {}
    # PyTorch-layout (OIHW) weights
    p["w1_t"] = rnd(ks[0], (Cq, C, 1, 9)); p["b1"] = rnd(ks[1], (Cq,))
    p["w2_t"] = rnd(ks[2], (Cq, C, 9, 1)); p["b2"] = rnd(ks[3], (Cq,))
    p["w3_t"] = rnd(ks[4], (Cq, C, 9, 1)); p["b3"] = rnd(ks[5], (Cq,))
    p["w4_t"] = rnd(ks[6], (Cq, C, 1, 9)); p["b4"] = rnd(ks[7], (Cq,))
    p["wc_t"] = rnd(ks[8], (O, Cm, 1, 1))
    p["bn_gamma"] = (1.0 + rnd(ks[9], (O,))).astype(f32)
    p["bn_beta"] = rnd(ks[10], (O,))
    p["bn_mean"] = rnd(ks[11], (O,))
    p["bn_var"] = jax.random.uniform(ks[12], (O,), minval=0.5, maxval=1.5).astype(f32)
    p["bn_eps"] = 1e-5

    # ---- fused-kernel layouts ------------------------------------------------
    def unfold_w(w_t):
        # (Cq, C, 1, 9) or (Cq, C, 9, 1) -> (K*C, Cq), rows ordered (k, c)
        w = w_t[:, :, 0, :] if w_t.shape[2] == 1 else w_t[:, :, :, 0]  # (Cq,C,K)
        return jnp.transpose(w, (2, 1, 0)).reshape(K * C, Cq)

    p["wconv"] = jnp.stack(
        [unfold_w(p["w1_t"]), unfold_w(p["w2_t"]),
         unfold_w(p["w3_t"]), unfold_w(p["w4_t"])], axis=0)        # (4, K*C, Cq)
    p["wc_io"] = p["wc_t"][:, :, 0, 0].T                            # (Cm, O)

    scale = p["bn_gamma"] / jnp.sqrt(p["bn_var"] + p["bn_eps"])
    shift = p["bn_beta"] - p["bn_mean"] * scale
    bias_cat = jnp.concatenate([p["b1"], p["b2"], p["b3"], p["b4"]])  # (Cm,)
    p["bn_scale_k"] = scale.reshape(1, O)
    # Fold the four directional-conv biases through the 1x1 conv into BN shift.
    p["bn_shift_k"] = (shift + scale * (bias_cat @ p["wc_io"])).reshape(1, O)
    return p


if __name__ == "__main__":
    B, in_channels, out_channels, H, W = 2, 16, 8, 16, 16

    key = jax.random.PRNGKey(0)
    k_x, k_p = jax.random.split(key)
    x = jax.random.normal(k_x, (B, in_channels, H, W), dtype=jnp.float32)
    params = make_params(k_p, in_channels, out_channels)

    out = jax.block_until_ready(jax.jit(lam_forward_pallas)(x, params))
    ref = jax.block_until_ready(lam_forward_ref(x, params))

    assert out.shape == (B, out_channels, H, W), out.shape
    max_err = float(jnp.max(jnp.abs(out - ref)))
    assert jnp.allclose(out, ref, atol=1e-4, rtol=1e-4), max_err
    print("KERNEL_OK")
</pallas_src>

<mosaic_0001>
module attributes {stable_mosaic.version = 11 : i64} {
  func.func @_lam_fused_kernel(%arg0: i32, %arg1: memref<1x24x24x16xf32, #tpu.memory_space<vmem>>, %arg2: memref<4x144x2xf32, #tpu.memory_space<vmem>>, %arg3: memref<8x8xf32, #tpu.memory_space<vmem>>, %arg4: memref<1x8xf32, #tpu.memory_space<vmem>>, %arg5: memref<1x8xf32, #tpu.memory_space<vmem>>, %arg6: memref<1x8x256xf32, #tpu.memory_space<vmem>>) attributes {dimension_semantics = [#tpu.dimension_semantics<parallel>], iteration_bounds = array<i64: 2>, scalar_prefetch = 0 : i64, scratch_operands = 0 : i64, tpu.core_type = #tpu.core_type<tc>, window_params = [{transform_indices = @transform_0, window_bounds = array<i64: 1, 24, 24, 16>}, {pipeline_mode = #tpu.pipeline_mode<synchronous>, transform_indices = @transform_1, window_bounds = array<i64: 4, 144, 2>}, {pipeline_mode = #tpu.pipeline_mode<synchronous>, transform_indices = @transform_2, window_bounds = array<i64: 8, 8>}, {pipeline_mode = #tpu.pipeline_mode<synchronous>, transform_indices = @transform_3, window_bounds = array<i64: 1, 8>}, {pipeline_mode = #tpu.pipeline_mode<synchronous>, transform_indices = @transform_4, window_bounds = array<i64: 1, 8>}, {transform_indices = @transform_5, window_bounds = array<i64: 1, 8, 256>}]} {
    %c0 = arith.constant 0 : index
    %c0_0 = arith.constant 0 : index
    %c0_1 = arith.constant 0 : index
    %c0_2 = arith.constant 0 : index
    %0 = vector.load %arg1[%c0, %c0_0, %c0_1, %c0_2] : memref<1x24x24x16xf32, #tpu.memory_space<vmem>>, vector<1x24x24x16xf32>
    %1 = vector.shape_cast %0 : vector<1x24x24x16xf32> to vector<24x24x16xf32>
    %2 = vector.extract_strided_slice %1 {offsets = [4, 0, 0], sizes = [16, 16, 16], strides = [1, 1, 1]} : vector<24x24x16xf32> to vector<16x16x16xf32>
    %3 = vector.shape_cast %2 : vector<16x16x16xf32> to vector<256x16xf32>
    %4 = vector.extract_strided_slice %1 {offsets = [4, 1, 0], sizes = [16, 16, 16], strides = [1, 1, 1]} : vector<24x24x16xf32> to vector<16x16x16xf32>
    %5 = vector.shape_cast %4 : vector<16x16x16xf32> to vector<256x16xf32>
    %6 = vector.extract_strided_slice %1 {offsets = [4, 2, 0], sizes = [16, 16, 16], strides = [1, 1, 1]} : vector<24x24x16xf32> to vector<16x16x16xf32>
    %7 = vector.shape_cast %6 : vector<16x16x16xf32> to vector<256x16xf32>
    %8 = vector.extract_strided_slice %1 {offsets = [4, 3, 0], sizes = [16, 16, 16], strides = [1, 1, 1]} : vector<24x24x16xf32> to vector<16x16x16xf32>
    %9 = vector.shape_cast %8 : vector<16x16x16xf32> to vector<256x16xf32>
    %10 = vector.extract_strided_slice %1 {offsets = [4, 4, 0], sizes = [16, 16, 16], strides = [1, 1, 1]} : vector<24x24x16xf32> to vector<16x16x16xf32>
    %11 = vector.shape_cast %10 : vector<16x16x16xf32> to vector<256x16xf32>
    %12 = vector.extract_strided_slice %1 {offsets = [4, 5, 0], sizes = [16, 16, 16], strides = [1, 1, 1]} : vector<24x24x16xf32> to vector<16x16x16xf32>
    %13 = vector.shape_cast %12 : vector<16x16x16xf32> to vector<256x16xf32>
    %14 = vector.extract_strided_slice %1 {offsets = [4, 6, 0], sizes = [16, 16, 16], strides = [1, 1, 1]} : vector<24x24x16xf32> to vector<16x16x16xf32>
    %15 = vector.shape_cast %14 : vector<16x16x16xf32> to vector<256x16xf32>
    %16 = vector.extract_strided_slice %1 {offsets = [4, 7, 0], sizes = [16, 16, 16], strides = [1, 1, 1]} : vector<24x24x16xf32> to vector<16x16x16xf32>
    %17 = vector.shape_cast %16 : vector<16x16x16xf32> to vector<256x16xf32>
    %18 = vector.extract_strided_slice %1 {offsets = [4, 8, 0], sizes = [16, 16, 16], strides = [1, 1, 1]} : vector<24x24x16xf32> to vector<16x16x16xf32>
    %19 = vector.shape_cast %18 : vector<16x16x16xf32> to vector<256x16xf32>
    %20 = tpu.concatenate %3, %5, %7, %9, %11, %13, %15, %17, %19 in 1 : vector<256x16xf32>, vector<256x16xf32>, vector<256x16xf32>, vector<256x16xf32>, vector<256x16xf32>, vector<256x16xf32>, vector<256x16xf32>, vector<256x16xf32>, vector<256x16xf32> -> vector<256x144xf32>
    %c0_3 = arith.constant 0 : index
    %c0_4 = arith.constant 0 : index
    %c0_5 = arith.constant 0 : index
    %21 = vector.load %arg2[%c0_3, %c0_4, %c0_5] : memref<4x144x2xf32, #tpu.memory_space<vmem>>, vector<1x144x2xf32>
    %22 = vector.shape_cast %21 : vector<1x144x2xf32> to vector<144x2xf32>
    %cst = arith.constant dense<0.000000e+00> : vector<256x2xf32>
    %23 = tpu.matmul %20, %22, %cst {dimension_numbers = #tpu.dot_dimension_numbers<[1], [0], [0], [1], [0, 0, 1, 1], [], []>} : vector<256x144xf32>, vector<144x2xf32>, vector<256x2xf32> -> vector<256x2xf32>
    %24 = vector.extract_strided_slice %1 {offsets = [0, 4, 0], sizes = [16, 16, 16], strides = [1, 1, 1]} : vector<24x24x16xf32> to vector<16x16x16xf32>
    %25 = vector.shape_cast %24 : vector<16x16x16xf32> to vector<256x16xf32>
    %26 = vector.extract_strided_slice %1 {offsets = [1, 4, 0], sizes = [16, 16, 16], strides = [1, 1, 1]} : vector<24x24x16xf32> to vector<16x16x16xf32>
    %27 = vector.shape_cast %26 : vector<16x16x16xf32> to vector<256x16xf32>
    %28 = vector.extract_strided_slice %1 {offsets = [2, 4, 0], sizes = [16, 16, 16], strides = [1, 1, 1]} : vector<24x24x16xf32> to vector<16x16x16xf32>
    %29 = vector.shape_cast %28 : vector<16x16x16xf32> to vector<256x16xf32>
    %30 = vector.extract_strided_slice %1 {offsets = [3, 4, 0], sizes = [16, 16, 16], strides = [1, 1, 1]} : vector<24x24x16xf32> to vector<16x16x16xf32>
    %31 = vector.shape_cast %30 : vector<16x16x16xf32> to vector<256x16xf32>
    %32 = vector.extract_strided_slice %1 {offsets = [4, 4, 0], sizes = [16, 16, 16], strides = [1, 1, 1]} : vector<24x24x16xf32> to vector<16x16x16xf32>
    %33 = vector.shape_cast %32 : vector<16x16x16xf32> to vector<256x16xf32>
    %34 = vector.extract_strided_slice %1 {offsets = [5, 4, 0], sizes = [16, 16, 16], strides = [1, 1, 1]} : vector<24x24x16xf32> to vector<16x16x16xf32>
    %35 = vector.shape_cast %34 : vector<16x16x16xf32> to vector<256x16xf32>
    %36 = vector.extract_strided_slice %1 {offsets = [6, 4, 0], sizes = [16, 16, 16], strides = [1, 1, 1]} : vector<24x24x16xf32> to vector<16x16x16xf32>
    %37 = vector.shape_cast %36 : vector<16x16x16xf32> to vector<256x16xf32>
    %38 = vector.extract_strided_slice %1 {offsets = [7, 4, 0], sizes = [16, 16, 16], strides = [1, 1, 1]} : vector<24x24x16xf32> to vector<16x16x16xf32>
    %39 = vector.shape_cast %38 : vector<16x16x16xf32> to vector<256x16xf32>
    %40 = vector.extract_strided_slice %1 {offsets = [8, 4, 0], sizes = [16, 16, 16], strides = [1, 1, 1]} : vector<24x24x16xf32> to vector<16x16x16xf32>
    %41 = vector.shape_cast %40 : vector<16x16x16xf32> to vector<256x16xf32>
    %42 = tpu.concatenate %25, %27, %29, %31, %33, %35, %37, %39, %41 in 1 : vector<256x16xf32>, vector<256x16xf32>, vector<256x16xf32>, vector<256x16xf32>, vector<256x16xf32>, vector<256x16xf32>, vector<256x16xf32>, vector<256x16xf32>, vector<256x16xf32> -> vector<256x144xf32>
    %c1 = arith.constant 1 : index
    %c0_6 = arith.constant 0 : index
    %c0_7 = arith.constant 0 : index
    %43 = vector.load %arg2[%c1, %c0_6, %c0_7] : memref<4x144x2xf32, #tpu.memory_space<vmem>>, vector<1x144x2xf32>
    %44 = vector.shape_cast %43 : vector<1x144x2xf32> to vector<144x2xf32>
    %cst_8 = arith.constant dense<0.000000e+00> : vector<256x2xf32>
    %45 = tpu.matmul %42, %44, %cst_8 {dimension_numbers = #tpu.dot_dimension_numbers<[1], [0], [0], [1], [0, 0, 1, 1], [], []>} : vector<256x144xf32>, vector<144x2xf32>, vector<256x2xf32> -> vector<256x2xf32>
    %46 = vector.extract_strided_slice %1 {offsets = [0, 8, 0], sizes = [16, 16, 16], strides = [1, 1, 1]} : vector<24x24x16xf32> to vector<16x16x16xf32>
    %47 = vector.shape_cast %46 : vector<16x16x16xf32> to vector<256x16xf32>
    %48 = vector.extract_strided_slice %1 {offsets = [1, 7, 0], sizes = [16, 16, 16], strides = [1, 1, 1]} : vector<24x24x16xf32> to vector<16x16x16xf32>
    %49 = vector.shape_cast %48 : vector<16x16x16xf32> to vector<256x16xf32>
    %50 = vector.extract_strided_slice %1 {offsets = [2, 6, 0], sizes = [16, 16, 16], strides = [1, 1, 1]} : vector<24x24x16xf32> to vector<16x16x16xf32>
    %51 = vector.shape_cast %50 : vector<16x16x16xf32> to vector<256x16xf32>
    %52 = vector.extract_strided_slice %1 {offsets = [3, 5, 0], sizes = [16, 16, 16], strides = [1, 1, 1]} : vector<24x24x16xf32> to vector<16x16x16xf32>
    %53 = vector.shape_cast %52 : vector<16x16x16xf32> to vector<256x16xf32>
    %54 = vector.extract_strided_slice %1 {offsets = [4, 4, 0], sizes = [16, 16, 16], strides = [1, 1, 1]} : vector<24x24x16xf32> to vector<16x16x16xf32>
    %55 = vector.shape_cast %54 : vector<16x16x16xf32> to vector<256x16xf32>
    %56 = vector.extract_strided_slice %1 {offsets = [5, 3, 0], sizes = [16, 16, 16], strides = [1, 1, 1]} : vector<24x24x16xf32> to vector<16x16x16xf32>
    %57 = vector.shape_cast %56 : vector<16x16x16xf32> to vector<256x16xf32>
    %58 = vector.extract_strided_slice %1 {offsets = [6, 2, 0], sizes = [16, 16, 16], strides = [1, 1, 1]} : vector<24x24x16xf32> to vector<16x16x16xf32>
    %59 = vector.shape_cast %58 : vector<16x16x16xf32> to vector<256x16xf32>
    %60 = vector.extract_strided_slice %1 {offsets = [7, 1, 0], sizes = [16, 16, 16], strides = [1, 1, 1]} : vector<24x24x16xf32> to vector<16x16x16xf32>
    %61 = vector.shape_cast %60 : vector<16x16x16xf32> to vector<256x16xf32>
    %62 = vector.extract_strided_slice %1 {offsets = [8, 0, 0], sizes = [16, 16, 16], strides = [1, 1, 1]} : vector<24x24x16xf32> to vector<16x16x16xf32>
    %63 = vector.shape_cast %62 : vector<16x16x16xf32> to vector<256x16xf32>
    %64 = tpu.concatenate %47, %49, %51, %53, %55, %57, %59, %61, %63 in 1 : vector<256x16xf32>, vector<256x16xf32>, vector<256x16xf32>, vector<256x16xf32>, vector<256x16xf32>, vector<256x16xf32>, vector<256x16xf32>, vector<256x16xf32>, vector<256x16xf32> -> vector<256x144xf32>
    %c2 = arith.constant 2 : index
    %c0_9 = arith.constant 0 : index
    %c0_10 = arith.constant 0 : index
    %65 = vector.load %arg2[%c2, %c0_9, %c0_10] : memref<4x144x2xf32, #tpu.memory_space<vmem>>, vector<1x144x2xf32>
    %66 = vector.shape_cast %65 : vector<1x144x2xf32> to vector<144x2xf32>
    %cst_11 = arith.constant dense<0.000000e+00> : vector<256x2xf32>
    %67 = tpu.matmul %64, %66, %cst_11 {dimension_numbers = #tpu.dot_dimension_numbers<[1], [0], [0], [1], [0, 0, 1, 1], [], []>} : vector<256x144xf32>, vector<144x2xf32>, vector<256x2xf32> -> vector<256x2xf32>
    %68 = vector.extract_strided_slice %1 {offsets = [8, 0, 0], sizes = [16, 16, 16], strides = [1, 1, 1]} : vector<24x24x16xf32> to vector<16x16x16xf32>
    %69 = vector.shape_cast %68 : vector<16x16x16xf32> to vector<256x16xf32>
    %70 = vector.extract_strided_slice %1 {offsets = [7, 1, 0], sizes = [16, 16, 16], strides = [1, 1, 1]} : vector<24x24x16xf32> to vector<16x16x16xf32>
    %71 = vector.shape_cast %70 : vector<16x16x16xf32> to vector<256x16xf32>
    %72 = vector.extract_strided_slice %1 {offsets = [6, 2, 0], sizes = [16, 16, 16], strides = [1, 1, 1]} : vector<24x24x16xf32> to vector<16x16x16xf32>
    %73 = vector.shape_cast %72 : vector<16x16x16xf32> to vector<256x16xf32>
    %74 = vector.extract_strided_slice %1 {offsets = [5, 3, 0], sizes = [16, 16, 16], strides = [1, 1, 1]} : vector<24x24x16xf32> to vector<16x16x16xf32>
    %75 = vector.shape_cast %74 : vector<16x16x16xf32> to vector<256x16xf32>
    %76 = vector.extract_strided_slice %1 {offsets = [4, 4, 0], sizes = [16, 16, 16], strides = [1, 1, 1]} : vector<24x24x16xf32> to vector<16x16x16xf32>
    %77 = vector.shape_cast %76 : vector<16x16x16xf32> to vector<256x16xf32>
    %78 = vector.extract_strided_slice %1 {offsets = [3, 5, 0], sizes = [16, 16, 16], strides = [1, 1, 1]} : vector<24x24x16xf32> to vector<16x16x16xf32>
    %79 = vector.shape_cast %78 : vector<16x16x16xf32> to vector<256x16xf32>
    %80 = vector.extract_strided_slice %1 {offsets = [2, 6, 0], sizes = [16, 16, 16], strides = [1, 1, 1]} : vector<24x24x16xf32> to vector<16x16x16xf32>
    %81 = vector.shape_cast %80 : vector<16x16x16xf32> to vector<256x16xf32>
    %82 = vector.extract_strided_slice %1 {offsets = [1, 7, 0], sizes = [16, 16, 16], strides = [1, 1, 1]} : vector<24x24x16xf32> to vector<16x16x16xf32>
    %83 = vector.shape_cast %82 : vector<16x16x16xf32> to vector<256x16xf32>
    %84 = vector.extract_strided_slice %1 {offsets = [0, 8, 0], sizes = [16, 16, 16], strides = [1, 1, 1]} : vector<24x24x16xf32> to vector<16x16x16xf32>
    %85 = vector.shape_cast %84 : vector<16x16x16xf32> to vector<256x16xf32>
    %86 = tpu.concatenate %69, %71, %73, %75, %77, %79, %81, %83, %85 in 1 : vector<256x16xf32>, vector<256x16xf32>, vector<256x16xf32>, vector<256x16xf32>, vector<256x16xf32>, vector<256x16xf32>, vector<256x16xf32>, vector<256x16xf32>, vector<256x16xf32> -> vector<256x144xf32>
    %c3 = arith.constant 3 : index
    %c0_12 = arith.constant 0 : index
    %c0_13 = arith.constant 0 : index
    %87 = vector.load %arg2[%c3, %c0_12, %c0_13] : memref<4x144x2xf32, #tpu.memory_space<vmem>>, vector<1x144x2xf32>
    %88 = vector.shape_cast %87 : vector<1x144x2xf32> to vector<144x2xf32>
    %cst_14 = arith.constant dense<0.000000e+00> : vector<256x2xf32>
    %89 = tpu.matmul %86, %88, %cst_14 {dimension_numbers = #tpu.dot_dimension_numbers<[1], [0], [0], [1], [0, 0, 1, 1], [], []>} : vector<256x144xf32>, vector<144x2xf32>, vector<256x2xf32> -> vector<256x2xf32>
    %90 = tpu.concatenate %23, %45, %67, %89 in 1 : vector<256x2xf32>, vector<256x2xf32>, vector<256x2xf32>, vector<256x2xf32> -> vector<256x8xf32>
    %c0_15 = arith.constant 0 : index
    %c0_16 = arith.constant 0 : index
    %91 = vector.load %arg3[%c0_15, %c0_16] : memref<8x8xf32, #tpu.memory_space<vmem>>, vector<8x8xf32>
    %cst_17 = arith.constant dense<0.000000e+00> : vector<256x8xf32>
    %92 = tpu.matmul %90, %91, %cst_17 {dimension_numbers = #tpu.dot_dimension_numbers<[1], [0], [0], [1], [0, 0, 1, 1], [], []>} : vector<256x8xf32>, vector<8x8xf32>, vector<256x8xf32> -> vector<256x8xf32>
    %c0_18 = arith.constant 0 : index
    %c0_19 = arith.constant 0 : index
    %93 = vector.load %arg4[%c0_18, %c0_19] : memref<1x8xf32, #tpu.memory_space<vmem>>, vector<1x8xf32>
    %94 = vector.broadcast %93 : vector<1x8xf32> to vector<256x8xf32>
    %95 = arith.mulf %92, %94 : vector<256x8xf32>
    %c0_20 = arith.constant 0 : index
    %c0_21 = arith.constant 0 : index
    %96 = vector.load %arg5[%c0_20, %c0_21] : memref<1x8xf32, #tpu.memory_space<vmem>>, vector<1x8xf32>
    %97 = vector.broadcast %96 : vector<1x8xf32> to vector<256x8xf32>
    %98 = arith.addf %95, %97 : vector<256x8xf32>
    %cst_22 = arith.constant 0.000000e+00 : f32
    %99 = vector.broadcast %cst_22 : f32 to vector<256x8xf32>
    %100 = arith.maximumf %98, %99 : vector<256x8xf32>
    %101 = tpu.transpose %100, [1, 0] : vector<256x8xf32> -> vector<8x256xf32>
    %c0_23 = arith.constant 0 : index
    %c0_24 = arith.constant 0 : index
    %c0_25 = arith.constant 0 : index
    %102 = vector.load %arg6[%c0_23, %c0_24, %c0_25] : memref<1x8x256xf32, #tpu.memory_space<vmem>>, vector<1x8x256xf32>
    %103 = vector.shape_cast %102 : vector<1x8x256xf32> to vector<8x256xf32>
    %104 = vector.shape_cast %101 : vector<8x256xf32> to vector<1x8x256xf32>
    tpu.vector_store %arg6[%c0_23, %c0_24, %c0_25], %104 {strides = array<i32>} : memref<1x8x256xf32, #tpu.memory_space<vmem>>, vector<1x8x256xf32>,
    return
  }
  func.func @transform_0(%arg0: i32) -> (i32, i32, i32, i32) {
    %c0_i32 = arith.constant 0 : i32
    %c0_i32_0 = arith.constant 0 : i32
    %c0_i32_1 = arith.constant 0 : i32
    %c0_i32_2 = arith.constant 0 : i32
    return %arg0, %c0_i32, %c0_i32_0, %c0_i32_1 : i32, i32, i32, i32
  }
  func.func @transform_1(%arg0: i32) -> (i32, i32, i32) {
    %c0_i32 = arith.constant 0 : i32
    %c0_i32_0 = arith.constant 0 : i32
    %c0_i32_1 = arith.constant 0 : i32
    %c0_i32_2 = arith.constant 0 : i32
    return %c0_i32, %c0_i32_0, %c0_i32_1 : i32, i32, i32
  }
  func.func @transform_2(%arg0: i32) -> (i32, i32) {
    %c0_i32 = arith.constant 0 : i32
    %c0_i32_0 = arith.constant 0 : i32
    %c0_i32_1 = arith.constant 0 : i32
    return %c0_i32, %c0_i32_0 : i32, i32
  }
  func.func @transform_3(%arg0: i32) -> (i32, i32) {
    %c0_i32 = arith.constant 0 : i32
    %c0_i32_0 = arith.constant 0 : i32
    %c0_i32_1 = arith.constant 0 : i32
    return %c0_i32, %c0_i32_0 : i32, i32
  }
  func.func @transform_4(%arg0: i32) -> (i32, i32) {
    %c0_i32 = arith.constant 0 : i32
    %c0_i32_0 = arith.constant 0 : i32
    %c0_i32_1 = arith.constant 0 : i32
    return %c0_i32, %c0_i32_0 : i32, i32
  }
  func.func @transform_5(%arg0: i32) -> (i32, i32, i32) {
    %c0_i32 = arith.constant 0 : i32
    %c0_i32_0 = arith.constant 0 : i32
    %c0_i32_1 = arith.constant 0 : i32
    return %arg0, %c0_i32, %c0_i32_0 : i32, i32, i32
  }
}

</mosaic_0001>

<llo_original>
// kernel: lam_forward_pallas.1
$region0: #{lam_forward_pallas.1}
  #allocation0 [shape = 'u32[]', space=smem, size = 0x4, offset = 0x4, fixed_abs, tag = 'smem constant byte address 0x4 - core index']
  #allocation1 [shape = 'u32[144,128]{1,0:T(1,128)}', space=vmem, size = 0x12000, scoped, tag = 'internal scratch']
  %s0 = inlined_call_operand.vmem [shape: f32[2,24,24,16], index: 0, kind: input, shape index: {}]
  %s1 = inlined_call_operand.vmem [shape: f32[4,144,2], index: 1, kind: input, shape index: {}]
  %s2 = inlined_call_operand.vmem [shape: f32[8,8], index: 2, kind: input, shape index: {}]
  %s3 = inlined_call_operand.vmem [shape: f32[1,8], index: 3, kind: input, shape index: {}]
  %s4 = inlined_call_operand.vmem [shape: f32[1,8], index: 4, kind: input, shape index: {}]
  %s5 = inlined_call_operand.vmem [shape: f32[2,8,256], index: 5, kind: output, shape index: {}]
  %s6 = sld [smem:[#allocation0]]
  $region53: #{lam_forward_pallas.1} parent=0
    _
  %s8 = ssub.s32 1, %s6
  %s9 = scalar_select 0, %s8, %s6
  loop: start=0, step=1, limit=4
  $region2: #{lam_forward_pallas.1} parent=0 // loop_pre_header
    _
  $region3: #{lam_forward_pallas.1} parent=0 // loop_header
    %s11 = sphi 0, %s15
    %p12 = scmp.ge.s32.totalorder %s11, 4
    %s21 = sphi 0, %s23
    %s24 = sphi 0, %s21
    %s25 = sphi 0, %s24
    %s41 = sphi 0, %s25
    %s45 = sphi 0, %s45
    %s47 = sphi 0, %s45
    %s48 = sphi 0, %s47
    %s62 = sphi 0, %s48
    %s66 = sphi 0, %s66
    %s68 = sphi 0, %s66
    %s69 = sphi 0, %s68
    %s83 = sphi 0, %s69
    %s87 = sphi 0, %s87
    %s89 = sphi 0, %s87
    %s90 = sphi 0, %s89
    %s104 = sphi 0, %s90
    %s108 = sphi 0, %s108
    %s110 = sphi 0, %s108
    %s111 = sphi 0, %s110
    %s125 = sphi 0, %s111
    %s131 = sphi 0, %s133
    %s134 = sphi 0, %s131
    %s135 = sphi 0, %s134
    %s151 = sphi 0, %s135
  $region4: #{lam_forward_pallas.1} parent=0 // loop_header_branch
    %14 = sbr.rel (%p12) target = $region8
  $region5: #{lam_forward_pallas.1} parent=0 // loop_body
    %s16 = ssub.s32 %s11, 1
    %s17 = ssub.s32 %s11, 2
    %s18 = sadd.s32 %s11, 1
    %s19 = ssub.s32 %s11, %s18
    %p20 = scmp.eq.s32.totalorder %s19, 0
    %s22 = sadd.s32 %s21, 1
    %s23 = scalar_select %p20, %s21, %s22
    %p26 = pneg %p20
    %p27 = scmp.eq.s32.totalorder %s11, 1
    %p28 = por %p26, %p27
    %p29 = scmp.ne.s32.totalorder %s21, %s24
    %p30 = scmp.eq.s32.totalorder %s11, 0
    %p31 = por %p29, %p30
    %p32 = scmp.ne.s32.totalorder %s21, %s24
    %p33 = scmp.eq.s32.totalorder %s16, 1
    %p34 = por %p32, %p33
    %p35 = scmp.ne.s32.totalorder %s24, %s25
    %p36 = scmp.eq.s32.totalorder %s16, 0
    %p37 = por %p35, %p36
    %p38 = scmp.ne.s32.totalorder %s24, %s25
    %p39 = scmp.eq.s32.totalorder %s17, 1
    %p40 = por %p38, %p39
    %p42 = scmp.ne.s32.totalorder %s25, %s41
    %p43 = scmp.eq.s32.totalorder %s17, 0
    %p44 = por %p42, %p43
    %s46 = sadd.s32 %s45, 1
    %p49 = scmp.eq.s32.totalorder %s11, 1
    %p50 = scmp.ne.s32.totalorder %s45, %s47
    %p51 = scmp.eq.s32.totalorder %s11, 0
    %p52 = por %p50, %p51
    %p53 = scmp.ne.s32.totalorder %s45, %s47
    %p54 = scmp.eq.s32.totalorder %s16, 1
    %p55 = por %p53, %p54
    %p56 = scmp.ne.s32.totalorder %s47, %s48
    %p57 = scmp.eq.s32.totalorder %s16, 0
    %p58 = por %p56, %p57
    %p59 = scmp.ne.s32.totalorder %s47, %s48
    %p60 = scmp.eq.s32.totalorder %s17, 1
    %p61 = por %p59, %p60
    %p63 = scmp.ne.s32.totalorder %s48, %s62
    %p64 = scmp.eq.s32.totalorder %s17, 0
    %p65 = por %p63, %p64
    %s67 = sadd.s32 %s66, 1
    %p70 = scmp.eq.s32.totalorder %s11, 1
    %p71 = scmp.ne.s32.totalorder %s66, %s68
    %p72 = scmp.eq.s32.totalorder %s11, 0
    %p73 = por %p71, %p72
    %p74 = scmp.ne.s32.totalorder %s66, %s68
    %p75 = scmp.eq.s32.totalorder %s16, 1
    %p76 = por %p74, %p75
    %p77 = scmp.ne.s32.totalorder %s68, %s69
    %p78 = scmp.eq.s32.totalorder %s16, 0
    %p79 = por %p77, %p78
    %p80 = scmp.ne.s32.totalorder %s68, %s69
    %p81 = scmp.eq.s32.totalorder %s17, 1
    %p82 = por %p80, %p81
    %p84 = scmp.ne.s32.totalorder %s69, %s83
    %p85 = scmp.eq.s32.totalorder %s17, 0
    %p86 = por %p84, %p85
    %s88 = sadd.s32 %s87, 1
    %p91 = scmp.eq.s32.totalorder %s11, 1
    %p92 = scmp.ne.s32.totalorder %s87, %s89
    %p93 = scmp.eq.s32.totalorder %s11, 0
    %p94 = por %p92, %p93
    %p95 = scmp.ne.s32.totalorder %s87, %s89
    %p96 = scmp.eq.s32.totalorder %s16, 1
    %p97 = por %p95, %p96
    %p98 = scmp.ne.s32.totalorder %s89, %s90
    %p99 = scmp.eq.s32.totalorder %s16, 0
    %p100 = por %p98, %p99
    %p101 = scmp.ne.s32.totalorder %s89, %s90
    %p102 = scmp.eq.s32.totalorder %s17, 1
    %p103 = por %p101, %p102
    %p105 = scmp.ne.s32.totalorder %s90, %s104
    %p106 = scmp.eq.s32.totalorder %s17, 0
    %p107 = por %p105, %p106
    %s109 = sadd.s32 %s108, 1
    %p112 = scmp.eq.s32.totalorder %s11, 1
    %p113 = scmp.ne.s32.totalorder %s108, %s110
    %p114 = scmp.eq.s32.totalorder %s11, 0
    %p115 = por %p113, %p114
    %p116 = scmp.ne.s32.totalorder %s108, %s110
    %p117 = scmp.eq.s32.totalorder %s16, 1
    %p118 = por %p116, %p117
    %p119 = scmp.ne.s32.totalorder %s110, %s111
    %p120 = scmp.eq.s32.totalorder %s16, 0
    %p121 = por %p119, %p120
    %p122 = scmp.ne.s32.totalorder %s110, %s111
    %p123 = scmp.eq.s32.totalorder %s17, 1
    %p124 = por %p122, %p123
    %p126 = scmp.ne.s32.totalorder %s111, %s125
    %p127 = scmp.eq.s32.totalorder %s17, 0
    %p128 = por %p126, %p127
    %s129 = ssub.s32 %s11, %s18
    %p130 = scmp.eq.s32.totalorder %s129, 0
    %s132 = sadd.s32 %s131, 1
    %s133 = scalar_select %p130, %s131, %s132
    %p136 = pneg %p130
    %p137 = scmp.eq.s32.totalorder %s11, 1
    %p138 = por %p136, %p137
    %p139 = scmp.ne.s32.totalorder %s131, %s134
    %p140 = scmp.eq.s32.totalorder %s11, 0
    %p141 = por %p139, %p140
    %p142 = scmp.ne.s32.totalorder %s131, %s134
    %p143 = scmp.eq.s32.totalorder %s16, 1
    %p144 = por %p142, %p143
    %p145 = scmp.ne.s32.totalorder %s134, %s135
    %p146 = scmp.eq.s32.totalorder %s16, 0
    %p147 = por %p145, %p146
    %p148 = scmp.ne.s32.totalorder %s134, %s135
    %p149 = scmp.eq.s32.totalorder %s17, 1
    %p150 = por %p148, %p149
    %p152 = scmp.ne.s32.totalorder %s135, %s151
    %p153 = scmp.eq.s32.totalorder %s17, 0
    %p154 = por %p152, %p153
    %p155 = scmp.le.s32.totalorder 1, %s11
    %p156 = scmp.lt.s32.totalorder %s11, 3
    %p157 = pnand %p155, %p156
    %p158 = pneg %p157
    // Predicated region
    $region9: #{lam_forward_pallas.1} parent=5 // pred_check
      _
    $region10: #{lam_forward_pallas.1} parent=5 // pred_check_branch
      %160 = sbr.rel (%p157) target = $region12
    $region11: #{lam_forward_pallas.1} parent=5 // pred_region
      %s161 = ssub.s32 %s11, 1
      // Predicated region
      $region13: #{lam_forward_pallas.1} parent=11 // pred_check
        %p162 = pneg %p58
      $region14: #{lam_forward_pallas.1} parent=11 // pred_check_branch
        %164 = sbr.rel (%p162) target = $region16
      $region15: #{lam_forward_pallas.1} parent=11 // pred_region
        _
      $region16: #{lam_forward_pallas.1} parent=11 // pred_fallthru
        _
      // Predicated region
      $region17: #{lam_forward_pallas.1} parent=11 // pred_check
        %p165 = pneg %p79
      $region18: #{lam_forward_pallas.1} parent=11 // pred_check_branch
        %167 = sbr.rel (%p165) target = $region20
      $region19: #{lam_forward_pallas.1} parent=11 // pred_region
        _
      $region20: #{lam_forward_pallas.1} parent=11 // pred_fallthru
        _
      // Predicated region
      $region21: #{lam_forward_pallas.1} parent=11 // pred_check
        %p168 = pneg %p100
      $region22: #{lam_forward_pallas.1} parent=11 // pred_check_branch
        %170 = sbr.rel (%p168) target = $region24
      $region23: #{lam_forward_pallas.1} parent=11 // pred_region
        _
      $region24: #{lam_forward_pallas.1} parent=11 // pred_fallthru
        _
      // Predicated region
      $region25: #{lam_forward_pallas.1} parent=11 // pred_check
        %p171 = pneg %p121
      $region26: #{lam_forward_pallas.1} parent=11 // pred_check_branch
        %173 = sbr.rel (%p171) target = $region28
      $region27: #{lam_forward_pallas.1} parent=11 // pred_region
        _
      $region28: #{lam_forward_pallas.1} parent=11 // pred_fallthru
        _
    $region12: #{lam_forward_pallas.1} parent=5 // pred_fallthru
      _
    %p174 = scmp.lt.s32.totalorder %s11, 2
    // Predicated region
    $region29: #{lam_forward_pallas.1} parent=5 // pred_check
      %p175 = pneg %p174
    $region30: #{lam_forward_pallas.1} parent=5 // pred_check_branch
      %177 = sbr.rel (%p175) target = $region32
    $region31: #{lam_forward_pallas.1} parent=5 // pred_region
      // Predicated region
      $region33: #{lam_forward_pallas.1} parent=31 // pred_check
        %p178 = pneg %p31
      $region34: #{lam_forward_pallas.1} parent=31 // pred_check_branch
        %180 = sbr.rel (%p178) target = $region36
      $region35: #{lam_forward_pallas.1} parent=31 // pred_region
        %p181 = scmp.lt.s32.totalorder %s11, 1
        %s182 = scalar_select %p181, %s11, 1
        %s183 = smul.addr %s182, 72
        %s184 = smul.addr %s183, 8
        %s185 = scalar_lea.vmem %s0, %s184
      $region36: #{lam_forward_pallas.1} parent=31 // pred_fallthru
        _
    $region32: #{lam_forward_pallas.1} parent=5 // pred_fallthru
      _
    %p186 = scmp.le.s32.totalorder 1, %s11
    %p187 = scmp.lt.s32.totalorder %s11, 3
    %p188 = pnand %p186, %p187
    %p189 = pneg %p188
    // Predicated region
    $region37: #{lam_forward_pallas.1} parent=5 // pred_check
      _
    $region38: #{lam_forward_pallas.1} parent=5 // pred_check_branch
      %191 = sbr.rel (%p188) target = $region40
    $region39: #{lam_forward_pallas.1} parent=5 // pred_region
      %s192 = ssub.s32 %s11, 1
      %p193 = scmp.lt.s32.totalorder %s16, 1
      %s194 = scalar_select %p193, %s16, 1
      %s195 = smul.addr %s194, 72
      %s196 = smul.addr %s195, 8
      %s197 = scalar_lea.vmem %s0, %s196
      %p198 = pneg %p37
      %p199 = pneg %p34
      %p200 = pneg %p58
      %p201 = pneg %p55
      %p202 = pneg %p79
      %p203 = pneg %p76
      %p204 = pneg %p100
      %p205 = pneg %p97
      %p206 = pneg %p121
      %p207 = pneg %p118
      %p208 = pneg %p147
      %p209 = pneg %p144
      %p210 = scmp.lt.s32.totalorder %s16, 1
      %s211 = scalar_select %p210, %s16, 1
      %s212 = smul.addr %s211, 2
      %s213 = smul.addr %s212, 8
      %s214 = scalar_lea.vmem %s5, %s213
      %p215 = scmp.lt.s32.totalorder %s16, 1
      %s216 = scalar_select %p215, %s16, 1
      %s217 = smul.addr %s216, 72
      %s218 = smul.addr %s217, 8
      %s219 = scalar_lea.vmem %s0, %s218
      %p220 = scmp.lt.s32.totalorder %s16, 1
      %s221 = scalar_select %p220, %s16, 1
      %s222 = smul.addr %s221, 2
      %s223 = smul.addr %s222, 8
      %s224 = scalar_lea.vmem %s5, %s223
      %v225 = vld [vmem:[%s219] sm:$0xff]
      %v226 = vld [vmem:[%s219 + $0x8] sm:$0xff]
      %v227 = vld [vmem:[%s219 + $0x10] sm:$0xff]
      %v228 = vld [vmem:[%s219 + $0x18] sm:$0xff]
      %v229 = vld [vmem:[%s219 + $0x20] sm:$0xff]
      %v230 = vld [vmem:[%s219 + $0x28] sm:$0xff]
      %v231 = vld [vmem:[%s219 + $0x30] sm:$0xff]
      %v232 = vld [vmem:[%s219 + $0x38] sm:$0xff]
      %v233 = vld [vmem:[%s219 + $0x40] sm:$0xff]
      %v234 = vld [vmem:[%s219 + $0x48] sm:$0xff]
      %v235 = vld [vmem:[%s219 + $0x50] sm:$0xff]
      %v236 = vld [vmem:[%s219 + $0x58] sm:$0xff]
      %v237 = vld [vmem:[%s219 + $0x60] sm:$0xff]
      %v238 = vld [vmem:[%s219 + $0x68] sm:$0xff]
      %v239 = vld [vmem:[%s219 + $0x70] sm:$0xff]
      %v240 = vld [vmem:[%s219 + $0x78] sm:$0xff]
      %v241 = vld [vmem:[%s219 + $0x80] sm:$0xff]
      %v242 = vld [vmem:[%s219 + $0x88] sm:$0xff]
      %v243 = vld [vmem:[%s219 + $0x90] sm:$0xff]
      %v244 = vld [vmem:[%s219 + $0x98] sm:$0xff]
      %v245 = vld [vmem:[%s219 + $0xa0] sm:$0xff]
      %v246 = vld [vmem:[%s219 + $0xa8] sm:$0xff]
      %v247 = vld [vmem:[%s219 + $0xb0] sm:$0xff]
      %v248 = vld [vmem:[%s219 + $0xb8] sm:$0xff]
      %v249 = vld [vmem:[%s219 + $0xc0] sm:$0xff]
      %v250 = vld [vmem:[%s219 + $0xc8] sm:$0xff]
      %v251 = vld [vmem:[%s219 + $0xd0] sm:$0xff]
      %v252 = vld [vmem:[%s219 + $0xd8] sm:$0xff]
      %v253 = vld [vmem:[%s219 + $0xe0] sm:$0xff]
      %v254 = vld [vmem:[%s219 + $0xe8] sm:$0xff]
      %v255 = vld [vmem:[%s219 + $0xf0] sm:$0xff]
      %v256 = vld [vmem:[%s219 + $0xf8] sm:$0xff]
      %v257 = vld [vmem:[%s219 + $0x100] sm:$0xff]
      %v258 = vld [vmem:[%s219 + $0x108] sm:$0xff]
      %v259 = vld [vmem:[%s219 + $0x110] sm:$0xff]
      %v260 = vld [vmem:[%s219 + $0x118] sm:$0xff]
      %v261 = vld [vmem:[%s219 + $0x120] sm:$0xff]
      %v262 = vld [vmem:[%s219 + $0x128] sm:$0xff]
      %v263 = vld [vmem:[%s219 + $0x130] sm:$0xff]
      %v264 = vld [vmem:[%s219 + $0x138] sm:$0xff]
      %v265 = vld [vmem:[%s219 + $0x140] sm:$0xff]
      %v266 = vld [vmem:[%s219 + $0x148] sm:$0xff]
      %v267 = vld [vmem:[%s219 + $0x150] sm:$0xff]
      %v268 = vld [vmem:[%s219 + $0x158] sm:$0xff]
      %v269 = vld [vmem:[%s219 + $0x160] sm:$0xff]
      %v270 = vld [vmem:[%s219 + $0x168] sm:$0xff]
      %v271 = vld [vmem:[%s219 + $0x170] sm:$0xff]
      %v272 = vld [vmem:[%s219 + $0x178] sm:$0xff]
      %v273 = vld [vmem:[%s219 + $0x180] sm:$0xff]
      %v274 = vld [vmem:[%s219 + $0x188] sm:$0xff]
      %v275 = vld [vmem:[%s219 + $0x190] sm:$0xff]
      %v276 = vld [vmem:[%s219 + $0x198] sm:$0xff]
      %v277 = vld [vmem:[%s219 + $0x1a0] sm:$0xff]
      %v278 = vld [vmem:[%s219 + $0x1a8] sm:$0xff]
      %v279 = vld [vmem:[%s219 + $0x1b0] sm:$0xff]
      %v280 = vld [vmem:[%s219 + $0x1b8] sm:$0xff]
      %v281 = vld [vmem:[%s219 + $0x1c0] sm:$0xff]
      %v282 = vld [vmem:[%s219 + $0x1c8] sm:$0xff]
      %v283 = vld [vmem:[%s219 + $0x1d0] sm:$0xff]
      %v284 = vld [vmem:[%s219 + $0x1d8] sm:$0xff]
      %v285 = vld [vmem:[%s219 + $0x1e0] sm:$0xff]
      %v286 = vld [vmem:[%s219 + $0x1e8] sm:$0xff]
      %v287 = vld [vmem:[%s219 + $0x1f0] sm:$0xff]
      %v288 = vld [vmem:[%s219 + $0x1f8] sm:$0xff]
      %v289 = vld [vmem:[%s219 + $0x200] sm:$0xff]
      %v290 = vld [vmem:[%s219 + $0x208] sm:$0xff]
      %v291 = vld [vmem:[%s219 + $0x210] sm:$0xff]
      %v292 = vld [vmem:[%s219 + $0x218] sm:$0xff]
      %v293 = vld [vmem:[%s219 + $0x220] sm:$0xff]
      %v294 = vld [vmem:[%s219 + $0x228] sm:$0xff]
      %v295 = vld [vmem:[%s219 + $0x230] sm:$0xff]
      %v296 = vld [vmem:[%s219 + $0x238] sm:$0xff]
      %vm345 = vcmask 1046528
      %v346 = vrot.slane %v237, 1
      %v347 = vrot.slane %v238, 1
      %v348 = vsel %vm345, %v346, %v347
      %v349 = vrot.slane %v239, 1
      %v350 = vsel %vm345, %v347, %v349
      %v351 = vrot.slane %v240, 1
      %v352 = vrot.slane %v241, 1
      %v353 = vsel %vm345, %v351, %v352
      %v354 = vrot.slane %v242, 1
      %v355 = vsel %vm345, %v352, %v354
      %v356 = vrot.slane %v243, 1
      %v357 = vrot.slane %v244, 1
      %v358 = vsel %vm345, %v356, %v357
      %v359 = vrot.slane %v245, 1
      %v360 = vsel %vm345, %v357, %v359
      %v361 = vrot.slane %v246, 1
      %v362 = vrot.slane %v247, 1
      %v363 = vsel %vm345, %v361, %v362
      %v364 = vrot.slane %v248, 1
      %v365 = vsel %vm345, %v362, %v364
      %v366 = vrot.slane %v249, 1
      %v367 = vrot.slane %v250, 1
      %v368 = vsel %vm345, %v366, %v367
      %v369 = vrot.slane %v251, 1
      %v370 = vsel %vm345, %v367, %v369
      %v371 = vrot.slane %v252, 1
      %v372 = vrot.slane %v253, 1
      %v373 = vsel %vm345, %v371, %v372
      %v374 = vrot.slane %v254, 1
      %v375 = vsel %vm345, %v372, %v374
      %v376 = vrot.slane %v255, 1
      %v377 = vrot.slane %v256, 1
      %v378 = vsel %vm345, %v376, %v377
      %v379 = vrot.slane %v257, 1
      %v380 = vsel %vm345, %v377, %v379
      %v381 = vrot.slane %v258, 1
      %v382 = vrot.slane %v259, 1
      %v383 = vsel %vm345, %v381, %v382
      %v384 = vrot.slane %v260, 1
      %v385 = vsel %vm345, %v382, %v384
      %v386 = vrot.slane %v261, 1
      %v387 = vrot.slane %v262, 1
      %v388 = vsel %vm345, %v386, %v387
      %v389 = vrot.slane %v263, 1
      %v390 = vsel %vm345, %v387, %v389
      %v391 = vrot.slane %v264, 1
      %v392 = vrot.slane %v265, 1
      %v393 = vsel %vm345, %v391, %v392
      %v394 = vrot.slane %v266, 1
      %v395 = vsel %vm345, %v392, %v394
      %v396 = vrot.slane %v267, 1
      %v397 = vrot.slane %v268, 1
      %v398 = vsel %vm345, %v396, %v397
      %v399 = vrot.slane %v269, 1
      %v400 = vsel %vm345, %v397, %v399
      %v401 = vrot.slane %v270, 1
      %v402 = vrot.slane %v271, 1
      %v403 = vsel %vm345, %v401, %v402
      %v404 = vrot.slane %v272, 1
      %v405 = vsel %vm345, %v402, %v404
      %v406 = vrot.slane %v273, 1
      %v407 = vrot.slane %v274, 1
      %v408 = vsel %vm345, %v406, %v407
      %v409 = vrot.slane %v275, 1
      %v410 = vsel %vm345, %v407, %v409
      %v411 = vrot.slane %v276, 1
      %v412 = vrot.slane %v277, 1
      %v413 = vsel %vm345, %v411, %v412
      %v414 = vrot.slane %v278, 1
      %v415 = vsel %vm345, %v412, %v414
      %v416 = vrot.slane %v279, 1
      %v417 = vrot.slane %v280, 1
      %v418 = vsel %vm345, %v416, %v417
      %v419 = vrot.slane %v281, 1
      %v420 = vsel %vm345, %v417, %v419
      %v421 = vrot.slane %v282, 1
      %v422 = vrot.slane %v283, 1
      %v423 = vsel %vm345, %v421, %v422
      %v424 = vrot.slane %v284, 1
      %v425 = vsel %vm345, %v422, %v424
      %vm426 = vcmask 1045504
      %v427 = vrot.slane %v237, 2
      %v428 = vrot.slane %v238, 2
      %v429 = vsel %vm426, %v427, %v428
      %v430 = vrot.slane %v239, 2
      %v431 = vsel %vm426, %v428, %v430
      %v432 = vrot.slane %v240, 2
      %v433 = vrot.slane %v241, 2
      %v434 = vsel %vm426, %v432, %v433
      %v435 = vrot.slane %v242, 2
      %v436 = vsel %vm426, %v433, %v435
      %v437 = vrot.slane %v243, 2
      %v438 = vrot.slane %v244, 2
      %v439 = vsel %vm426, %v437, %v438
      %v440 = vrot.slane %v245, 2
      %v441 = vsel %vm426, %v438, %v440
      %v442 = vrot.slane %v246, 2
      %v443 = vrot.slane %v247, 2
      %v444 = vsel %vm426, %v442, %v443
      %v445 = vrot.slane %v248, 2
      %v446 = vsel %vm426, %v443, %v445
      %v447 = vrot.slane %v249, 2
      %v448 = vrot.slane %v250, 2
      %v449 = vsel %vm426, %v447, %v448
      %v450 = vrot.slane %v251, 2
      %v451 = vsel %vm426, %v448, %v450
      %v452 = vrot.slane %v252, 2
      %v453 = vrot.slane %v253, 2
      %v454 = vsel %vm426, %v452, %v453
      %v455 = vrot.slane %v254, 2
      %v456 = vsel %vm426, %v453, %v455
      %v457 = vrot.slane %v255, 2
      %v458 = vrot.slane %v256, 2
      %v459 = vsel %vm426, %v457, %v458
      %v460 = vrot.slane %v257, 2
      %v461 = vsel %vm426, %v458, %v460
      %v462 = vrot.slane %v258, 2
      %v463 = vrot.slane %v259, 2
      %v464 = vsel %vm426, %v462, %v463
      %v465 = vrot.slane %v260, 2
      %v466 = vsel %vm426, %v463, %v465
      %v467 = vrot.slane %v261, 2
      %v468 = vrot.slane %v262, 2
      %v469 = vsel %vm426, %v467, %v468
      %v470 = vrot.slane %v263, 2
      %v471 = vsel %vm426, %v468, %v470
      %v472 = vrot.slane %v264, 2
      %v473 = vrot.slane %v265, 2
      %v474 = vsel %vm426, %v472, %v473
      %v475 = vrot.slane %v266, 2
      %v476 = vsel %vm426, %v473, %v475
      %v477 = vrot.slane %v267, 2
      %v478 = vrot.slane %v268, 2
      %v479 = vsel %vm426, %v477, %v478
      %v480 = vrot.slane %v269, 2
      %v481 = vsel %vm426, %v478, %v480
      %v482 = vrot.slane %v270, 2
      %v483 = vrot.slane %v271, 2
      %v484 = vsel %vm426, %v482, %v483
      %v485 = vrot.slane %v272, 2
      %v486 = vsel %vm426, %v483, %v485
      %v487 = vrot.slane %v273, 2
      %v488 = vrot.slane %v274, 2
      %v489 = vsel %vm426, %v487, %v488
      %v490 = vrot.slane %v275, 2
      %v491 = vsel %vm426, %v488, %v490
      %v492 = vrot.slane %v276, 2
      %v493 = vrot.slane %v277, 2
      %v494 = vsel %vm426, %v492, %v493
      %v495 = vrot.slane %v278, 2
      %v496 = vsel %vm426, %v493, %v495
      %v497 = vrot.slane %v279, 2
      %v498 = vrot.slane %v280, 2
      %v499 = vsel %vm426, %v497, %v498
      %v500 = vrot.slane %v281, 2
      %v501 = vsel %vm426, %v498, %v500
      %v502 = vrot.slane %v282, 2
      %v503 = vrot.slane %v283, 2
      %v504 = vsel %vm426, %v502, %v503
      %v505 = vrot.slane %v284, 2
      %v506 = vsel %vm426, %v503, %v505
      %vm507 = vcmask 1044480
      %v508 = vrot.slane %v237, 3
      %v509 = vrot.slane %v238, 3
      %v510 = vsel %vm507, %v508, %v509
      %v511 = vrot.slane %v239, 3
      %v512 = vsel %vm507, %v509, %v511
      %v513 = vrot.slane %v240, 3
      %v514 = vrot.slane %v241, 3
      %v515 = vsel %vm507, %v513, %v514
      %v516 = vrot.slane %v242, 3
      %v517 = vsel %vm507, %v514, %v516
      %v518 = vrot.slane %v243, 3
      %v519 = vrot.slane %v244, 3
      %v520 = vsel %vm507, %v518, %v519
      %v521 = vrot.slane %v245, 3
      %v522 = vsel %vm507, %v519, %v521
      %v523 = vrot.slane %v246, 3
      %v524 = vrot.slane %v247, 3
      %v525 = vsel %vm507, %v523, %v524
      %v526 = vrot.slane %v248, 3
      %v527 = vsel %vm507, %v524, %v526
      %v528 = vrot.slane %v249, 3
      %v529 = vrot.slane %v250, 3
      %v530 = vsel %vm507, %v528, %v529
      %v531 = vrot.slane %v251, 3
      %v532 = vsel %vm507, %v529, %v531
      %v533 = vrot.slane %v252, 3
      %v534 = vrot.slane %v253, 3
      %v535 = vsel %vm507, %v533, %v534
      %v536 = vrot.slane %v254, 3
      %v537 = vsel %vm507, %v534, %v536
      %v538 = vrot.slane %v255, 3
      %v539 = vrot.slane %v256, 3
      %v540 = vsel %vm507, %v538, %v539
      %v541 = vrot.slane %v257, 3
      %v542 = vsel %vm507, %v539, %v541
      %v543 = vrot.slane %v258, 3
      %v544 = vrot.slane %v259, 3
      %v545 = vsel %vm507, %v543, %v544
      %v546 = vrot.slane %v260, 3
      %v547 = vsel %vm507, %v544, %v546
      %v548 = vrot.slane %v261, 3
      %v549 = vrot.slane %v262, 3
      %v550 = vsel %vm507, %v548, %v549
      %v551 = vrot.slane %v263, 3
      %v552 = vsel %vm507, %v549, %v551
      %v553 = vrot.slane %v264, 3
      %v554 = vrot.slane %v265, 3
      %v555 = vsel %vm507, %v553, %v554
      %v556 = vrot.slane %v266, 3
      %v557 = vsel %vm507, %v554, %v556
      %v558 = vrot.slane %v267, 3
      %v559 = vrot.slane %v268, 3
      %v560 = vsel %vm507, %v558, %v559
      %v561 = vrot.slane %v269, 3
      %v562 = vsel %vm507, %v559, %v561
      %v563 = vrot.slane %v270, 3
      %v564 = vrot.slane %v271, 3
      %v565 = vsel %vm507, %v563, %v564
      %v566 = vrot.slane %v272, 3
      %v567 = vsel %vm507, %v564, %v566
      %v568 = vrot.slane %v273, 3
      %v569 = vrot.slane %v274, 3
      %v570 = vsel %vm507, %v568, %v569
      %v571 = vrot.slane %v275, 3
      %v572 = vsel %vm507, %v569, %v571
      %v573 = vrot.slane %v276, 3
      %v574 = vrot.slane %v277, 3
      %v575 = vsel %vm507, %v573, %v574
      %v576 = vrot.slane %v278, 3
      %v577 = vsel %vm507, %v574, %v576
      %v578 = vrot.slane %v279, 3
      %v579 = vrot.slane %v280, 3
      %v580 = vsel %vm507, %v578, %v579
      %v581 = vrot.slane %v281, 3
      %v582 = vsel %vm507, %v579, %v581
      %v583 = vrot.slane %v282, 3
      %v584 = vrot.slane %v283, 3
      %v585 = vsel %vm507, %v583, %v584
      %v586 = vrot.slane %v284, 3
      %v587 = vsel %vm507, %v584, %v586
      %vm588 = vcmask 1043456
      %v589 = vrot.slane %v237, 4
      %v590 = vrot.slane %v238, 4
      %v591 = vsel %vm588, %v589, %v590
      %v592 = vrot.slane %v239, 4
      %v593 = vsel %vm588, %v590, %v592
      %v594 = vrot.slane %v240, 4
      %v595 = vrot.slane %v241, 4
      %v596 = vsel %vm588, %v594, %v595
      %v597 = vrot.slane %v242, 4
      %v598 = vsel %vm588, %v595, %v597
      %v599 = vrot.slane %v243, 4
      %v600 = vrot.slane %v244, 4
      %v601 = vsel %vm588, %v599, %v600
      %v602 = vrot.slane %v245, 4
      %v603 = vsel %vm588, %v600, %v602
      %v604 = vrot.slane %v246, 4
      %v605 = vrot.slane %v247, 4
      %v606 = vsel %vm588, %v604, %v605
      %v607 = vrot.slane %v248, 4
      %v608 = vsel %vm588, %v605, %v607
      %v609 = vrot.slane %v249, 4
      %v610 = vrot.slane %v250, 4
      %v611 = vsel %vm588, %v609, %v610
      %v612 = vrot.slane %v251, 4
      %v613 = vsel %vm588, %v610, %v612
      %v614 = vrot.slane %v252, 4
      %v615 = vrot.slane %v253, 4
      %v616 = vsel %vm588, %v614, %v615
      %v617 = vrot.slane %v254, 4
      %v618 = vsel %vm588, %v615, %v617
      %v619 = vrot.slane %v255, 4
      %v620 = vrot.slane %v256, 4
      %v621 = vsel %vm588, %v619, %v620
      %v622 = vrot.slane %v257, 4
      %v623 = vsel %vm588, %v620, %v622
      %v624 = vrot.slane %v258, 4
      %v625 = vrot.slane %v259, 4
      %v626 = vsel %vm588, %v624, %v625
      %v627 = vrot.slane %v260, 4
      %v628 = vsel %vm588, %v625, %v627
      %v629 = vrot.slane %v261, 4
      %v630 = vrot.slane %v262, 4
      %v631 = vsel %vm588, %v629, %v630
      %v632 = vrot.slane %v263, 4
      %v633 = vsel %vm588, %v630, %v632
      %v634 = vrot.slane %v264, 4
      %v635 = vrot.slane %v265, 4
      %v636 = vsel %vm588, %v634, %v635
      %v637 = vrot.slane %v266, 4
      %v638 = vsel %vm588, %v635, %v637
      %v639 = vrot.slane %v267, 4
      %v640 = vrot.slane %v268, 4
      %v641 = vsel %vm588, %v639, %v640
      %v642 = vrot.slane %v269, 4
      %v643 = vsel %vm588, %v640, %v642
      %v644 = vrot.slane %v270, 4
      %v645 = vrot.slane %v271, 4
      %v646 = vsel %vm588, %v644, %v645
      %v647 = vrot.slane %v272, 4
      %v648 = vsel %vm588, %v645, %v647
      %v649 = vrot.slane %v273, 4
      %v650 = vrot.slane %v274, 4
      %v651 = vsel %vm588, %v649, %v650
      %v652 = vrot.slane %v275, 4
      %v653 = vsel %vm588, %v650, %v652
      %v654 = vrot.slane %v276, 4
      %v655 = vrot.slane %v277, 4
      %v656 = vsel %vm588, %v654, %v655
      %v657 = vrot.slane %v278, 4
      %v658 = vsel %vm588, %v655, %v657
      %v659 = vrot.slane %v279, 4
      %v660 = vrot.slane %v280, 4
      %v661 = vsel %vm588, %v659, %v660
      %v662 = vrot.slane %v281, 4
      %v663 = vsel %vm588, %v660, %v662
      %v664 = vrot.slane %v282, 4
      %v665 = vrot.slane %v283, 4
      %v666 = vsel %vm588, %v664, %v665
      %v667 = vrot.slane %v284, 4
      %v668 = vsel %vm588, %v665, %v667
      %vm669 = vcmask 1042432
      %v670 = vrot.slane %v237, 5
      %v671 = vrot.slane %v238, 5
      %v672 = vsel %vm669, %v670, %v671
      %v673 = vrot.slane %v239, 5
      %v674 = vsel %vm669, %v671, %v673
      %v675 = vrot.slane %v240, 5
      %v676 = vrot.slane %v241, 5
      %v677 = vsel %vm669, %v675, %v676
      %v678 = vrot.slane %v242, 5
      %v679 = vsel %vm669, %v676, %v678
      %v680 = vrot.slane %v243, 5
      %v681 = vrot.slane %v244, 5
      %v682 = vsel %vm669, %v680, %v681
      %v683 = vrot.slane %v245, 5
      %v684 = vsel %vm669, %v681, %v683
      %v685 = vrot.slane %v246, 5
      %v686 = vrot.slane %v247, 5
      %v687 = vsel %vm669, %v685, %v686
      %v688 = vrot.slane %v248, 5
      %v689 = vsel %vm669, %v686, %v688
      %v690 = vrot.slane %v249, 5
      %v691 = vrot.slane %v250, 5
      %v692 = vsel %vm669, %v690, %v691
      %v693 = vrot.slane %v251, 5
      %v694 = vsel %vm669, %v691, %v693
      %v695 = vrot.slane %v252, 5
      %v696 = vrot.slane %v253, 5
      %v697 = vsel %vm669, %v695, %v696
      %v698 = vrot.slane %v254, 5
      %v699 = vsel %vm669, %v696, %v698
      %v700 = vrot.slane %v255, 5
      %v701 = vrot.slane %v256, 5
      %v702 = vsel %vm669, %v700, %v701
      %v703 = vrot.slane %v257, 5
      %v704 = vsel %vm669, %v701, %v703
      %v705 = vrot.slane %v258, 5
      %v706 = vrot.slane %v259, 5
      %v707 = vsel %vm669, %v705, %v706
      %v708 = vrot.slane %v260, 5
      %v709 = vsel %vm669, %v706, %v708
      %v710 = vrot.slane %v261, 5
      %v711 = vrot.slane %v262, 5
      %v712 = vsel %vm669, %v710, %v711
      %v713 = vrot.slane %v263, 5
      %v714 = vsel %vm669, %v711, %v713
      %v715 = vrot.slane %v264, 5
      %v716 = vrot.slane %v265, 5
      %v717 = vsel %vm669, %v715, %v716
      %v718 = vrot.slane %v266, 5
      %v719 = vsel %vm669, %v716, %v718
      %v720 = vrot.slane %v267, 5
      %v721 = vrot.slane %v268, 5
      %v722 = vsel %vm669, %v720, %v721
      %v723 = vrot.slane %v269, 5
      %v724 = vsel %vm669, %v721, %v723
      %v725 = vrot.slane %v270, 5
      %v726 = vrot.slane %v271, 5
      %v727 = vsel %vm669, %v725, %v726
      %v728 = vrot.slane %v272, 5
      %v729 = vsel %vm669, %v726, %v728
      %v730 = vrot.slane %v273, 5
      %v731 = vrot.slane %v274, 5
      %v732 = vsel %vm669, %v730, %v731
      %v733 = vrot.slane %v275, 5
      %v734 = vsel %vm669, %v731, %v733
      %v735 = vrot.slane %v276, 5
      %v736 = vrot.slane %v277, 5
      %v737 = vsel %vm669, %v735, %v736
      %v738 = vrot.slane %v278, 5
      %v739 = vsel %vm669, %v736, %v738
      %v740 = vrot.slane %v279, 5
      %v741 = vrot.slane %v280, 5
      %v742 = vsel %vm669, %v740, %v741
      %v743 = vrot.slane %v281, 5
      %v744 = vsel %vm669, %v741, %v743
      %v745 = vrot.slane %v282, 5
      %v746 = vrot.slane %v283, 5
      %v747 = vsel %vm669, %v745, %v746
      %v748 = vrot.slane %v284, 5
      %v749 = vsel %vm669, %v746, %v748
      %vm750 = vcmask 1041408
      %v751 = vrot.slane %v237, 6
      %v752 = vrot.slane %v238, 6
      %v753 = vsel %vm750, %v751, %v752
      %v754 = vrot.slane %v239, 6
      %v755 = vsel %vm750, %v752, %v754
      %v756 = vrot.slane %v240, 6
      %v757 = vrot.slane %v241, 6
      %v758 = vsel %vm750, %v756, %v757
      %v759 = vrot.slane %v242, 6
      %v760 = vsel %vm750, %v757, %v759
      %v761 = vrot.slane %v243, 6
      %v762 = vrot.slane %v244, 6
      %v763 = vsel %vm750, %v761, %v762
      %v764 = vrot.slane %v245, 6
      %v765 = vsel %vm750, %v762, %v764
      %v766 = vrot.slane %v246, 6
      %v767 = vrot.slane %v247, 6
      %v768 = vsel %vm750, %v766, %v767
      %v769 = vrot.slane %v248, 6
      %v770 = vsel %vm750, %v767, %v769
      %v771 = vrot.slane %v249, 6
      %v772 = vrot.slane %v250, 6
      %v773 = vsel %vm750, %v771, %v772
      %v774 = vrot.slane %v251, 6
      %v775 = vsel %vm750, %v772, %v774
      %v776 = vrot.slane %v252, 6
      %v777 = vrot.slane %v253, 6
      %v778 = vsel %vm750, %v776, %v777
      %v779 = vrot.slane %v254, 6
      %v780 = vsel %vm750, %v777, %v779
      %v781 = vrot.slane %v255, 6
      %v782 = vrot.slane %v256, 6
      %v783 = vsel %vm750, %v781, %v782
      %v784 = vrot.slane %v257, 6
      %v785 = vsel %vm750, %v782, %v784
      %v786 = vrot.slane %v258, 6
      %v787 = vrot.slane %v259, 6
      %v788 = vsel %vm750, %v786, %v787
      %v789 = vrot.slane %v260, 6
      %v790 = vsel %vm750, %v787, %v789
      %v791 = vrot.slane %v261, 6
      %v792 = vrot.slane %v262, 6
      %v793 = vsel %vm750, %v791, %v792
      %v794 = vrot.slane %v263, 6
      %v795 = vsel %vm750, %v792, %v794
      %v796 = vrot.slane %v264, 6
      %v797 = vrot.slane %v265, 6
      %v798 = vsel %vm750, %v796, %v797
      %v799 = vrot.slane %v266, 6
      %v800 = vsel %vm750, %v797, %v799
      %v801 = vrot.slane %v267, 6
      %v802 = vrot.slane %v268, 6
      %v803 = vsel %vm750, %v801, %v802
      %v804 = vrot.slane %v269, 6
      %v805 = vsel %vm750, %v802, %v804
      %v806 = vrot.slane %v270, 6
      %v807 = vrot.slane %v271, 6
      %v808 = vsel %vm750, %v806, %v807
      %v809 = vrot.slane %v272, 6
      %v810 = vsel %vm750, %v807, %v809
      %v811 = vrot.slane %v273, 6
      %v812 = vrot.slane %v274, 6
      %v813 = vsel %vm750, %v811, %v812
      %v814 = vrot.slane %v275, 6
      %v815 = vsel %vm750, %v812, %v814
      %v816 = vrot.slane %v276, 6
      %v817 = vrot.slane %v277, 6
      %v818 = vsel %vm750, %v816, %v817
      %v819 = vrot.slane %v278, 6
      %v820 = vsel %vm750, %v817, %v819
      %v821 = vrot.slane %v279, 6
      %v822 = vrot.slane %v280, 6
      %v823 = vsel %vm750, %v821, %v822
      %v824 = vrot.slane %v281, 6
      %v825 = vsel %vm750, %v822, %v824
      %v826 = vrot.slane %v282, 6
      %v827 = vrot.slane %v283, 6
      %v828 = vsel %vm750, %v826, %v827
      %v829 = vrot.slane %v284, 6
      %v830 = vsel %vm750, %v827, %v829
      %vm831 = vcmask 1040384
      %v832 = vrot.slane %v237, 7
      %v833 = vrot.slane %v238, 7
      %v834 = vsel %vm831, %v832, %v833
      %v835 = vrot.slane %v239, 7
      %v836 = vsel %vm831, %v833, %v835
      %v837 = vrot.slane %v240, 7
      %v838 = vrot.slane %v241, 7
      %v839 = vsel %vm831, %v837, %v838
      %v840 = vrot.slane %v242, 7
      %v841 = vsel %vm831, %v838, %v840
      %v842 = vrot.slane %v243, 7
      %v843 = vrot.slane %v244, 7
      %v844 = vsel %vm831, %v842, %v843
      %v845 = vrot.slane %v245, 7
      %v846 = vsel %vm831, %v843, %v845
      %v847 = vrot.slane %v246, 7
      %v848 = vrot.slane %v247, 7
      %v849 = vsel %vm831, %v847, %v848
      %v850 = vrot.slane %v248, 7
      %v851 = vsel %vm831, %v848, %v850
      %v852 = vrot.slane %v249, 7
      %v853 = vrot.slane %v250, 7
      %v854 = vsel %vm831, %v852, %v853
      %v855 = vrot.slane %v251, 7
      %v856 = vsel %vm831, %v853, %v855
      %v857 = vrot.slane %v252, 7
      %v858 = vrot.slane %v253, 7
      %v859 = vsel %vm831, %v857, %v858
      %v860 = vrot.slane %v254, 7
      %v861 = vsel %vm831, %v858, %v860
      %v862 = vrot.slane %v255, 7
      %v863 = vrot.slane %v256, 7
      %v864 = vsel %vm831, %v862, %v863
      %v865 = vrot.slane %v257, 7
      %v866 = vsel %vm831, %v863, %v865
      %v867 = vrot.slane %v258, 7
      %v868 = vrot.slane %v259, 7
      %v869 = vsel %vm831, %v867, %v868
      %v870 = vrot.slane %v260, 7
      %v871 = vsel %vm831, %v868, %v870
      %v872 = vrot.slane %v261, 7
      %v873 = vrot.slane %v262, 7
      %v874 = vsel %vm831, %v872, %v873
      %v875 = vrot.slane %v263, 7
      %v876 = vsel %vm831, %v873, %v875
      %v877 = vrot.slane %v264, 7
      %v878 = vrot.slane %v265, 7
      %v879 = vsel %vm831, %v877, %v878
      %v880 = vrot.slane %v266, 7
      %v881 = vsel %vm831, %v878, %v880
      %v882 = vrot.slane %v267, 7
      %v883 = vrot.slane %v268, 7
      %v884 = vsel %vm831, %v882, %v883
      %v885 = vrot.slane %v269, 7
      %v886 = vsel %vm831, %v883, %v885
      %v887 = vrot.slane %v270, 7
      %v888 = vrot.slane %v271, 7
      %v889 = vsel %vm831, %v887, %v888
      %v890 = vrot.slane %v272, 7
      %v891 = vsel %vm831, %v888, %v890
      %v892 = vrot.slane %v273, 7
      %v893 = vrot.slane %v274, 7
      %v894 = vsel %vm831, %v892, %v893
      %v895 = vrot.slane %v275, 7
      %v896 = vsel %vm831, %v893, %v895
      %v897 = vrot.slane %v276, 7
      %v898 = vrot.slane %v277, 7
      %v899 = vsel %vm831, %v897, %v898
      %v900 = vrot.slane %v278, 7
      %v901 = vsel %vm831, %v898, %v900
      %v902 = vrot.slane %v279, 7
      %v903 = vrot.slane %v280, 7
      %v904 = vsel %vm831, %v902, %v903
      %v905 = vrot.slane %v281, 7
      %v906 = vsel %vm831, %v903, %v905
      %v907 = vrot.slane %v282, 7
      %v908 = vrot.slane %v283, 7
      %v909 = vsel %vm831, %v907, %v908
      %v910 = vrot.slane %v284, 7
      %v911 = vsel %vm831, %v908, %v910
      %912 = vrot.lane.b32.xlu0 %v348, 16
      %v913 = vpop.permute.xlu0 %912
      %914 = vrot.lane.b32.xlu0 %v350, 16
      %v915 = vpop.permute.xlu0 %914
      %916 = vrot.lane.b32.xlu0 %v353, 16
      %v917 = vpop.permute.xlu0 %916
      %918 = vrot.lane.b32.xlu0 %v355, 16
      %v919 = vpop.permute.xlu0 %918
      %920 = vrot.lane.b32.xlu0 %v358, 16
      %v921 = vpop.permute.xlu0 %920
      %922 = vrot.lane.b32.xlu0 %v360, 16
      %v923 = vpop.permute.xlu0 %922
      %924 = vrot.lane.b32.xlu0 %v363, 16
      %v925 = vpop.permute.xlu0 %924
      %926 = vrot.lane.b32.xlu0 %v365, 16
      %v927 = vpop.permute.xlu0 %926
      %928 = vrot.lane.b32.xlu0 %v368, 16
      %v929 = vpop.permute.xlu0 %928
      %930 = vrot.lane.b32.xlu0 %v370, 16
      %v931 = vpop.permute.xlu0 %930
      %932 = vrot.lane.b32.xlu0 %v373, 16
      %v933 = vpop.permute.xlu0 %932
      %934 = vrot.lane.b32.xlu0 %v375, 16
      %v935 = vpop.permute.xlu0 %934
      %936 = vrot.lane.b32.xlu0 %v378, 16
      %v937 = vpop.permute.xlu0 %936
      %938 = vrot.lane.b32.xlu0 %v380, 16
      %v939 = vpop.permute.xlu0 %938
      %940 = vrot.lane.b32.xlu0 %v383, 16
      %v941 = vpop.permute.xlu0 %940
      %942 = vrot.lane.b32.xlu0 %v385, 16
      %v943 = vpop.permute.xlu0 %942
      %944 = vrot.lane.b32.xlu0 %v388, 16
      %v945 = vpop.permute.xlu0 %944
      %946 = vrot.lane.b32.xlu0 %v390, 16
      %v947 = vpop.permute.xlu0 %946
      %948 = vrot.lane.b32.xlu0 %v393, 16
      %v949 = vpop.permute.xlu0 %948
      %950 = vrot.lane.b32.xlu0 %v395, 16
      %v951 = vpop.permute.xlu0 %950
      %952 = vrot.lane.b32.xlu0 %v398, 16
      %v953 = vpop.permute.xlu0 %952
      %954 = vrot.lane.b32.xlu0 %v400, 16
      %v955 = vpop.permute.xlu0 %954
      %956 = vrot.lane.b32.xlu0 %v403, 16
      %v957 = vpop.permute.xlu0 %956
      %958 = vrot.lane.b32.xlu0 %v405, 16
      %v959 = vpop.permute.xlu0 %958
      %960 = vrot.lane.b32.xlu0 %v408, 16
      %v961 = vpop.permute.xlu0 %960
      %962 = vrot.lane.b32.xlu0 %v410, 16
      %v963 = vpop.permute.xlu0 %962
      %964 = vrot.lane.b32.xlu0 %v413, 16
      %v965 = vpop.permute.xlu0 %964
      %966 = vrot.lane.b32.xlu0 %v415, 16
      %v967 = vpop.permute.xlu0 %966
      %968 = vrot.lane.b32.xlu0 %v418, 16
      %v969 = vpop.permute.xlu0 %968
      %970 = vrot.lane.b32.xlu0 %v420, 16
      %v971 = vpop.permute.xlu0 %970
      %972 = vrot.lane.b32.xlu0 %v423, 16
      %v973 = vpop.permute.xlu0 %972
      %974 = vrot.lane.b32.xlu0 %v425, 16
      %v975 = vpop.permute.xlu0 %974
      %1008 = vrot.lane.b32.xlu0 %v429, 32
      %v1009 = vpop.permute.xlu0 %1008
      %1010 = vrot.lane.b32.xlu0 %v431, 32
      %v1011 = vpop.permute.xlu0 %1010
      %1012 = vrot.lane.b32.xlu0 %v434, 32
      %v1013 = vpop.permute.xlu0 %1012
      %1014 = vrot.lane.b32.xlu0 %v436, 32
      %v1015 = vpop.permute.xlu0 %1014
      %1016 = vrot.lane.b32.xlu0 %v439, 32
      %v1017 = vpop.permute.xlu0 %1016
      %1018 = vrot.lane.b32.xlu0 %v441, 32
      %v1019 = vpop.permute.xlu0 %1018
      %1020 = vrot.lane.b32.xlu0 %v444, 32
      %v1021 = vpop.permute.xlu0 %1020
      %1022 = vrot.lane.b32.xlu0 %v446, 32
      %v1023 = vpop.permute.xlu0 %1022
      %1024 = vrot.lane.b32.xlu0 %v449, 32
      %v1025 = vpop.permute.xlu0 %1024
      %1026 = vrot.lane.b32.xlu0 %v451, 32
      %v1027 = vpop.permute.xlu0 %1026
      %1028 = vrot.lane.b32.xlu0 %v454, 32
      %v1029 = vpop.permute.xlu0 %1028
      %1030 = vrot.lane.b32.xlu0 %v456, 32
      %v1031 = vpop.permute.xlu0 %1030
      %1032 = vrot.lane.b32.xlu0 %v459, 32
      %v1033 = vpop.permute.xlu0 %1032
      %1034 = vrot.lane.b32.xlu0 %v461, 32
      %v1035 = vpop.permute.xlu0 %1034
      %1036 = vrot.lane.b32.xlu0 %v464, 32
      %v1037 = vpop.permute.xlu0 %1036
      %1038 = vrot.lane.b32.xlu0 %v466, 32
      %v1039 = vpop.permute.xlu0 %1038
      %1040 = vrot.lane.b32.xlu0 %v469, 32
      %v1041 = vpop.permute.xlu0 %1040
      %1042 = vrot.lane.b32.xlu0 %v471, 32
      %v1043 = vpop.permute.xlu0 %1042
      %1044 = vrot.lane.b32.xlu0 %v474, 32
      %v1045 = vpop.permute.xlu0 %1044
      %1046 = vrot.lane.b32.xlu0 %v476, 32
      %v1047 = vpop.permute.xlu0 %1046
      %1048 = vrot.lane.b32.xlu0 %v479, 32
      %v1049 = vpop.permute.xlu0 %1048
      %1050 = vrot.lane.b32.xlu0 %v481, 32
      %v1051 = vpop.permute.xlu0 %1050
      %1052 = vrot.lane.b32.xlu0 %v484, 32
      %v1053 = vpop.permute.xlu0 %1052
      %1054 = vrot.lane.b32.xlu0 %v486, 32
      %v1055 = vpop.permute.xlu0 %1054
      %1056 = vrot.lane.b32.xlu0 %v489, 32
      %v1057 = vpop.permute.xlu0 %1056
      %1058 = vrot.lane.b32.xlu0 %v491, 32
      %v1059 = vpop.permute.xlu0 %1058
      %1060 = vrot.lane.b32.xlu0 %v494, 32
      %v1061 = vpop.permute.xlu0 %1060
      %1062 = vrot.lane.b32.xlu0 %v496, 32
      %v1063 = vpop.permute.xlu0 %1062
      %1064 = vrot.lane.b32.xlu0 %v499, 32
      %v1065 = vpop.permute.xlu0 %1064
      %1066 = vrot.lane.b32.xlu0 %v501, 32
      %v1067 = vpop.permute.xlu0 %1066
      %1068 = vrot.lane.b32.xlu0 %v504, 32
      %v1069 = vpop.permute.xlu0 %1068
      %1070 = vrot.lane.b32.xlu0 %v506, 32
      %v1071 = vpop.permute.xlu0 %1070
      %1104 = vrot.lane.b32.xlu0 %v510, 48
      %v1105 = vpop.permute.xlu0 %1104
      %1106 = vrot.lane.b32.xlu0 %v512, 48
      %v1107 = vpop.permute.xlu0 %1106
      %1108 = vrot.lane.b32.xlu0 %v515, 48
      %v1109 = vpop.permute.xlu0 %1108
      %1110 = vrot.lane.b32.xlu0 %v517, 48
      %v1111 = vpop.permute.xlu0 %1110
      %1112 = vrot.lane.b32.xlu0 %v520, 48
      %v1113 = vpop.permute.xlu0 %1112
      %1114 = vrot.lane.b32.xlu0 %v522, 48
      %v1115 = vpop.permute.xlu0 %1114
      %1116 = vrot.lane.b32.xlu0 %v525, 48
      %v1117 = vpop.permute.xlu0 %1116
      %1118 = vrot.lane.b32.xlu0 %v527, 48
      %v1119 = vpop.permute.xlu0 %1118
      %1120 = vrot.lane.b32.xlu0 %v530, 48
      %v1121 = vpop.permute.xlu0 %1120
      %1122 = vrot.lane.b32.xlu0 %v532, 48
      %v1123 = vpop.permute.xlu0 %1122
      %1124 = vrot.lane.b32.xlu0 %v535, 48
      %v1125 = vpop.permute.xlu0 %1124
      %1126 = vrot.lane.b32.xlu0 %v537, 48
      %v1127 = vpop.permute.xlu0 %1126
      %1128 = vrot.lane.b32.xlu0 %v540, 48
      %v1129 = vpop.permute.xlu0 %1128
      %1130 = vrot.lane.b32.xlu0 %v542, 48
      %v1131 = vpop.permute.xlu0 %1130
      %1132 = vrot.lane.b32.xlu0 %v545, 48
      %v1133 = vpop.permute.xlu0 %1132
      %1134 = vrot.lane.b32.xlu0 %v547, 48
      %v1135 = vpop.permute.xlu0 %1134
      %1136 = vrot.lane.b32.xlu0 %v550, 48
      %v1137 = vpop.permute.xlu0 %1136
      %1138 = vrot.lane.b32.xlu0 %v552, 48
      %v1139 = vpop.permute.xlu0 %1138
      %1140 = vrot.lane.b32.xlu0 %v555, 48
      %v1141 = vpop.permute.xlu0 %1140
      %1142 = vrot.lane.b32.xlu0 %v557, 48
      %v1143 = vpop.permute.xlu0 %1142
      %1144 = vrot.lane.b32.xlu0 %v560, 48
      %v1145 = vpop.permute.xlu0 %1144
      %1146 = vrot.lane.b32.xlu0 %v562, 48
      %v1147 = vpop.permute.xlu0 %1146
      %1148 = vrot.lane.b32.xlu0 %v565, 48
      %v1149 = vpop.permute.xlu0 %1148
      %1150 = vrot.lane.b32.xlu0 %v567, 48
      %v1151 = vpop.permute.xlu0 %1150
      %1152 = vrot.lane.b32.xlu0 %v570, 48
      %v1153 = vpop.permute.xlu0 %1152
      %1154 = vrot.lane.b32.xlu0 %v572, 48
      %v1155 = vpop.permute.xlu0 %1154
      %1156 = vrot.lane.b32.xlu0 %v575, 48
      %v1157 = vpop.permute.xlu0 %1156
      %1158 = vrot.lane.b32.xlu0 %v577, 48
      %v1159 = vpop.permute.xlu0 %1158
      %1160 = vrot.lane.b32.xlu0 %v580, 48
      %v1161 = vpop.permute.xlu0 %1160
      %1162 = vrot.lane.b32.xlu0 %v582, 48
      %v1163 = vpop.permute.xlu0 %1162
      %1164 = vrot.lane.b32.xlu0 %v585, 48
      %v1165 = vpop.permute.xlu0 %1164
      %1166 = vrot.lane.b32.xlu0 %v587, 48
      %v1167 = vpop.permute.xlu0 %1166
      %1200 = vrot.lane.b32.xlu0 %v591, 64
      %v1201 = vpop.permute.xlu0 %1200
      %1202 = vrot.lane.b32.xlu0 %v593, 64
      %v1203 = vpop.permute.xlu0 %1202
      %1204 = vrot.lane.b32.xlu0 %v596, 64
      %v1205 = vpop.permute.xlu0 %1204
      %1206 = vrot.lane.b32.xlu0 %v598, 64
      %v1207 = vpop.permute.xlu0 %1206
      %1208 = vrot.lane.b32.xlu0 %v601, 64
      %v1209 = vpop.permute.xlu0 %1208
      %1210 = vrot.lane.b32.xlu0 %v603, 64
      %v1211 = vpop.permute.xlu0 %1210
      %1212 = vrot.lane.b32.xlu0 %v606, 64
      %v1213 = vpop.permute.xlu0 %1212
      %1214 = vrot.lane.b32.xlu0 %v608, 64
      %v1215 = vpop.permute.xlu0 %1214
      %1216 = vrot.lane.b32.xlu0 %v611, 64
      %v1217 = vpop.permute.xlu0 %1216
      %1218 = vrot.lane.b32.xlu0 %v613, 64
      %v1219 = vpop.permute.xlu0 %1218
      %1220 = vrot.lane.b32.xlu0 %v616, 64
      %v1221 = vpop.permute.xlu0 %1220
      %1222 = vrot.lane.b32.xlu0 %v618, 64
      %v1223 = vpop.permute.xlu0 %1222
      %1224 = vrot.lane.b32.xlu0 %v621, 64
      %v1225 = vpop.permute.xlu0 %1224
      %1226 = vrot.lane.b32.xlu0 %v623, 64
      %v1227 = vpop.permute.xlu0 %1226
      %1228 = vrot.lane.b32.xlu0 %v626, 64
      %v1229 = vpop.permute.xlu0 %1228
      %1230 = vrot.lane.b32.xlu0 %v628, 64
      %v1231 = vpop.permute.xlu0 %1230
      %1232 = vrot.lane.b32.xlu0 %v631, 64
      %v1233 = vpop.permute.xlu0 %1232
      %1234 = vrot.lane.b32.xlu0 %v633, 64
      %v1235 = vpop.permute.xlu0 %1234
      %1236 = vrot.lane.b32.xlu0 %v636, 64
      %v1237 = vpop.permute.xlu0 %1236
      %1238 = vrot.lane.b32.xlu0 %v638, 64
      %v1239 = vpop.permute.xlu0 %1238
      %1240 = vrot.lane.b32.xlu0 %v641, 64
      %v1241 = vpop.permute.xlu0 %1240
      %1242 = vrot.lane.b32.xlu0 %v643, 64
      %v1243 = vpop.permute.xlu0 %1242
      %1244 = vrot.lane.b32.xlu0 %v646, 64
      %v1245 = vpop.permute.xlu0 %1244
      %1246 = vrot.lane.b32.xlu0 %v648, 64
      %v1247 = vpop.permute.xlu0 %1246
      %1248 = vrot.lane.b32.xlu0 %v651, 64
      %v1249 = vpop.permute.xlu0 %1248
      %1250 = vrot.lane.b32.xlu0 %v653, 64
      %v1251 = vpop.permute.xlu0 %1250
      %1252 = vrot.lane.b32.xlu0 %v656, 64
      %v1253 = vpop.permute.xlu0 %1252
      %1254 = vrot.lane.b32.xlu0 %v658, 64
      %v1255 = vpop.permute.xlu0 %1254
      %1256 = vrot.lane.b32.xlu0 %v661, 64
      %v1257 = vpop.permute.xlu0 %1256
      %1258 = vrot.lane.b32.xlu0 %v663, 64
      %v1259 = vpop.permute.xlu0 %1258
      %1260 = vrot.lane.b32.xlu0 %v666, 64
      %v1261 = vpop.permute.xlu0 %1260
      %1262 = vrot.lane.b32.xlu0 %v668, 64
      %v1263 = vpop.permute.xlu0 %1262
      %1296 = vrot.lane.b32.xlu0 %v672, 80
      %v1297 = vpop.permute.xlu0 %1296
      %1298 = vrot.lane.b32.xlu0 %v674, 80
      %v1299 = vpop.permute.xlu0 %1298
      %1300 = vrot.lane.b32.xlu0 %v677, 80
      %v1301 = vpop.permute.xlu0 %1300
      %1302 = vrot.lane.b32.xlu0 %v679, 80
      %v1303 = vpop.permute.xlu0 %1302
      %1304 = vrot.lane.b32.xlu0 %v682, 80
      %v1305 = vpop.permute.xlu0 %1304
      %1306 = vrot.lane.b32.xlu0 %v684, 80
      %v1307 = vpop.permute.xlu0 %1306
      %1308 = vrot.lane.b32.xlu0 %v687, 80
      %v1309 = vpop.permute.xlu0 %1308
      %1310 = vrot.lane.b32.xlu0 %v689, 80
      %v1311 = vpop.permute.xlu0 %1310
      %1312 = vrot.lane.b32.xlu0 %v692, 80
      %v1313 = vpop.permute.xlu0 %1312
      %1314 = vrot.lane.b32.xlu0 %v694, 80
      %v1315 = vpop.permute.xlu0 %1314
      %1316 = vrot.lane.b32.xlu0 %v697, 80
      %v1317 = vpop.permute.xlu0 %1316
      %1318 = vrot.lane.b32.xlu0 %v699, 80
      %v1319 = vpop.permute.xlu0 %1318
      %1320 = vrot.lane.b32.xlu0 %v702, 80
      %v1321 = vpop.permute.xlu0 %1320
      %1322 = vrot.lane.b32.xlu0 %v704, 80
      %v1323 = vpop.permute.xlu0 %1322
      %1324 = vrot.lane.b32.xlu0 %v707, 80
      %v1325 = vpop.permute.xlu0 %1324
      %1326 = vrot.lane.b32.xlu0 %v709, 80
      %v1327 = vpop.permute.xlu0 %1326
      %1328 = vrot.lane.b32.xlu0 %v712, 80
      %v1329 = vpop.permute.xlu0 %1328
      %1330 = vrot.lane.b32.xlu0 %v714, 80
      %v1331 = vpop.permute.xlu0 %1330
      %1332 = vrot.lane.b32.xlu0 %v717, 80
      %v1333 = vpop.permute.xlu0 %1332
      %1334 = vrot.lane.b32.xlu0 %v719, 80
      %v1335 = vpop.permute.xlu0 %1334
      %1336 = vrot.lane.b32.xlu0 %v722, 80
      %v1337 = vpop.permute.xlu0 %1336
      %1338 = vrot.lane.b32.xlu0 %v724, 80
      %v1339 = vpop.permute.xlu0 %1338
      %1340 = vrot.lane.b32.xlu0 %v727, 80
      %v1341 = vpop.permute.xlu0 %1340
      %1342 = vrot.lane.b32.xlu0 %v729, 80
      %v1343 = vpop.permute.xlu0 %1342
      %1344 = vrot.lane.b32.xlu0 %v732, 80
      %v1345 = vpop.permute.xlu0 %1344
      %1346 = vrot.lane.b32.xlu0 %v734, 80
      %v1347 = vpop.permute.xlu0 %1346
      %1348 = vrot.lane.b32.xlu0 %v737, 80
      %v1349 = vpop.permute.xlu0 %1348
      %1350 = vrot.lane.b32.xlu0 %v739, 80
      %v1351 = vpop.permute.xlu0 %1350
      %1352 = vrot.lane.b32.xlu0 %v742, 80
      %v1353 = vpop.permute.xlu0 %1352
      %1354 = vrot.lane.b32.xlu0 %v744, 80
      %v1355 = vpop.permute.xlu0 %1354
      %1356 = vrot.lane.b32.xlu0 %v747, 80
      %v1357 = vpop.permute.xlu0 %1356
      %1358 = vrot.lane.b32.xlu0 %v749, 80
      %v1359 = vpop.permute.xlu0 %1358
      %1392 = vrot.lane.b32.xlu0 %v753, 96
      %v1393 = vpop.permute.xlu0 %1392
      %1394 = vrot.lane.b32.xlu0 %v755, 96
      %v1395 = vpop.permute.xlu0 %1394
      %1396 = vrot.lane.b32.xlu0 %v758, 96
      %v1397 = vpop.permute.xlu0 %1396
      %1398 = vrot.lane.b32.xlu0 %v760, 96
      %v1399 = vpop.permute.xlu0 %1398
      %1400 = vrot.lane.b32.xlu0 %v763, 96
      %v1401 = vpop.permute.xlu0 %1400
      %1402 = vrot.lane.b32.xlu0 %v765, 96
      %v1403 = vpop.permute.xlu0 %1402
      %1404 = vrot.lane.b32.xlu0 %v768, 96
      %v1405 = vpop.permute.xlu0 %1404
      %1406 = vrot.lane.b32.xlu0 %v770, 96
      %v1407 = vpop.permute.xlu0 %1406
      %1408 = vrot.lane.b32.xlu0 %v773, 96
      %v1409 = vpop.permute.xlu0 %1408
      %1410 = vrot.lane.b32.xlu0 %v775, 96
      %v1411 = vpop.permute.xlu0 %1410
      %1412 = vrot.lane.b32.xlu0 %v778, 96
      %v1413 = vpop.permute.xlu0 %1412
      %1414 = vrot.lane.b32.xlu0 %v780, 96
      %v1415 = vpop.permute.xlu0 %1414
      %1416 = vrot.lane.b32.xlu0 %v783, 96
      %v1417 = vpop.permute.xlu0 %1416
      %1418 = vrot.lane.b32.xlu0 %v785, 96
      %v1419 = vpop.permute.xlu0 %1418
      %1420 = vrot.lane.b32.xlu0 %v788, 96
      %v1421 = vpop.permute.xlu0 %1420
      %1422 = vrot.lane.b32.xlu0 %v790, 96
      %v1423 = vpop.permute.xlu0 %1422
      %1424 = vrot.lane.b32.xlu0 %v793, 96
      %v1425 = vpop.permute.xlu0 %1424
      %1426 = vrot.lane.b32.xlu0 %v795, 96
      %v1427 = vpop.permute.xlu0 %1426
      %1428 = vrot.lane.b32.xlu0 %v798, 96
      %v1429 = vpop.permute.xlu0 %1428
      %1430 = vrot.lane.b32.xlu0 %v800, 96
      %v1431 = vpop.permute.xlu0 %1430
      %1432 = vrot.lane.b32.xlu0 %v803, 96
      %v1433 = vpop.permute.xlu0 %1432
      %1434 = vrot.lane.b32.xlu0 %v805, 96
      %v1435 = vpop.permute.xlu0 %1434
      %1436 = vrot.lane.b32.xlu0 %v808, 96
      %v1437 = vpop.permute.xlu0 %1436
      %1438 = vrot.lane.b32.xlu0 %v810, 96
      %v1439 = vpop.permute.xlu0 %1438
      %1440 = vrot.lane.b32.xlu0 %v813, 96
      %v1441 = vpop.permute.xlu0 %1440
      %1442 = vrot.lane.b32.xlu0 %v815, 96
      %v1443 = vpop.permute.xlu0 %1442
      %1444 = vrot.lane.b32.xlu0 %v818, 96
      %v1445 = vpop.permute.xlu0 %1444
      %1446 = vrot.lane.b32.xlu0 %v820, 96
      %v1447 = vpop.permute.xlu0 %1446
      %1448 = vrot.lane.b32.xlu0 %v823, 96
      %v1449 = vpop.permute.xlu0 %1448
      %1450 = vrot.lane.b32.xlu0 %v825, 96
      %v1451 = vpop.permute.xlu0 %1450
      %1452 = vrot.lane.b32.xlu0 %v828, 96
      %v1453 = vpop.permute.xlu0 %1452
      %1454 = vrot.lane.b32.xlu0 %v830, 96
      %v1455 = vpop.permute.xlu0 %1454
      %1488 = vrot.lane.b32.xlu0 %v834, 112
      %v1489 = vpop.permute.xlu0 %1488
      %1490 = vrot.lane.b32.xlu0 %v836, 112
      %v1491 = vpop.permute.xlu0 %1490
      %1492 = vrot.lane.b32.xlu0 %v839, 112
      %v1493 = vpop.permute.xlu0 %1492
      %1494 = vrot.lane.b32.xlu0 %v841, 112
      %v1495 = vpop.permute.xlu0 %1494
      %1496 = vrot.lane.b32.xlu0 %v844, 112
      %v1497 = vpop.permute.xlu0 %1496
      %1498 = vrot.lane.b32.xlu0 %v846, 112
      %v1499 = vpop.permute.xlu0 %1498
      %1500 = vrot.lane.b32.xlu0 %v849, 112
      %v1501 = vpop.permute.xlu0 %1500
      %1502 = vrot.lane.b32.xlu0 %v851, 112
      %v1503 = vpop.permute.xlu0 %1502
      %1504 = vrot.lane.b32.xlu0 %v854, 112
      %v1505 = vpop.permute.xlu0 %1504
      %1506 = vrot.lane.b32.xlu0 %v856, 112
      %v1507 = vpop.permute.xlu0 %1506
      %1508 = vrot.lane.b32.xlu0 %v859, 112
      %v1509 = vpop.permute.xlu0 %1508
      %1510 = vrot.lane.b32.xlu0 %v861, 112
      %v1511 = vpop.permute.xlu0 %1510
      %1512 = vrot.lane.b32.xlu0 %v864, 112
      %v1513 = vpop.permute.xlu0 %1512
      %1514 = vrot.lane.b32.xlu0 %v866, 112
      %v1515 = vpop.permute.xlu0 %1514
      %1516 = vrot.lane.b32.xlu0 %v869, 112
      %v1517 = vpop.permute.xlu0 %1516
      %1518 = vrot.lane.b32.xlu0 %v871, 112
      %v1519 = vpop.permute.xlu0 %1518
      %1520 = vrot.lane.b32.xlu0 %v874, 112
      %v1521 = vpop.permute.xlu0 %1520
      %1522 = vrot.lane.b32.xlu0 %v876, 112
      %v1523 = vpop.permute.xlu0 %1522
      %1524 = vrot.lane.b32.xlu0 %v879, 112
      %v1525 = vpop.permute.xlu0 %1524
      %1526 = vrot.lane.b32.xlu0 %v881, 112
      %v1527 = vpop.permute.xlu0 %1526
      %1528 = vrot.lane.b32.xlu0 %v884, 112
      %v1529 = vpop.permute.xlu0 %1528
      %1530 = vrot.lane.b32.xlu0 %v886, 112
      %v1531 = vpop.permute.xlu0 %1530
      %1532 = vrot.lane.b32.xlu0 %v889, 112
      %v1533 = vpop.permute.xlu0 %1532
      %1534 = vrot.lane.b32.xlu0 %v891, 112
      %v1535 = vpop.permute.xlu0 %1534
      %1536 = vrot.lane.b32.xlu0 %v894, 112
      %v1537 = vpop.permute.xlu0 %1536
      %1538 = vrot.lane.b32.xlu0 %v896, 112
      %v1539 = vpop.permute.xlu0 %1538
      %1540 = vrot.lane.b32.xlu0 %v899, 112
      %v1541 = vpop.permute.xlu0 %1540
      %1542 = vrot.lane.b32.xlu0 %v901, 112
      %v1543 = vpop.permute.xlu0 %1542
      %1544 = vrot.lane.b32.xlu0 %v904, 112
      %v1545 = vpop.permute.xlu0 %1544
      %1546 = vrot.lane.b32.xlu0 %v906, 112
      %v1547 = vpop.permute.xlu0 %1546
      %1548 = vrot.lane.b32.xlu0 %v909, 112
      %v1549 = vpop.permute.xlu0 %1548
      %1550 = vrot.lane.b32.xlu0 %v911, 112
      %v1551 = vpop.permute.xlu0 %1550
      %vm1584 = vcmask 130048
      %v1585 = vsel %vm1584, %v237, %v913
      %v1586 = vsel %vm1584, %v238, %v915
      %v1587 = vsel %vm1584, %v240, %v917
      %v1588 = vsel %vm1584, %v241, %v919
      %v1589 = vsel %vm1584, %v243, %v921
      %v1590 = vsel %vm1584, %v244, %v923
      %v1591 = vsel %vm1584, %v246, %v925
      %v1592 = vsel %vm1584, %v247, %v927
      %v1593 = vsel %vm1584, %v249, %v929
      %v1594 = vsel %vm1584, %v250, %v931
      %v1595 = vsel %vm1584, %v252, %v933
      %v1596 = vsel %vm1584, %v253, %v935
      %v1597 = vsel %vm1584, %v255, %v937
      %v1598 = vsel %vm1584, %v256, %v939
      %v1599 = vsel %vm1584, %v258, %v941
      %v1600 = vsel %vm1584, %v259, %v943
      %v1601 = vsel %vm1584, %v261, %v945
      %v1602 = vsel %vm1584, %v262, %v947
      %v1603 = vsel %vm1584, %v264, %v949
      %v1604 = vsel %vm1584, %v265, %v951
      %v1605 = vsel %vm1584, %v267, %v953
      %v1606 = vsel %vm1584, %v268, %v955
      %v1607 = vsel %vm1584, %v270, %v957
      %v1608 = vsel %vm1584, %v271, %v959
      %v1609 = vsel %vm1584, %v273, %v961
      %v1610 = vsel %vm1584, %v274, %v963
      %v1611 = vsel %vm1584, %v276, %v965
      %v1612 = vsel %vm1584, %v277, %v967
      %v1613 = vsel %vm1584, %v279, %v969
      %v1614 = vsel %vm1584, %v280, %v971
      %v1615 = vsel %vm1584, %v282, %v973
      %v1616 = vsel %vm1584, %v283, %v975
      %vm1617 = vcmask 261120
      %v1618 = vsel %vm1617, %v1585, %v1009
      %v1619 = vsel %vm1617, %v1586, %v1011
      %v1620 = vsel %vm1617, %v1587, %v1013
      %v1621 = vsel %vm1617, %v1588, %v1015
      %v1622 = vsel %vm1617, %v1589, %v1017
      %v1623 = vsel %vm1617, %v1590, %v1019
      %v1624 = vsel %vm1617, %v1591, %v1021
      %v1625 = vsel %vm1617, %v1592, %v1023
      %v1626 = vsel %vm1617, %v1593, %v1025
      %v1627 = vsel %vm1617, %v1594, %v1027
      %v1628 = vsel %vm1617, %v1595, %v1029
      %v1629 = vsel %vm1617, %v1596, %v1031
      %v1630 = vsel %vm1617, %v1597, %v1033
      %v1631 = vsel %vm1617, %v1598, %v1035
      %v1632 = vsel %vm1617, %v1599, %v1037
      %v1633 = vsel %vm1617, %v1600, %v1039
      %v1634 = vsel %vm1617, %v1601, %v1041
      %v1635 = vsel %vm1617, %v1602, %v1043
      %v1636 = vsel %vm1617, %v1603, %v1045
      %v1637 = vsel %vm1617, %v1604, %v1047
      %v1638 = vsel %vm1617, %v1605, %v1049
      %v1639 = vsel %vm1617, %v1606, %v1051
      %v1640 = vsel %vm1617, %v1607, %v1053
      %v1641 = vsel %vm1617, %v1608, %v1055
      %v1642 = vsel %vm1617, %v1609, %v1057
      %v1643 = vsel %vm1617, %v1610, %v1059
      %v1644 = vsel %vm1617, %v1611, %v1061
      %v1645 = vsel %vm1617, %v1612, %v1063
      %v1646 = vsel %vm1617, %v1613, %v1065
      %v1647 = vsel %vm1617, %v1614, %v1067
      %v1648 = vsel %vm1617, %v1615, %v1069
      %v1649 = vsel %vm1617, %v1616, %v1071
      %vm1650 = vcmask 392192
      %v1651 = vsel %vm1650, %v1618, %v1105
      %v1652 = vsel %vm1650, %v1619, %v1107
      %v1653 = vsel %vm1650, %v1620, %v1109
      %v1654 = vsel %vm1650, %v1621, %v1111
      %v1655 = vsel %vm1650, %v1622, %v1113
      %v1656 = vsel %vm1650, %v1623, %v1115
      %v1657 = vsel %vm1650, %v1624, %v1117
      %v1658 = vsel %vm1650, %v1625, %v1119
      %v1659 = vsel %vm1650, %v1626, %v1121
      %v1660 = vsel %vm1650, %v1627, %v1123
      %v1661 = vsel %vm1650, %v1628, %v1125
      %v1662 = vsel %vm1650, %v1629, %v1127
      %v1663 = vsel %vm1650, %v1630, %v1129
      %v1664 = vsel %vm1650, %v1631, %v1131
      %v1665 = vsel %vm1650, %v1632, %v1133
      %v1666 = vsel %vm1650, %v1633, %v1135
      %v1667 = vsel %vm1650, %v1634, %v1137
      %v1668 = vsel %vm1650, %v1635, %v1139
      %v1669 = vsel %vm1650, %v1636, %v1141
      %v1670 = vsel %vm1650, %v1637, %v1143
      %v1671 = vsel %vm1650, %v1638, %v1145
      %v1672 = vsel %vm1650, %v1639, %v1147
      %v1673 = vsel %vm1650, %v1640, %v1149
      %v1674 = vsel %vm1650, %v1641, %v1151
      %v1675 = vsel %vm1650, %v1642, %v1153
      %v1676 = vsel %vm1650, %v1643, %v1155
      %v1677 = vsel %vm1650, %v1644, %v1157
      %v1678 = vsel %vm1650, %v1645, %v1159
      %v1679 = vsel %vm1650, %v1646, %v1161
      %v1680 = vsel %vm1650, %v1647, %v1163
      %v1681 = vsel %vm1650, %v1648, %v1165
      %v1682 = vsel %vm1650, %v1649, %v1167
      %vm1683 = vcmask 523264
      %v1684 = vsel %vm1683, %v1651, %v1201
      %v1685 = vsel %vm1683, %v1652, %v1203
      %v1686 = vsel %vm1683, %v1653, %v1205
      %v1687 = vsel %vm1683, %v1654, %v1207
      %v1688 = vsel %vm1683, %v1655, %v1209
      %v1689 = vsel %vm1683, %v1656, %v1211
      %v1690 = vsel %vm1683, %v1657, %v1213
      %v1691 = vsel %vm1683, %v1658, %v1215
      %v1692 = vsel %vm1683, %v1659, %v1217
      %v1693 = vsel %vm1683, %v1660, %v1219
      %v1694 = vsel %vm1683, %v1661, %v1221
      %v1695 = vsel %vm1683, %v1662, %v1223
      %v1696 = vsel %vm1683, %v1663, %v1225
      %v1697 = vsel %vm1683, %v1664, %v1227
      %v1698 = vsel %vm1683, %v1665, %v1229
      %v1699 = vsel %vm1683, %v1666, %v1231
      %v1700 = vsel %vm1683, %v1667, %v1233
      %v1701 = vsel %vm1683, %v1668, %v1235
      %v1702 = vsel %vm1683, %v1669, %v1237
      %v1703 = vsel %vm1683, %v1670, %v1239
      %v1704 = vsel %vm1683, %v1671, %v1241
      %v1705 = vsel %vm1683, %v1672, %v1243
      %v1706 = vsel %vm1683, %v1673, %v1245
      %v1707 = vsel %vm1683, %v1674, %v1247
      %v1708 = vsel %vm1683, %v1675, %v1249
      %v1709 = vsel %vm1683, %v1676, %v1251
      %v1710 = vsel %vm1683, %v1677, %v1253
      %v1711 = vsel %vm1683, %v1678, %v1255
      %v1712 = vsel %vm1683, %v1679, %v1257
      %v1713 = vsel %vm1683, %v1680, %v1259
      %v1714 = vsel %vm1683, %v1681, %v1261
      %v1715 = vsel %vm1683, %v1682, %v1263
      %vm1716 = vcmask 654336
      %v1717 = vsel %vm1716, %v1684, %v1297
      %v1718 = vsel %vm1716, %v1685, %v1299
      %v1719 = vsel %vm1716, %v1686, %v1301
      %v1720 = vsel %vm1716, %v1687, %v1303
      %v1721 = vsel %vm1716, %v1688, %v1305
      %v1722 = vsel %vm1716, %v1689, %v1307
      %v1723 = vsel %vm1716, %v1690, %v1309
      %v1724 = vsel %vm1716, %v1691, %v1311
      %v1725 = vsel %vm1716, %v1692, %v1313
      %v1726 = vsel %vm1716, %v1693, %v1315
      %v1727 = vsel %vm1716, %v1694, %v1317
      %v1728 = vsel %vm1716, %v1695, %v1319
      %v1729 = vsel %vm1716, %v1696, %v1321
      %v1730 = vsel %vm1716, %v1697, %v1323
      %v1731 = vsel %vm1716, %v1698, %v1325
      %v1732 = vsel %vm1716, %v1699, %v1327
      %v1733 = vsel %vm1716, %v1700, %v1329
      %v1734 = vsel %vm1716, %v1701, %v1331
      %v1735 = vsel %vm1716, %v1702, %v1333
      %v1736 = vsel %vm1716, %v1703, %v1335
      %v1737 = vsel %vm1716, %v1704, %v1337
      %v1738 = vsel %vm1716, %v1705, %v1339
      %v1739 = vsel %vm1716, %v1706, %v1341
      %v1740 = vsel %vm1716, %v1707, %v1343
      %v1741 = vsel %vm1716, %v1708, %v1345
      %v1742 = vsel %vm1716, %v1709, %v1347
      %v1743 = vsel %vm1716, %v1710, %v1349
      %v1744 = vsel %vm1716, %v1711, %v1351
      %v1745 = vsel %vm1716, %v1712, %v1353
      %v1746 = vsel %vm1716, %v1713, %v1355
      %v1747 = vsel %vm1716, %v1714, %v1357
      %v1748 = vsel %vm1716, %v1715, %v1359
      %vm1749 = vcmask 785408
      %v1750 = vsel %vm1749, %v1717, %v1393
      %v1751 = vsel %vm1749, %v1718, %v1395
      %v1752 = vsel %vm1749, %v1719, %v1397
      %v1753 = vsel %vm1749, %v1720, %v1399
      %v1754 = vsel %vm1749, %v1721, %v1401
      %v1755 = vsel %vm1749, %v1722, %v1403
      %v1756 = vsel %vm1749, %v1723, %v1405
      %v1757 = vsel %vm1749, %v1724, %v1407
      %v1758 = vsel %vm1749, %v1725, %v1409
      %v1759 = vsel %vm1749, %v1726, %v1411
      %v1760 = vsel %vm1749, %v1727, %v1413
      %v1761 = vsel %vm1749, %v1728, %v1415
      %v1762 = vsel %vm1749, %v1729, %v1417
      %v1763 = vsel %vm1749, %v1730, %v1419
      %v1764 = vsel %vm1749, %v1731, %v1421
      %v1765 = vsel %vm1749, %v1732, %v1423
      %v1766 = vsel %vm1749, %v1733, %v1425
      %v1767 = vsel %vm1749, %v1734, %v1427
      %v1768 = vsel %vm1749, %v1735, %v1429
      %v1769 = vsel %vm1749, %v1736, %v1431
      %v1770 = vsel %vm1749, %v1737, %v1433
      %v1771 = vsel %vm1749, %v1738, %v1435
      %v1772 = vsel %vm1749, %v1739, %v1437
      %v1773 = vsel %vm1749, %v1740, %v1439
      %v1774 = vsel %vm1749, %v1741, %v1441
      %v1775 = vsel %vm1749, %v1742, %v1443
      %v1776 = vsel %vm1749, %v1743, %v1445
      %v1777 = vsel %vm1749, %v1744, %v1447
      %v1778 = vsel %vm1749, %v1745, %v1449
      %v1779 = vsel %vm1749, %v1746, %v1451
      %v1780 = vsel %vm1749, %v1747, %v1453
      %v1781 = vsel %vm1749, %v1748, %v1455
      %vm1782 = vcmask 916480
      %v1783 = vsel %vm1782, %v1750, %v1489
      %v1784 = vsel %vm1782, %v1751, %v1491
      %v1785 = vsel %vm1782, %v1752, %v1493
      %v1786 = vsel %vm1782, %v1753, %v1495
      %v1787 = vsel %vm1782, %v1754, %v1497
      %v1788 = vsel %vm1782, %v1755, %v1499
      %v1789 = vsel %vm1782, %v1756, %v1501
      %v1790 = vsel %vm1782, %v1757, %v1503
      %v1791 = vsel %vm1782, %v1758, %v1505
      %v1792 = vsel %vm1782, %v1759, %v1507
      %v1793 = vsel %vm1782, %v1760, %v1509
      %v1794 = vsel %vm1782, %v1761, %v1511
      %v1795 = vsel %vm1782, %v1762, %v1513
      %v1796 = vsel %vm1782, %v1763, %v1515
      %v1797 = vsel %vm1782, %v1764, %v1517
      %v1798 = vsel %vm1782, %v1765, %v1519
      %v1799 = vsel %vm1782, %v1766, %v1521
      %v1800 = vsel %vm1782, %v1767, %v1523
      %v1801 = vsel %vm1782, %v1768, %v1525
      %v1802 = vsel %vm1782, %v1769, %v1527
      %v1803 = vsel %vm1782, %v1770, %v1529
      %v1804 = vsel %vm1782, %v1771, %v1531
      %v1805 = vsel %vm1782, %v1772, %v1533
      %v1806 = vsel %vm1782, %v1773, %v1535
      %v1807 = vsel %vm1782, %v1774, %v1537
      %v1808 = vsel %vm1782, %v1775, %v1539
      %v1809 = vsel %vm1782, %v1776, %v1541
      %v1810 = vsel %vm1782, %v1777, %v1543
      %v1811 = vsel %vm1782, %v1778, %v1545
      %v1812 = vsel %vm1782, %v1779, %v1547
      %v1813 = vsel %vm1782, %v1780, %v1549
      %v1814 = vsel %vm1782, %v1781, %v1551
      %v1815 = vld [vmem:[%s1] sm:$0xff]
      %v1816 = vld [vmem:[%s1 + $0x8] sm:$0xff]
      %v1817 = vld [vmem:[%s1 + $0x10] sm:$0xff]
      %v1818 = vld [vmem:[%s1 + $0x18] sm:$0xff]
      %v1819 = vld [vmem:[%s1 + $0x20] sm:$0xff]
      %v1820 = vld [vmem:[%s1 + $0x28] sm:$0xff]
      %v1821 = vld [vmem:[%s1 + $0x30] sm:$0xff]
      %v1822 = vld [vmem:[%s1 + $0x38] sm:$0xff]
      %v1823 = vld [vmem:[%s1 + $0x40] sm:$0xff]
      %v1824 = vld [vmem:[%s1 + $0x48] sm:$0xff]
      %v1825 = vld [vmem:[%s1 + $0x50] sm:$0xff]
      %v1826 = vld [vmem:[%s1 + $0x58] sm:$0xff]
      %v1827 = vld [vmem:[%s1 + $0x60] sm:$0xff]
      %v1828 = vld [vmem:[%s1 + $0x68] sm:$0xff]
      %v1829 = vld [vmem:[%s1 + $0x70] sm:$0xff]
      %v1830 = vld [vmem:[%s1 + $0x78] sm:$0xff]
      %v1831 = vld [vmem:[%s1 + $0x80] sm:$0xff]
      %v1832 = vld [vmem:[%s1 + $0x88] sm:$0xff]
      %v1833 = vsel %vm1584, %v238, 0
      %v1835 = vsel %vm1584, %v239, 0
      %v1837 = vsel %vm1584, %v241, 0
      %v1839 = vsel %vm1584, %v242, 0
      %v1841 = vsel %vm1584, %v244, 0
      %v1843 = vsel %vm1584, %v245, 0
      %v1845 = vsel %vm1584, %v247, 0
      %v1847 = vsel %vm1584, %v248, 0
      %v1849 = vsel %vm1584, %v250, 0
      %v1851 = vsel %vm1584, %v251, 0
      %v1853 = vsel %vm1584, %v253, 0
      %v1855 = vsel %vm1584, %v254, 0
      %v1857 = vsel %vm1584, %v256, 0
      %v1859 = vsel %vm1584, %v257, 0
      %v1861 = vsel %vm1584, %v259, 0
      %v1863 = vsel %vm1584, %v260, 0
      %v1865 = vsel %vm1584, %v262, 0
      %v1867 = vsel %vm1584, %v263, 0
      %v1869 = vsel %vm1584, %v265, 0
      %v1871 = vsel %vm1584, %v266, 0
      %v1873 = vsel %vm1584, %v268, 0
      %v1875 = vsel %vm1584, %v269, 0
      %v1877 = vsel %vm1584, %v271, 0
      %v1879 = vsel %vm1584, %v272, 0
      %v1881 = vsel %vm1584, %v274, 0
      %v1883 = vsel %vm1584, %v275, 0
      %v1885 = vsel %vm1584, %v277, 0
      %v1887 = vsel %vm1584, %v278, 0
      %v1889 = vsel %vm1584, %v280, 0
      %v1891 = vsel %vm1584, %v281, 0
      %v1893 = vsel %vm1584, %v283, 0
      %v1895 = vsel %vm1584, %v284, 0
      %1897 = vmatprep.subr.mxu0 0.0
      %1898 = vmatpush1.msra.mxu0 %v1830
      %1899 = vmatprep.subr.mxu0 0.0
      %1900 = vmatpush1.msra.mxu0 %v1829
      %1901 = vmatprep.subr.mxu0 0.0
      %1902 = vmatpush1.msra.mxu0 %v1828
      %1903 = vmatprep.subr.mxu0 0.0
      %1904 = vmatpush1.msra.mxu0 %v1827
      %1905 = vmatprep.subr.mxu0 0.0
      %1906 = vmatpush1.msra.mxu0 %v1826
      %1907 = vmatprep.subr.mxu0 0.0
      %1908 = vmatpush1.msra.mxu0 %v1825
      %1909 = vmatprep.subr.mxu0 0.0
      %1910 = vmatpush1.msra.mxu0 %v1824
      %1911 = vmatprep.subr.mxu0 0.0
      %1912 = vmatpush1.msra.mxu0 %v1823
      %1913 = vmatprep.subr.mxu0 0.0
      %1914 = vmatpush1.msra.mxu0 %v1822
      %1915 = vmatprep.subr.mxu0 0.0
      %1916 = vmatpush1.msra.mxu0 %v1821
      %1917 = vmatprep.subr.mxu0 0.0
      %1918 = vmatpush1.msra.mxu0 %v1820
      %1919 = vmatprep.subr.mxu0 0.0
      %1920 = vmatpush1.msra.mxu0 %v1819
      %1921 = vmatprep.subr.mxu0 0.0
      %1922 = vmatpush1.msra.mxu0 %v1818
      %1923 = vmatprep.subr.mxu0 0.0
      %1924 = vmatpush1.msra.mxu0 %v1817
      %1925 = vmatprep.subr.mxu0 0.0
      %1926 = vmatpush1.msra.mxu0 %v1816
      %1927 = vmatprep.subr.mxu0 0.0
      %1928 = vmatpush1.msra.mxu0 %v1815
      %1929 = vmatprep.subr.mxu0 0.0
      %1930 = vmatpush2.msra.mxu0 0.0
      %1931 = vmatprep.subr.mxu0 0.0
      %1932 = vmatpush2.msra.mxu0 0.0
      %1933 = vmatprep.subr.mxu0 0.0
      %1934 = vmatpush2.msra.mxu0 0.0
      %1935 = vmatprep.subr.mxu0 0.0
      %1936 = vmatpush2.msra.mxu0 0.0
      %1937 = vmatprep.subr.mxu0 0.0
      %1938 = vmatpush2.msra.mxu0 0.0
      %1939 = vmatprep.subr.mxu0 0.0
      %1940 = vmatpush2.msra.mxu0 0.0
      %1941 = vmatprep.subr.mxu0 0.0
      %1942 = vmatpush2.msra.mxu0 0.0
      %1943 = vmatprep.subr.mxu0 0.0
      %1944 = vmatpush2.msra.mxu0 0.0
      %1945 = vmatprep.subr.mxu0 0.0
      %1946 = vmatpush2.msra.mxu0 0.0
      %1947 = vmatprep.subr.mxu0 0.0
      %1948 = vmatpush2.msra.mxu0 0.0
      %1949 = vmatprep.subr.mxu0 0.0
      %1950 = vmatpush2.msra.mxu0 0.0
      %1951 = vmatprep.subr.mxu0 0.0
      %1952 = vmatpush2.msra.mxu0 0.0
      %1953 = vmatprep.subr.mxu0 0.0
      %1954 = vmatpush2.msra.mxu0 0.0
      %1955 = vmatprep.subr.mxu0 0.0
      %1956 = vmatpush2.msra.mxu0 0.0
      %1957 = vmatprep.subr.mxu0 0.0
      %1958 = vmatpush2.msra.mxu0 %v1832
      %1959 = vmatprep.subr.mxu0 0.0
      %1960 = vmatpush2.msra.mxu0 %v1831
      %1961 = vmatprep.mubr.f32.mxu0 %v1833
      %1962 = vmatmul.mubr.f32.gmra.mxu0 %v1783
      %v1963 = vpop.f32.mrf.mxu0
      %v1964 = vadd.f32 0.0, %v1963
      %v1965 = vpop.f32.mrf.mxu0
      %1966 = vmatprep.mubr.f32.mxu0 %v1835
      %1967 = vmatmul.mubr.f32.gmra.mxu0 %v1784
      %v1968 = vpop.f32.mrf.mxu0
      %v1969 = vadd.f32 0.0, %v1968
      %v1970 = vpop.f32.mrf.mxu0
      %1971 = vmatprep.mubr.f32.mxu0 %v1837
      %1972 = vmatmul.mubr.f32.gmra.mxu0 %v1785
      %v1973 = vpop.f32.mrf.mxu0
      %v1974 = vadd.f32 0.0, %v1973
      %v1975 = vpop.f32.mrf.mxu0
      %1976 = vmatprep.mubr.f32.mxu0 %v1839
      %1977 = vmatmul.mubr.f32.gmra.mxu0 %v1786
      %v1978 = vpop.f32.mrf.mxu0
      %v1979 = vadd.f32 0.0, %v1978
      %v1980 = vpop.f32.mrf.mxu0
      %1981 = vmatprep.mubr.f32.mxu0 %v1841
      %1982 = vmatmul.mubr.f32.gmra.mxu0 %v1787
      %v1983 = vpop.f32.mrf.mxu0
      %v1984 = vadd.f32 0.0, %v1983
      %v1985 = vpop.f32.mrf.mxu0
      %1986 = vmatprep.mubr.f32.mxu0 %v1843
      %1987 = vmatmul.mubr.f32.gmra.mxu0 %v1788
      %v1988 = vpop.f32.mrf.mxu0
      %v1989 = vadd.f32 0.0, %v1988
      %v1990 = vpop.f32.mrf.mxu0
      %1991 = vmatprep.mubr.f32.mxu0 %v1845
      %1992 = vmatmul.mubr.f32.gmra.mxu0 %v1789
      %v1993 = vpop.f32.mrf.mxu0
      %v1994 = vadd.f32 0.0, %v1993
      %v1995 = vpop.f32.mrf.mxu0
      %1996 = vmatprep.mubr.f32.mxu0 %v1847
      %1997 = vmatmul.mubr.f32.gmra.mxu0 %v1790
      %v1998 = vpop.f32.mrf.mxu0
      %v1999 = vadd.f32 0.0, %v1998
      %v2000 = vpop.f32.mrf.mxu0
      %2001 = vmatprep.mubr.f32.mxu0 %v1849
      %2002 = vmatmul.mubr.f32.gmra.mxu0 %v1791
      %v2003 = vpop.f32.mrf.mxu0
      %v2004 = vadd.f32 0.0, %v2003
      %v2005 = vpop.f32.mrf.mxu0
      %2006 = vmatprep.mubr.f32.mxu0 %v1851
      %2007 = vmatmul.mubr.f32.gmra.mxu0 %v1792
      %v2008 = vpop.f32.mrf.mxu0
      %v2009 = vadd.f32 0.0, %v2008
      %v2010 = vpop.f32.mrf.mxu0
      %2011 = vmatprep.mubr.f32.mxu0 %v1853
      %2012 = vmatmul.mubr.f32.gmra.mxu0 %v1793
      %v2013 = vpop.f32.mrf.mxu0
      %v2014 = vadd.f32 0.0, %v2013
      %v2015 = vpop.f32.mrf.mxu0
      %2016 = vmatprep.mubr.f32.mxu0 %v1855
      %2017 = vmatmul.mubr.f32.gmra.mxu0 %v1794
      %v2018 = vpop.f32.mrf.mxu0
      %v2019 = vadd.f32 0.0, %v2018
      %v2020 = vpop.f32.mrf.mxu0
      %2021 = vmatprep.mubr.f32.mxu0 %v1857
      %2022 = vmatmul.mubr.f32.gmra.mxu0 %v1795
      %v2023 = vpop.f32.mrf.mxu0
      %v2024 = vadd.f32 0.0, %v2023
      %v2025 = vpop.f32.mrf.mxu0
      %2026 = vmatprep.mubr.f32.mxu0 %v1859
      %2027 = vmatmul.mubr.f32.gmra.mxu0 %v1796
      %v2028 = vpop.f32.mrf.mxu0
      %v2029 = vadd.f32 0.0, %v2028
      %v2030 = vpop.f32.mrf.mxu0
      %2031 = vmatprep.mubr.f32.mxu0 %v1861
      %2032 = vmatmul.mubr.f32.gmra.mxu0 %v1797
      %v2033 = vpop.f32.mrf.mxu0
      %v2034 = vadd.f32 0.0, %v2033
      %v2035 = vpop.f32.mrf.mxu0
      %2036 = vmatprep.mubr.f32.mxu0 %v1863
      %2037 = vmatmul.mubr.f32.gmra.mxu0 %v1798
      %v2038 = vpop.f32.mrf.mxu0
      %v2039 = vadd.f32 0.0, %v2038
      %v2040 = vpop.f32.mrf.mxu0
      %2041 = vmatprep.mubr.f32.mxu0 %v1865
      %2042 = vmatmul.mubr.f32.gmra.mxu0 %v1799
      %v2043 = vpop.f32.mrf.mxu0
      %v2044 = vadd.f32 0.0, %v2043
      %v2045 = vpop.f32.mrf.mxu0
      %2046 = vmatprep.mubr.f32.mxu0 %v1867
      %2047 = vmatmul.mubr.f32.gmra.mxu0 %v1800
      %v2048 = vpop.f32.mrf.mxu0
      %v2049 = vadd.f32 0.0, %v2048
      %v2050 = vpop.f32.mrf.mxu0
      %2051 = vmatprep.mubr.f32.mxu0 %v1869
      %2052 = vmatmul.mubr.f32.gmra.mxu0 %v1801
      %v2053 = vpop.f32.mrf.mxu0
      %v2054 = vadd.f32 0.0, %v2053
      %v2055 = vpop.f32.mrf.mxu0
      %2056 = vmatprep.mubr.f32.mxu0 %v1871
      %2057 = vmatmul.mubr.f32.gmra.mxu0 %v1802
      %v2058 = vpop.f32.mrf.mxu0
      %v2059 = vadd.f32 0.0, %v2058
      %v2060 = vpop.f32.mrf.mxu0
      %2061 = vmatprep.mubr.f32.mxu0 %v1873
      %2062 = vmatmul.mubr.f32.gmra.mxu0 %v1803
      %v2063 = vpop.f32.mrf.mxu0
      %v2064 = vadd.f32 0.0, %v2063
      %v2065 = vpop.f32.mrf.mxu0
      %2066 = vmatprep.mubr.f32.mxu0 %v1875
      %2067 = vmatmul.mubr.f32.gmra.mxu0 %v1804
      %v2068 = vpop.f32.mrf.mxu0
      %v2069 = vadd.f32 0.0, %v2068
      %v2070 = vpop.f32.mrf.mxu0
      %2071 = vmatprep.mubr.f32.mxu0 %v1877
      %2072 = vmatmul.mubr.f32.gmra.mxu0 %v1805
      %v2073 = vpop.f32.mrf.mxu0
      %v2074 = vadd.f32 0.0, %v2073
      %v2075 = vpop.f32.mrf.mxu0
      %2076 = vmatprep.mubr.f32.mxu0 %v1879
      %2077 = vmatmul.mubr.f32.gmra.mxu0 %v1806
      %v2078 = vpop.f32.mrf.mxu0
      %v2079 = vadd.f32 0.0, %v2078
      %v2080 = vpop.f32.mrf.mxu0
      %2081 = vmatprep.mubr.f32.mxu0 %v1881
      %2082 = vmatmul.mubr.f32.gmra.mxu0 %v1807
      %v2083 = vpop.f32.mrf.mxu0
      %v2084 = vadd.f32 0.0, %v2083
      %v2085 = vpop.f32.mrf.mxu0
      %2086 = vmatprep.mubr.f32.mxu0 %v1883
      %2087 = vmatmul.mubr.f32.gmra.mxu0 %v1808
      %v2088 = vpop.f32.mrf.mxu0
      %v2089 = vadd.f32 0.0, %v2088
      %v2090 = vpop.f32.mrf.mxu0
      %2091 = vmatprep.mubr.f32.mxu0 %v1885
      %2092 = vmatmul.mubr.f32.gmra.mxu0 %v1809
      %v2093 = vpop.f32.mrf.mxu0
      %v2094 = vadd.f32 0.0, %v2093
      %v2095 = vpop.f32.mrf.mxu0
      %2096 = vmatprep.mubr.f32.mxu0 %v1887
      %2097 = vmatmul.mubr.f32.gmra.mxu0 %v1810
      %v2098 = vpop.f32.mrf.mxu0
      %v2099 = vadd.f32 0.0, %v2098
      %v2100 = vpop.f32.mrf.mxu0
      %2101 = vmatprep.mubr.f32.mxu0 %v1889
      %2102 = vmatmul.mubr.f32.gmra.mxu0 %v1811
      %v2103 = vpop.f32.mrf.mxu0
      %v2104 = vadd.f32 0.0, %v2103
      %v2105 = vpop.f32.mrf.mxu0
      %2106 = vmatprep.mubr.f32.mxu0 %v1891
      %2107 = vmatmul.mubr.f32.gmra.mxu0 %v1812
      %v2108 = vpop.f32.mrf.mxu0
      %v2109 = vadd.f32 0.0, %v2108
      %v2110 = vpop.f32.mrf.mxu0
      %2111 = vmatprep.mubr.f32.mxu0 %v1893
      %2112 = vmatmul.mubr.f32.gmra.mxu0 %v1813
      %v2113 = vpop.f32.mrf.mxu0
      %v2114 = vadd.f32 0.0, %v2113
      %v2115 = vpop.f32.mrf.mxu0
      %2116 = vmatprep.mubr.f32.mxu0 %v1895
      %2117 = vmatmul.mubr.f32.gmra.mxu0 %v1814
      %v2118 = vpop.f32.mrf.mxu0
      %v2119 = vadd.f32 0.0, %v2118
      %v2120 = vpop.f32.mrf.mxu0
      %2121 = vdwg.mxu0
      %v2134 = vrot.slane %v225, 4
      %v2135 = vrot.slane %v226, 4
      %v2136 = vsel %vm588, %v2134, %v2135
      %v2137 = vrot.slane %v227, 4
      %v2138 = vsel %vm588, %v2135, %v2137
      %v2139 = vrot.slane %v228, 4
      %v2140 = vrot.slane %v229, 4
      %v2141 = vsel %vm588, %v2139, %v2140
      %v2142 = vrot.slane %v230, 4
      %v2143 = vsel %vm588, %v2140, %v2142
      %v2144 = vrot.slane %v231, 4
      %v2145 = vrot.slane %v232, 4
      %v2146 = vsel %vm588, %v2144, %v2145
      %v2147 = vrot.slane %v233, 4
      %v2148 = vsel %vm588, %v2145, %v2147
      %v2149 = vrot.slane %v234, 4
      %v2150 = vrot.slane %v235, 4
      %v2151 = vsel %vm588, %v2149, %v2150
      %v2152 = vrot.slane %v236, 4
      %v2153 = vsel %vm588, %v2150, %v2152
      %v2189 = vrot.slane %v285, 4
      %v2190 = vrot.slane %v286, 4
      %v2191 = vsel %vm588, %v2189, %v2190
      %v2192 = vrot.slane %v287, 4
      %v2193 = vsel %vm588, %v2190, %v2192
      %v2197 = vrot.slane %v288, 4
      %v2198 = vrot.slane %v289, 4
      %v2199 = vsel %vm588, %v2197, %v2198
      %v2200 = vrot.slane %v290, 4
      %v2201 = vsel %vm588, %v2198, %v2200
      %v2205 = vrot.slane %v291, 4
      %v2206 = vrot.slane %v292, 4
      %v2207 = vsel %vm588, %v2205, %v2206
      %v2208 = vrot.slane %v293, 4
      %v2209 = vsel %vm588, %v2206, %v2208
      %v2213 = vrot.slane %v294, 4
      %v2214 = vrot.slane %v295, 4
      %v2215 = vsel %vm588, %v2213, %v2214
      %v2216 = vrot.slane %v296, 4
      %v2217 = vsel %vm588, %v2214, %v2216
      %2218 = vrot.lane.b32.xlu0 %v2141, 16
      %v2219 = vpop.permute.xlu0 %2218
      %2220 = vrot.lane.b32.xlu0 %v2143, 16
      %v2221 = vpop.permute.xlu0 %2220
      %2222 = vrot.lane.b32.xlu0 %v2146, 16
      %v2223 = vpop.permute.xlu0 %2222
      %2224 = vrot.lane.b32.xlu0 %v2148, 16
      %v2225 = vpop.permute.xlu0 %2224
      %2226 = vrot.lane.b32.xlu0 %v2151, 16
      %v2227 = vpop.permute.xlu0 %2226
      %2228 = vrot.lane.b32.xlu0 %v2153, 16
      %v2229 = vpop.permute.xlu0 %2228
      %2230 = vrot.lane.b32.xlu0 %v591, 16
      %v2231 = vpop.permute.xlu0 %2230
      %2232 = vrot.lane.b32.xlu0 %v593, 16
      %v2233 = vpop.permute.xlu0 %2232
      %2234 = vrot.lane.b32.xlu0 %v596, 16
      %v2235 = vpop.permute.xlu0 %2234
      %2236 = vrot.lane.b32.xlu0 %v598, 16
      %v2237 = vpop.permute.xlu0 %2236
      %2238 = vrot.lane.b32.xlu0 %v601, 16
      %v2239 = vpop.permute.xlu0 %2238
      %2240 = vrot.lane.b32.xlu0 %v603, 16
      %v2241 = vpop.permute.xlu0 %2240
      %2242 = vrot.lane.b32.xlu0 %v606, 16
      %v2243 = vpop.permute.xlu0 %2242
      %2244 = vrot.lane.b32.xlu0 %v608, 16
      %v2245 = vpop.permute.xlu0 %2244
      %2246 = vrot.lane.b32.xlu0 %v611, 16
      %v2247 = vpop.permute.xlu0 %2246
      %2248 = vrot.lane.b32.xlu0 %v613, 16
      %v2249 = vpop.permute.xlu0 %2248
      %2250 = vrot.lane.b32.xlu0 %v616, 16
      %v2251 = vpop.permute.xlu0 %2250
      %2252 = vrot.lane.b32.xlu0 %v618, 16
      %v2253 = vpop.permute.xlu0 %2252
      %2254 = vrot.lane.b32.xlu0 %v621, 16
      %v2255 = vpop.permute.xlu0 %2254
      %2256 = vrot.lane.b32.xlu0 %v623, 16
      %v2257 = vpop.permute.xlu0 %2256
      %2258 = vrot.lane.b32.xlu0 %v626, 16
      %v2259 = vpop.permute.xlu0 %2258
      %2260 = vrot.lane.b32.xlu0 %v628, 16
      %v2261 = vpop.permute.xlu0 %2260
      %2262 = vrot.lane.b32.xlu0 %v631, 16
      %v2263 = vpop.permute.xlu0 %2262
      %2264 = vrot.lane.b32.xlu0 %v633, 16
      %v2265 = vpop.permute.xlu0 %2264
      %2266 = vrot.lane.b32.xlu0 %v636, 16
      %v2267 = vpop.permute.xlu0 %2266
      %2268 = vrot.lane.b32.xlu0 %v638, 16
      %v2269 = vpop.permute.xlu0 %2268
      %2270 = vrot.lane.b32.xlu0 %v641, 16
      %v2271 = vpop.permute.xlu0 %2270
      %2272 = vrot.lane.b32.xlu0 %v643, 16
      %v2273 = vpop.permute.xlu0 %2272
      %2274 = vrot.lane.b32.xlu0 %v646, 16
      %v2275 = vpop.permute.xlu0 %2274
      %2276 = vrot.lane.b32.xlu0 %v648, 16
      %v2277 = vpop.permute.xlu0 %2276
      %2278 = vrot.lane.b32.xlu0 %v651, 16
      %v2279 = vpop.permute.xlu0 %2278
      %2280 = vrot.lane.b32.xlu0 %v653, 16
      %v2281 = vpop.permute.xlu0 %2280
      %2314 = vrot.lane.b32.xlu0 %v2146, 32
      %v2315 = vpop.permute.xlu0 %2314
      %2316 = vrot.lane.b32.xlu0 %v2148, 32
      %v2317 = vpop.permute.xlu0 %2316
      %2318 = vrot.lane.b32.xlu0 %v2151, 32
      %v2319 = vpop.permute.xlu0 %2318
      %2320 = vrot.lane.b32.xlu0 %v2153, 32
      %v2321 = vpop.permute.xlu0 %2320
      %2322 = vrot.lane.b32.xlu0 %v591, 32
      %v2323 = vpop.permute.xlu0 %2322
      %2324 = vrot.lane.b32.xlu0 %v593, 32
      %v2325 = vpop.permute.xlu0 %2324
      %2326 = vrot.lane.b32.xlu0 %v596, 32
      %v2327 = vpop.permute.xlu0 %2326
      %2328 = vrot.lane.b32.xlu0 %v598, 32
      %v2329 = vpop.permute.xlu0 %2328
      %2330 = vrot.lane.b32.xlu0 %v601, 32
      %v2331 = vpop.permute.xlu0 %2330
      %2332 = vrot.lane.b32.xlu0 %v603, 32
      %v2333 = vpop.permute.xlu0 %2332
      %2334 = vrot.lane.b32.xlu0 %v606, 32
      %v2335 = vpop.permute.xlu0 %2334
      %2336 = vrot.lane.b32.xlu0 %v608, 32
      %v2337 = vpop.permute.xlu0 %2336
      %2338 = vrot.lane.b32.xlu0 %v611, 32
      %v2339 = vpop.permute.xlu0 %2338
      %2340 = vrot.lane.b32.xlu0 %v613, 32
      %v2341 = vpop.permute.xlu0 %2340
      %2342 = vrot.lane.b32.xlu0 %v616, 32
      %v2343 = vpop.permute.xlu0 %2342
      %2344 = vrot.lane.b32.xlu0 %v618, 32
      %v2345 = vpop.permute.xlu0 %2344
      %2346 = vrot.lane.b32.xlu0 %v621, 32
      %v2347 = vpop.permute.xlu0 %2346
      %2348 = vrot.lane.b32.xlu0 %v623, 32
      %v2349 = vpop.permute.xlu0 %2348
      %2350 = vrot.lane.b32.xlu0 %v626, 32
      %v2351 = vpop.permute.xlu0 %2350
      %2352 = vrot.lane.b32.xlu0 %v628, 32
      %v2353 = vpop.permute.xlu0 %2352
      %2354 = vrot.lane.b32.xlu0 %v631, 32
      %v2355 = vpop.permute.xlu0 %2354
      %2356 = vrot.lane.b32.xlu0 %v633, 32
      %v2357 = vpop.permute.xlu0 %2356
      %2358 = vrot.lane.b32.xlu0 %v636, 32
      %v2359 = vpop.permute.xlu0 %2358
      %2360 = vrot.lane.b32.xlu0 %v638, 32
      %v2361 = vpop.permute.xlu0 %2360
      %2362 = vrot.lane.b32.xlu0 %v641, 32
      %v2363 = vpop.permute.xlu0 %2362
      %2364 = vrot.lane.b32.xlu0 %v643, 32
      %v2365 = vpop.permute.xlu0 %2364
      %2366 = vrot.lane.b32.xlu0 %v646, 32
      %v2367 = vpop.permute.xlu0 %2366
      %2368 = vrot.lane.b32.xlu0 %v648, 32
      %v2369 = vpop.permute.xlu0 %2368
      %2370 = vrot.lane.b32.xlu0 %v651, 32
      %v2371 = vpop.permute.xlu0 %2370
      %2372 = vrot.lane.b32.xlu0 %v653, 32
      %v2373 = vpop.permute.xlu0 %2372
      %2374 = vrot.lane.b32.xlu0 %v656, 32
      %v2375 = vpop.permute.xlu0 %2374
      %2376 = vrot.lane.b32.xlu0 %v658, 32
      %v2377 = vpop.permute.xlu0 %2376
      %2410 = vrot.lane.b32.xlu0 %v2151, 48
      %v2411 = vpop.permute.xlu0 %2410
      %2412 = vrot.lane.b32.xlu0 %v2153, 48
      %v2413 = vpop.permute.xlu0 %2412
      %2414 = vrot.lane.b32.xlu0 %v591, 48
      %v2415 = vpop.permute.xlu0 %2414
      %2416 = vrot.lane.b32.xlu0 %v593, 48
      %v2417 = vpop.permute.xlu0 %2416
      %2418 = vrot.lane.b32.xlu0 %v596, 48
      %v2419 = vpop.permute.xlu0 %2418
      %2420 = vrot.lane.b32.xlu0 %v598, 48
      %v2421 = vpop.permute.xlu0 %2420
      %2422 = vrot.lane.b32.xlu0 %v601, 48
      %v2423 = vpop.permute.xlu0 %2422
      %2424 = vrot.lane.b32.xlu0 %v603, 48
      %v2425 = vpop.permute.xlu0 %2424
      %2426 = vrot.lane.b32.xlu0 %v606, 48
      %v2427 = vpop.permute.xlu0 %2426
      %2428 = vrot.lane.b32.xlu0 %v608, 48
      %v2429 = vpop.permute.xlu0 %2428
      %2430 = vrot.lane.b32.xlu0 %v611, 48
      %v2431 = vpop.permute.xlu0 %2430
      %2432 = vrot.lane.b32.xlu0 %v613, 48
      %v2433 = vpop.permute.xlu0 %2432
      %2434 = vrot.lane.b32.xlu0 %v616, 48
      %v2435 = vpop.permute.xlu0 %2434
      %2436 = vrot.lane.b32.xlu0 %v618, 48
      %v2437 = vpop.permute.xlu0 %2436
      %2438 = vrot.lane.b32.xlu0 %v621, 48
      %v2439 = vpop.permute.xlu0 %2438
      %2440 = vrot.lane.b32.xlu0 %v623, 48
      %v2441 = vpop.permute.xlu0 %2440
      %2442 = vrot.lane.b32.xlu0 %v626, 48
      %v2443 = vpop.permute.xlu0 %2442
      %2444 = vrot.lane.b32.xlu0 %v628, 48
      %v2445 = vpop.permute.xlu0 %2444
      %2446 = vrot.lane.b32.xlu0 %v631, 48
      %v2447 = vpop.permute.xlu0 %2446
      %2448 = vrot.lane.b32.xlu0 %v633, 48
      %v2449 = vpop.permute.xlu0 %2448
      %2450 = vrot.lane.b32.xlu0 %v636, 48
      %v2451 = vpop.permute.xlu0 %2450
      %2452 = vrot.lane.b32.xlu0 %v638, 48
      %v2453 = vpop.permute.xlu0 %2452
      %2454 = vrot.lane.b32.xlu0 %v641, 48
      %v2455 = vpop.permute.xlu0 %2454
      %2456 = vrot.lane.b32.xlu0 %v643, 48
      %v2457 = vpop.permute.xlu0 %2456
      %2458 = vrot.lane.b32.xlu0 %v646, 48
      %v2459 = vpop.permute.xlu0 %2458
      %2460 = vrot.lane.b32.xlu0 %v648, 48
      %v2461 = vpop.permute.xlu0 %2460
      %2462 = vrot.lane.b32.xlu0 %v651, 48
      %v2463 = vpop.permute.xlu0 %2462
      %2464 = vrot.lane.b32.xlu0 %v653, 48
      %v2465 = vpop.permute.xlu0 %2464
      %2466 = vrot.lane.b32.xlu0 %v656, 48
      %v2467 = vpop.permute.xlu0 %2466
      %2468 = vrot.lane.b32.xlu0 %v658, 48
      %v2469 = vpop.permute.xlu0 %2468
      %2470 = vrot.lane.b32.xlu0 %v661, 48
      %v2471 = vpop.permute.xlu0 %2470
      %2472 = vrot.lane.b32.xlu0 %v663, 48
      %v2473 = vpop.permute.xlu0 %2472
      %2506 = vrot.lane.b32.xlu0 %v596, 80
      %v2507 = vpop.permute.xlu0 %2506
      %2508 = vrot.lane.b32.xlu0 %v598, 80
      %v2509 = vpop.permute.xlu0 %2508
      %2510 = vrot.lane.b32.xlu0 %v601, 80
      %v2511 = vpop.permute.xlu0 %2510
      %2512 = vrot.lane.b32.xlu0 %v603, 80
      %v2513 = vpop.permute.xlu0 %2512
      %2514 = vrot.lane.b32.xlu0 %v606, 80
      %v2515 = vpop.permute.xlu0 %2514
      %2516 = vrot.lane.b32.xlu0 %v608, 80
      %v2517 = vpop.permute.xlu0 %2516
      %2518 = vrot.lane.b32.xlu0 %v611, 80
      %v2519 = vpop.permute.xlu0 %2518
      %2520 = vrot.lane.b32.xlu0 %v613, 80
      %v2521 = vpop.permute.xlu0 %2520
      %2522 = vrot.lane.b32.xlu0 %v616, 80
      %v2523 = vpop.permute.xlu0 %2522
      %2524 = vrot.lane.b32.xlu0 %v618, 80
      %v2525 = vpop.permute.xlu0 %2524
      %2526 = vrot.lane.b32.xlu0 %v621, 80
      %v2527 = vpop.permute.xlu0 %2526
      %2528 = vrot.lane.b32.xlu0 %v623, 80
      %v2529 = vpop.permute.xlu0 %2528
      %2530 = vrot.lane.b32.xlu0 %v626, 80
      %v2531 = vpop.permute.xlu0 %2530
      %2532 = vrot.lane.b32.xlu0 %v628, 80
      %v2533 = vpop.permute.xlu0 %2532
      %2534 = vrot.lane.b32.xlu0 %v631, 80
      %v2535 = vpop.permute.xlu0 %2534
      %2536 = vrot.lane.b32.xlu0 %v633, 80
      %v2537 = vpop.permute.xlu0 %2536
      %2538 = vrot.lane.b32.xlu0 %v636, 80
      %v2539 = vpop.permute.xlu0 %2538
      %2540 = vrot.lane.b32.xlu0 %v638, 80
      %v2541 = vpop.permute.xlu0 %2540
      %2542 = vrot.lane.b32.xlu0 %v641, 80
      %v2543 = vpop.permute.xlu0 %2542
      %2544 = vrot.lane.b32.xlu0 %v643, 80
      %v2545 = vpop.permute.xlu0 %2544
      %2546 = vrot.lane.b32.xlu0 %v646, 80
      %v2547 = vpop.permute.xlu0 %2546
      %2548 = vrot.lane.b32.xlu0 %v648, 80
      %v2549 = vpop.permute.xlu0 %2548
      %2550 = vrot.lane.b32.xlu0 %v651, 80
      %v2551 = vpop.permute.xlu0 %2550
      %2552 = vrot.lane.b32.xlu0 %v653, 80
      %v2553 = vpop.permute.xlu0 %2552
      %2554 = vrot.lane.b32.xlu0 %v656, 80
      %v2555 = vpop.permute.xlu0 %2554
      %2556 = vrot.lane.b32.xlu0 %v658, 80
      %v2557 = vpop.permute.xlu0 %2556
      %2558 = vrot.lane.b32.xlu0 %v661, 80
      %v2559 = vpop.permute.xlu0 %2558
      %2560 = vrot.lane.b32.xlu0 %v663, 80
      %v2561 = vpop.permute.xlu0 %2560
      %2562 = vrot.lane.b32.xlu0 %v666, 80
      %v2563 = vpop.permute.xlu0 %2562
      %2564 = vrot.lane.b32.xlu0 %v668, 80
      %v2565 = vpop.permute.xlu0 %2564
      %2566 = vrot.lane.b32.xlu0 %v2191, 80
      %v2567 = vpop.permute.xlu0 %2566
      %2568 = vrot.lane.b32.xlu0 %v2193, 80
      %v2569 = vpop.permute.xlu0 %2568
      %2602 = vrot.lane.b32.xlu0 %v601, 96
      %v2603 = vpop.permute.xlu0 %2602
      %2604 = vrot.lane.b32.xlu0 %v603, 96
      %v2605 = vpop.permute.xlu0 %2604
      %2606 = vrot.lane.b32.xlu0 %v606, 96
      %v2607 = vpop.permute.xlu0 %2606
      %2608 = vrot.lane.b32.xlu0 %v608, 96
      %v2609 = vpop.permute.xlu0 %2608
      %2610 = vrot.lane.b32.xlu0 %v611, 96
      %v2611 = vpop.permute.xlu0 %2610
      %2612 = vrot.lane.b32.xlu0 %v613, 96
      %v2613 = vpop.permute.xlu0 %2612
      %2614 = vrot.lane.b32.xlu0 %v616, 96
      %v2615 = vpop.permute.xlu0 %2614
      %2616 = vrot.lane.b32.xlu0 %v618, 96
      %v2617 = vpop.permute.xlu0 %2616
      %2618 = vrot.lane.b32.xlu0 %v621, 96
      %v2619 = vpop.permute.xlu0 %2618
      %2620 = vrot.lane.b32.xlu0 %v623, 96
      %v2621 = vpop.permute.xlu0 %2620
      %2622 = vrot.lane.b32.xlu0 %v626, 96
      %v2623 = vpop.permute.xlu0 %2622
      %2624 = vrot.lane.b32.xlu0 %v628, 96
      %v2625 = vpop.permute.xlu0 %2624
      %2626 = vrot.lane.b32.xlu0 %v631, 96
      %v2627 = vpop.permute.xlu0 %2626
      %2628 = vrot.lane.b32.xlu0 %v633, 96
      %v2629 = vpop.permute.xlu0 %2628
      %2630 = vrot.lane.b32.xlu0 %v636, 96
      %v2631 = vpop.permute.xlu0 %2630
      %2632 = vrot.lane.b32.xlu0 %v638, 96
      %v2633 = vpop.permute.xlu0 %2632
      %2634 = vrot.lane.b32.xlu0 %v641, 96
      %v2635 = vpop.permute.xlu0 %2634
      %2636 = vrot.lane.b32.xlu0 %v643, 96
      %v2637 = vpop.permute.xlu0 %2636
      %2638 = vrot.lane.b32.xlu0 %v646, 96
      %v2639 = vpop.permute.xlu0 %2638
      %2640 = vrot.lane.b32.xlu0 %v648, 96
      %v2641 = vpop.permute.xlu0 %2640
      %2642 = vrot.lane.b32.xlu0 %v651, 96
      %v2643 = vpop.permute.xlu0 %2642
      %2644 = vrot.lane.b32.xlu0 %v653, 96
      %v2645 = vpop.permute.xlu0 %2644
      %2646 = vrot.lane.b32.xlu0 %v656, 96
      %v2647 = vpop.permute.xlu0 %2646
      %2648 = vrot.lane.b32.xlu0 %v658, 96
      %v2649 = vpop.permute.xlu0 %2648
      %2650 = vrot.lane.b32.xlu0 %v661, 96
      %v2651 = vpop.permute.xlu0 %2650
      %2652 = vrot.lane.b32.xlu0 %v663, 96
      %v2653 = vpop.permute.xlu0 %2652
      %2654 = vrot.lane.b32.xlu0 %v666, 96
      %v2655 = vpop.permute.xlu0 %2654
      %2656 = vrot.lane.b32.xlu0 %v668, 96
      %v2657 = vpop.permute.xlu0 %2656
      %2658 = vrot.lane.b32.xlu0 %v2191, 96
      %v2659 = vpop.permute.xlu0 %2658
      %2660 = vrot.lane.b32.xlu0 %v2193, 96
      %v2661 = vpop.permute.xlu0 %2660
      %2662 = vrot.lane.b32.xlu0 %v2199, 96
      %v2663 = vpop.permute.xlu0 %2662
      %2664 = vrot.lane.b32.xlu0 %v2201, 96
      %v2665 = vpop.permute.xlu0 %2664
      %2698 = vrot.lane.b32.xlu0 %v606, 112
      %v2699 = vpop.permute.xlu0 %2698
      %2700 = vrot.lane.b32.xlu0 %v608, 112
      %v2701 = vpop.permute.xlu0 %2700
      %2702 = vrot.lane.b32.xlu0 %v611, 112
      %v2703 = vpop.permute.xlu0 %2702
      %2704 = vrot.lane.b32.xlu0 %v613, 112
      %v2705 = vpop.permute.xlu0 %2704
      %2706 = vrot.lane.b32.xlu0 %v616, 112
      %v2707 = vpop.permute.xlu0 %2706
      %2708 = vrot.lane.b32.xlu0 %v618, 112
      %v2709 = vpop.permute.xlu0 %2708
      %2710 = vrot.lane.b32.xlu0 %v621, 112
      %v2711 = vpop.permute.xlu0 %2710
      %2712 = vrot.lane.b32.xlu0 %v623, 112
      %v2713 = vpop.permute.xlu0 %2712
      %2714 = vrot.lane.b32.xlu0 %v626, 112
      %v2715 = vpop.permute.xlu0 %2714
      %2716 = vrot.lane.b32.xlu0 %v628, 112
      %v2717 = vpop.permute.xlu0 %2716
      %2718 = vrot.lane.b32.xlu0 %v631, 112
      %v2719 = vpop.permute.xlu0 %2718
      %2720 = vrot.lane.b32.xlu0 %v633, 112
      %v2721 = vpop.permute.xlu0 %2720
      %2722 = vrot.lane.b32.xlu0 %v636, 112
      %v2723 = vpop.permute.xlu0 %2722
      %2724 = vrot.lane.b32.xlu0 %v638, 112
      %v2725 = vpop.permute.xlu0 %2724
      %2726 = vrot.lane.b32.xlu0 %v641, 112
      %v2727 = vpop.permute.xlu0 %2726
      %2728 = vrot.lane.b32.xlu0 %v643, 112
      %v2729 = vpop.permute.xlu0 %2728
      %2730 = vrot.lane.b32.xlu0 %v646, 112
      %v2731 = vpop.permute.xlu0 %2730
      %2732 = vrot.lane.b32.xlu0 %v648, 112
      %v2733 = vpop.permute.xlu0 %2732
      %2734 = vrot.lane.b32.xlu0 %v651, 112
      %v2735 = vpop.permute.xlu0 %2734
      %2736 = vrot.lane.b32.xlu0 %v653, 112
      %v2737 = vpop.permute.xlu0 %2736
      %2738 = vrot.lane.b32.xlu0 %v656, 112
      %v2739 = vpop.permute.xlu0 %2738
      %2740 = vrot.lane.b32.xlu0 %v658, 112
      %v2741 = vpop.permute.xlu0 %2740
      %2742 = vrot.lane.b32.xlu0 %v661, 112
      %v2743 = vpop.permute.xlu0 %2742
      %2744 = vrot.lane.b32.xlu0 %v663, 112
      %v2745 = vpop.permute.xlu0 %2744
      %2746 = vrot.lane.b32.xlu0 %v666, 112
      %v2747 = vpop.permute.xlu0 %2746
      %2748 = vrot.lane.b32.xlu0 %v668, 112
      %v2749 = vpop.permute.xlu0 %2748
      %2750 = vrot.lane.b32.xlu0 %v2191, 112
      %v2751 = vpop.permute.xlu0 %2750
      %2752 = vrot.lane.b32.xlu0 %v2193, 112
      %v2753 = vpop.permute.xlu0 %2752
      %2754 = vrot.lane.b32.xlu0 %v2199, 112
      %v2755 = vpop.permute.xlu0 %2754
      %2756 = vrot.lane.b32.xlu0 %v2201, 112
      %v2757 = vpop.permute.xlu0 %2756
      %2758 = vrot.lane.b32.xlu0 %v2207, 112
      %v2759 = vpop.permute.xlu0 %2758
      %2760 = vrot.lane.b32.xlu0 %v2209, 112
      %v2761 = vpop.permute.xlu0 %2760
      %v2794 = vsel %vm1584, %v2136, %v2219
      %v2795 = vsel %vm1584, %v2138, %v2221
      %v2796 = vsel %vm1584, %v2141, %v2223
      %v2797 = vsel %vm1584, %v2143, %v2225
      %v2798 = vsel %vm1584, %v2146, %v2227
      %v2799 = vsel %vm1584, %v2148, %v2229
      %v2800 = vsel %vm1584, %v2151, %v2231
      %v2801 = vsel %vm1584, %v2153, %v2233
      %v2802 = vsel %vm1584, %v591, %v2235
      %v2803 = vsel %vm1584, %v593, %v2237
      %v2804 = vsel %vm1584, %v596, %v2239
      %v2805 = vsel %vm1584, %v598, %v2241
      %v2806 = vsel %vm1584, %v601, %v2243
      %v2807 = vsel %vm1584, %v603, %v2245
      %v2808 = vsel %vm1584, %v606, %v2247
      %v2809 = vsel %vm1584, %v608, %v2249
      %v2810 = vsel %vm1584, %v611, %v2251
      %v2811 = vsel %vm1584, %v613, %v2253
      %v2812 = vsel %vm1584, %v616, %v2255
      %v2813 = vsel %vm1584, %v618, %v2257
      %v2814 = vsel %vm1584, %v621, %v2259
      %v2815 = vsel %vm1584, %v623, %v2261
      %v2816 = vsel %vm1584, %v626, %v2263
      %v2817 = vsel %vm1584, %v628, %v2265
      %v2818 = vsel %vm1584, %v631, %v2267
      %v2819 = vsel %vm1584, %v633, %v2269
      %v2820 = vsel %vm1584, %v636, %v2271
      %v2821 = vsel %vm1584, %v638, %v2273
      %v2822 = vsel %vm1584, %v641, %v2275
      %v2823 = vsel %vm1584, %v643, %v2277
      %v2824 = vsel %vm1584, %v646, %v2279
      %v2825 = vsel %vm1584, %v648, %v2281
      %v2826 = vsel %vm1617, %v2794, %v2315
      %v2827 = vsel %vm1617, %v2795, %v2317
      %v2828 = vsel %vm1617, %v2796, %v2319
      %v2829 = vsel %vm1617, %v2797, %v2321
      %v2830 = vsel %vm1617, %v2798, %v2323
      %v2831 = vsel %vm1617, %v2799, %v2325
      %v2832 = vsel %vm1617, %v2800, %v2327
      %v2833 = vsel %vm1617, %v2801, %v2329
      %v2834 = vsel %vm1617, %v2802, %v2331
      %v2835 = vsel %vm1617, %v2803, %v2333
      %v2836 = vsel %vm1617, %v2804, %v2335
      %v2837 = vsel %vm1617, %v2805, %v2337
      %v2838 = vsel %vm1617, %v2806, %v2339
      %v2839 = vsel %vm1617, %v2807, %v2341
      %v2840 = vsel %vm1617, %v2808, %v2343
      %v2841 = vsel %vm1617, %v2809, %v2345
      %v2842 = vsel %vm1617, %v2810, %v2347
      %v2843 = vsel %vm1617, %v2811, %v2349
      %v2844 = vsel %vm1617, %v2812, %v2351
      %v2845 = vsel %vm1617, %v2813, %v2353
      %v2846 = vsel %vm1617, %v2814, %v2355
      %v2847 = vsel %vm1617, %v2815, %v2357
      %v2848 = vsel %vm1617, %v2816, %v2359
      %v2849 = vsel %vm1617, %v2817, %v2361
      %v2850 = vsel %vm1617, %v2818, %v2363
      %v2851 = vsel %vm1617, %v2819, %v2365
      %v2852 = vsel %vm1617, %v2820, %v2367
      %v2853 = vsel %vm1617, %v2821, %v2369
      %v2854 = vsel %vm1617, %v2822, %v2371
      %v2855 = vsel %vm1617, %v2823, %v2373
      %v2856 = vsel %vm1617, %v2824, %v2375
      %v2857 = vsel %vm1617, %v2825, %v2377
      %v2858 = vsel %vm1650, %v2826, %v2411
      %v2859 = vsel %vm1650, %v2827, %v2413
      %v2860 = vsel %vm1650, %v2828, %v2415
      %v2861 = vsel %vm1650, %v2829, %v2417
      %v2862 = vsel %vm1650, %v2830, %v2419
      %v2863 = vsel %vm1650, %v2831, %v2421
      %v2864 = vsel %vm1650, %v2832, %v2423
      %v2865 = vsel %vm1650, %v2833, %v2425
      %v2866 = vsel %vm1650, %v2834, %v2427
      %v2867 = vsel %vm1650, %v2835, %v2429
      %v2868 = vsel %vm1650, %v2836, %v2431
      %v2869 = vsel %vm1650, %v2837, %v2433
      %v2870 = vsel %vm1650, %v2838, %v2435
      %v2871 = vsel %vm1650, %v2839, %v2437
      %v2872 = vsel %vm1650, %v2840, %v2439
      %v2873 = vsel %vm1650, %v2841, %v2441
      %v2874 = vsel %vm1650, %v2842, %v2443
      %v2875 = vsel %vm1650, %v2843, %v2445
      %v2876 = vsel %vm1650, %v2844, %v2447
      %v2877 = vsel %vm1650, %v2845, %v2449
      %v2878 = vsel %vm1650, %v2846, %v2451
      %v2879 = vsel %vm1650, %v2847, %v2453
      %v2880 = vsel %vm1650, %v2848, %v2455
      %v2881 = vsel %vm1650, %v2849, %v2457
      %v2882 = vsel %vm1650, %v2850, %v2459
      %v2883 = vsel %vm1650, %v2851, %v2461
      %v2884 = vsel %vm1650, %v2852, %v2463
      %v2885 = vsel %vm1650, %v2853, %v2465
      %v2886 = vsel %vm1650, %v2854, %v2467
      %v2887 = vsel %vm1650, %v2855, %v2469
      %v2888 = vsel %vm1650, %v2856, %v2471
      %v2889 = vsel %vm1650, %v2857, %v2473
      %v2890 = vsel %vm1683, %v2858, %v1201
      %v2891 = vsel %vm1683, %v2859, %v1203
      %v2892 = vsel %vm1683, %v2860, %v1205
      %v2893 = vsel %vm1683, %v2861, %v1207
      %v2894 = vsel %vm1683, %v2862, %v1209
      %v2895 = vsel %vm1683, %v2863, %v1211
      %v2896 = vsel %vm1683, %v2864, %v1213
      %v2897 = vsel %vm1683, %v2865, %v1215
      %v2898 = vsel %vm1683, %v2866, %v1217
      %v2899 = vsel %vm1683, %v2867, %v1219
      %v2900 = vsel %vm1683, %v2868, %v1221
      %v2901 = vsel %vm1683, %v2869, %v1223
      %v2902 = vsel %vm1683, %v2870, %v1225
      %v2903 = vsel %vm1683, %v2871, %v1227
      %v2904 = vsel %vm1683, %v2872, %v1229
      %v2905 = vsel %vm1683, %v2873, %v1231
      %v2906 = vsel %vm1683, %v2874, %v1233
      %v2907 = vsel %vm1683, %v2875, %v1235
      %v2908 = vsel %vm1683, %v2876, %v1237
      %v2909 = vsel %vm1683, %v2877, %v1239
      %v2910 = vsel %vm1683, %v2878, %v1241
      %v2911 = vsel %vm1683, %v2879, %v1243
      %v2912 = vsel %vm1683, %v2880, %v1245
      %v2913 = vsel %vm1683, %v2881, %v1247
      %v2914 = vsel %vm1683, %v2882, %v1249
      %v2915 = vsel %vm1683, %v2883, %v1251
      %v2916 = vsel %vm1683, %v2884, %v1253
      %v2917 = vsel %vm1683, %v2885, %v1255
      %v2918 = vsel %vm1683, %v2886, %v1257
      %v2919 = vsel %vm1683, %v2887, %v1259
      %v2920 = vsel %vm1683, %v2888, %v1261
      %v2921 = vsel %vm1683, %v2889, %v1263
      %v2922 = vsel %vm1716, %v2890, %v2507
      %v2923 = vsel %vm1716, %v2891, %v2509
      %v2924 = vsel %vm1716, %v2892, %v2511
      %v2925 = vsel %vm1716, %v2893, %v2513
      %v2926 = vsel %vm1716, %v2894, %v2515
      %v2927 = vsel %vm1716, %v2895, %v2517
      %v2928 = vsel %vm1716, %v2896, %v2519
      %v2929 = vsel %vm1716, %v2897, %v2521
      %v2930 = vsel %vm1716, %v2898, %v2523
      %v2931 = vsel %vm1716, %v2899, %v2525
      %v2932 = vsel %vm1716, %v2900, %v2527
      %v2933 = vsel %vm1716, %v2901, %v2529
      %v2934 = vsel %vm1716, %v2902, %v2531
      %v2935 = vsel %vm1716, %v2903, %v2533
      %v2936 = vsel %vm1716, %v2904, %v2535
      %v2937 = vsel %vm1716, %v2905, %v2537
      %v2938 = vsel %vm1716, %v2906, %v2539
      %v2939 = vsel %vm1716, %v2907, %v2541
      %v2940 = vsel %vm1716, %v2908, %v2543
      %v2941 = vsel %vm1716, %v2909, %v2545
      %v2942 = vsel %vm1716, %v2910, %v2547
      %v2943 = vsel %vm1716, %v2911, %v2549
      %v2944 = vsel %vm1716, %v2912, %v2551
      %v2945 = vsel %vm1716, %v2913, %v2553
      %v2946 = vsel %vm1716, %v2914, %v2555
      %v2947 = vsel %vm1716, %v2915, %v2557
      %v2948 = vsel %vm1716, %v2916, %v2559
      %v2949 = vsel %vm1716, %v2917, %v2561
      %v2950 = vsel %vm1716, %v2918, %v2563
      %v2951 = vsel %vm1716, %v2919, %v2565
      %v2952 = vsel %vm1716, %v2920, %v2567
      %v2953 = vsel %vm1716, %v2921, %v2569
      %v2954 = vsel %vm1749, %v2922, %v2603
      %v2955 = vsel %vm1749, %v2923, %v2605
      %v2956 = vsel %vm1749, %v2924, %v2607
      %v2957 = vsel %vm1749, %v2925, %v2609
      %v2958 = vsel %vm1749, %v2926, %v2611
      %v2959 = vsel %vm1749, %v2927, %v2613
      %v2960 = vsel %vm1749, %v2928, %v2615
      %v2961 = vsel %vm1749, %v2929, %v2617
      %v2962 = vsel %vm1749, %v2930, %v2619
      %v2963 = vsel %vm1749, %v2931, %v2621
      %v2964 = vsel %vm1749, %v2932, %v2623
      %v2965 = vsel %vm1749, %v2933, %v2625
      %v2966 = vsel %vm1749, %v2934, %v2627
      %v2967 = vsel %vm1749, %v2935, %v2629
      %v2968 = vsel %vm1749, %v2936, %v2631
      %v2969 = vsel %vm1749, %v2937, %v2633
      %v2970 = vsel %vm1749, %v2938, %v2635
      %v2971 = vsel %vm1749, %v2939, %v2637
      %v2972 = vsel %vm1749, %v2940, %v2639
      %v2973 = vsel %vm1749, %v2941, %v2641
      %v2974 = vsel %vm1749, %v2942, %v2643
      %v2975 = vsel %vm1749, %v2943, %v2645
      %v2976 = vsel %vm1749, %v2944, %v2647
      %v2977 = vsel %vm1749, %v2945, %v2649
      %v2978 = vsel %vm1749, %v2946, %v2651
      %v2979 = vsel %vm1749, %v2947, %v2653
      %v2980 = vsel %vm1749, %v2948, %v2655
      %v2981 = vsel %vm1749, %v2949, %v2657
      %v2982 = vsel %vm1749, %v2950, %v2659
      %v2983 = vsel %vm1749, %v2951, %v2661
      %v2984 = vsel %vm1749, %v2952, %v2663
      %v2985 = vsel %vm1749, %v2953, %v2665
      %v2986 = vsel %vm1782, %v2954, %v2699
      %v2987 = vsel %vm1782, %v2955, %v2701
      %v2988 = vsel %vm1782, %v2956, %v2703
      %v2989 = vsel %vm1782, %v2957, %v2705
      %v2990 = vsel %vm1782, %v2958, %v2707
      %v2991 = vsel %vm1782, %v2959, %v2709
      %v2992 = vsel %vm1782, %v2960, %v2711
      %v2993 = vsel %vm1782, %v2961, %v2713
      %v2994 = vsel %vm1782, %v2962, %v2715
      %v2995 = vsel %vm1782, %v2963, %v2717
      %v2996 = vsel %vm1782, %v2964, %v2719
      %v2997 = vsel %vm1782, %v2965, %v2721
      %v2998 = vsel %vm1782, %v2966, %v2723
      %v2999 = vsel %vm1782, %v2967, %v2725
      %v3000 = vsel %vm1782, %v2968, %v2727
      %v3001 = vsel %vm1782, %v2969, %v2729
      %v3002 = vsel %vm1782, %v2970, %v2731
      %v3003 = vsel %vm1782, %v2971, %v2733
      %v3004 = vsel %vm1782, %v2972, %v2735
      %v3005 = vsel %vm1782, %v2973, %v2737
      %v3006 = vsel %vm1782, %v2974, %v2739
      %v3007 = vsel %vm1782, %v2975, %v2741
      %v3008 = vsel %vm1782, %v2976, %v2743
      %v3009 = vsel %vm1782, %v2977, %v2745
      %v3010 = vsel %vm1782, %v2978, %v2747
      %v3011 = vsel %vm1782, %v2979, %v2749
      %v3012 = vsel %vm1782, %v2980, %v2751
      %v3013 = vsel %vm1782, %v2981, %v2753
      %v3014 = vsel %vm1782, %v2982, %v2755
      %v3015 = vsel %vm1782, %v2983, %v2757
      %v3016 = vsel %vm1782, %v2984, %v2759
      %v3017 = vsel %vm1782, %v2985, %v2761
      %s3018 = scalar_lea.vmem %s1, 144
      %v3019 = vld [vmem:[%s3018] sm:$0xff]
      %v3020 = vld [vmem:[%s3018 + $0x8] sm:$0xff]
      %v3021 = vld [vmem:[%s3018 + $0x10] sm:$0xff]
      %v3022 = vld [vmem:[%s3018 + $0x18] sm:$0xff]
      %v3023 = vld [vmem:[%s3018 + $0x20] sm:$0xff]
      %v3024 = vld [vmem:[%s3018 + $0x28] sm:$0xff]
      %v3025 = vld [vmem:[%s3018 + $0x30] sm:$0xff]
      %v3026 = vld [vmem:[%s3018 + $0x38] sm:$0xff]
      %v3027 = vld [vmem:[%s3018 + $0x40] sm:$0xff]
      %v3028 = vld [vmem:[%s3018 + $0x48] sm:$0xff]
      %v3029 = vld [vmem:[%s3018 + $0x50] sm:$0xff]
      %v3030 = vld [vmem:[%s3018 + $0x58] sm:$0xff]
      %v3031 = vld [vmem:[%s3018 + $0x60] sm:$0xff]
      %v3032 = vld [vmem:[%s3018 + $0x68] sm:$0xff]
      %v3033 = vld [vmem:[%s3018 + $0x70] sm:$0xff]
      %v3034 = vld [vmem:[%s3018 + $0x78] sm:$0xff]
      %v3035 = vld [vmem:[%s3018 + $0x80] sm:$0xff]
      %v3036 = vld [vmem:[%s3018 + $0x88] sm:$0xff]
      %v3037 = vsel %vm1584, %v611, 0
      %v3039 = vsel %vm1584, %v613, 0
      %v3041 = vsel %vm1584, %v616, 0
      %v3043 = vsel %vm1584, %v618, 0
      %v3045 = vsel %vm1584, %v621, 0
      %v3047 = vsel %vm1584, %v623, 0
      %v3049 = vsel %vm1584, %v626, 0
      %v3051 = vsel %vm1584, %v628, 0
      %v3053 = vsel %vm1584, %v631, 0
      %v3055 = vsel %vm1584, %v633, 0
      %v3057 = vsel %vm1584, %v636, 0
      %v3059 = vsel %vm1584, %v638, 0
      %v3061 = vsel %vm1584, %v641, 0
      %v3063 = vsel %vm1584, %v643, 0
      %v3065 = vsel %vm1584, %v646, 0
      %v3067 = vsel %vm1584, %v648, 0
      %v3069 = vsel %vm1584, %v651, 0
      %v3071 = vsel %vm1584, %v653, 0
      %v3073 = vsel %vm1584, %v656, 0
      %v3075 = vsel %vm1584, %v658, 0
      %v3077 = vsel %vm1584, %v661, 0
      %v3079 = vsel %vm1584, %v663, 0
      %v3081 = vsel %vm1584, %v666, 0
      %v3083 = vsel %vm1584, %v668, 0
      %v3085 = vsel %vm1584, %v2191, 0
      %v3087 = vsel %vm1584, %v2193, 0
      %v3089 = vsel %vm1584, %v2199, 0
      %v3091 = vsel %vm1584, %v2201, 0
      %v3093 = vsel %vm1584, %v2207, 0
      %v3095 = vsel %vm1584, %v2209, 0
      %v3097 = vsel %vm1584, %v2215, 0
      %v3099 = vsel %vm1584, %v2217, 0
      %3101 = vmatprep.subr.mxu0 0.0
      %3102 = vmatpush1.msra.mxu0 %v3034
      %3103 = vmatprep.subr.mxu0 0.0
      %3104 = vmatpush1.msra.mxu0 %v3033
      %3105 = vmatprep.subr.mxu0 0.0
      %3106 = vmatpush1.msra.mxu0 %v3032
      %3107 = vmatprep.subr.mxu0 0.0
      %3108 = vmatpush1.msra.mxu0 %v3031
      %3109 = vmatprep.subr.mxu0 0.0
      %3110 = vmatpush1.msra.mxu0 %v3030
      %3111 = vmatprep.subr.mxu0 0.0
      %3112 = vmatpush1.msra.mxu0 %v3029
      %3113 = vmatprep.subr.mxu0 0.0
      %3114 = vmatpush1.msra.mxu0 %v3028
      %3115 = vmatprep.subr.mxu0 0.0
      %3116 = vmatpush1.msra.mxu0 %v3027
      %3117 = vmatprep.subr.mxu0 0.0
      %3118 = vmatpush1.msra.mxu0 %v3026
      %3119 = vmatprep.subr.mxu0 0.0
      %3120 = vmatpush1.msra.mxu0 %v3025
      %3121 = vmatprep.subr.mxu0 0.0
      %3122 = vmatpush1.msra.mxu0 %v3024
      %3123 = vmatprep.subr.mxu0 0.0
      %3124 = vmatpush1.msra.mxu0 %v3023
      %3125 = vmatprep.subr.mxu0 0.0
      %3126 = vmatpush1.msra.mxu0 %v3022
      %3127 = vmatprep.subr.mxu0 0.0
      %3128 = vmatpush1.msra.mxu0 %v3021
      %3129 = vmatprep.subr.mxu0 0.0
      %3130 = vmatpush1.msra.mxu0 %v3020
      %3131 = vmatprep.subr.mxu0 0.0
      %3132 = vmatpush1.msra.mxu0 %v3019
      %3133 = vmatprep.subr.mxu0 0.0
      %3134 = vmatpush2.msra.mxu0 0.0
      %3135 = vmatprep.subr.mxu0 0.0
      %3136 = vmatpush2.msra.mxu0 0.0
      %3137 = vmatprep.subr.mxu0 0.0
      %3138 = vmatpush2.msra.mxu0 0.0
      %3139 = vmatprep.subr.mxu0 0.0
      %3140 = vmatpush2.msra.mxu0 0.0
      %3141 = vmatprep.subr.mxu0 0.0
      %3142 = vmatpush2.msra.mxu0 0.0
      %3143 = vmatprep.subr.mxu0 0.0
      %3144 = vmatpush2.msra.mxu0 0.0
      %3145 = vmatprep.subr.mxu0 0.0
      %3146 = vmatpush2.msra.mxu0 0.0
      %3147 = vmatprep.subr.mxu0 0.0
      %3148 = vmatpush2.msra.mxu0 0.0
      %3149 = vmatprep.subr.mxu0 0.0
      %3150 = vmatpush2.msra.mxu0 0.0
      %3151 = vmatprep.subr.mxu0 0.0
      %3152 = vmatpush2.msra.mxu0 0.0
      %3153 = vmatprep.subr.mxu0 0.0
      %3154 = vmatpush2.msra.mxu0 0.0
      %3155 = vmatprep.subr.mxu0 0.0
      %3156 = vmatpush2.msra.mxu0 0.0
      %3157 = vmatprep.subr.mxu0 0.0
      %3158 = vmatpush2.msra.mxu0 0.0
      %3159 = vmatprep.subr.mxu0 0.0
      %3160 = vmatpush2.msra.mxu0 0.0
      %3161 = vmatprep.subr.mxu0 0.0
      %3162 = vmatpush2.msra.mxu0 %v3036
      %3163 = vmatprep.subr.mxu0 0.0
      %3164 = vmatpush2.msra.mxu0 %v3035
      %3165 = vmatprep.mubr.f32.mxu0 %v3037
      %3166 = vmatmul.mubr.f32.gmra.mxu0 %v2986
      %v3167 = vpop.f32.mrf.mxu0
      %v3168 = vadd.f32 0.0, %v3167
      %v3169 = vpop.f32.mrf.mxu0
      %3170 = vmatprep.mubr.f32.mxu0 %v3039
      %3171 = vmatmul.mubr.f32.gmra.mxu0 %v2987
      %v3172 = vpop.f32.mrf.mxu0
      %v3173 = vadd.f32 0.0, %v3172
      %v3174 = vpop.f32.mrf.mxu0
      %3175 = vmatprep.mubr.f32.mxu0 %v3041
      %3176 = vmatmul.mubr.f32.gmra.mxu0 %v2988
      %v3177 = vpop.f32.mrf.mxu0
      %v3178 = vadd.f32 0.0, %v3177
      %v3179 = vpop.f32.mrf.mxu0
      %3180 = vmatprep.mubr.f32.mxu0 %v3043
      %3181 = vmatmul.mubr.f32.gmra.mxu0 %v2989
      %v3182 = vpop.f32.mrf.mxu0
      %v3183 = vadd.f32 0.0, %v3182
      %v3184 = vpop.f32.mrf.mxu0
      %3185 = vmatprep.mubr.f32.mxu0 %v3045
      %3186 = vmatmul.mubr.f32.gmra.mxu0 %v2990
      %v3187 = vpop.f32.mrf.mxu0
      %v3188 = vadd.f32 0.0, %v3187
      %v3189 = vpop.f32.mrf.mxu0
      %3190 = vmatprep.mubr.f32.mxu0 %v3047
      %3191 = vmatmul.mubr.f32.gmra.mxu0 %v2991
      %v3192 = vpop.f32.mrf.mxu0
      %v3193 = vadd.f32 0.0, %v3192
      %v3194 = vpop.f32.mrf.mxu0
      %3195 = vmatprep.mubr.f32.mxu0 %v3049
      %3196 = vmatmul.mubr.f32.gmra.mxu0 %v2992
      %v3197 = vpop.f32.mrf.mxu0
      %v3198 = vadd.f32 0.0, %v3197
      %v3199 = vpop.f32.mrf.mxu0
      %3200 = vmatprep.mubr.f32.mxu0 %v3051
      %3201 = vmatmul.mubr.f32.gmra.mxu0 %v2993
      %v3202 = vpop.f32.mrf.mxu0
      %v3203 = vadd.f32 0.0, %v3202
      %v3204 = vpop.f32.mrf.mxu0
      %3205 = vmatprep.mubr.f32.mxu0 %v3053
      %3206 = vmatmul.mubr.f32.gmra.mxu0 %v2994
      %v3207 = vpop.f32.mrf.mxu0
      %v3208 = vadd.f32 0.0, %v3207
      %v3209 = vpop.f32.mrf.mxu0
      %3210 = vmatprep.mubr.f32.mxu0 %v3055
      %3211 = vmatmul.mubr.f32.gmra.mxu0 %v2995
      %v3212 = vpop.f32.mrf.mxu0
      %v3213 = vadd.f32 0.0, %v3212
      %v3214 = vpop.f32.mrf.mxu0
      %3215 = vmatprep.mubr.f32.mxu0 %v3057
      %3216 = vmatmul.mubr.f32.gmra.mxu0 %v2996
      %v3217 = vpop.f32.mrf.mxu0
      %v3218 = vadd.f32 0.0, %v3217
      %v3219 = vpop.f32.mrf.mxu0
      %3220 = vmatprep.mubr.f32.mxu0 %v3059
      %3221 = vmatmul.mubr.f32.gmra.mxu0 %v2997
      %v3222 = vpop.f32.mrf.mxu0
      %v3223 = vadd.f32 0.0, %v3222
      %v3224 = vpop.f32.mrf.mxu0
      %3225 = vmatprep.mubr.f32.mxu0 %v3061
      %3226 = vmatmul.mubr.f32.gmra.mxu0 %v2998
      %v3227 = vpop.f32.mrf.mxu0
      %v3228 = vadd.f32 0.0, %v3227
      %v3229 = vpop.f32.mrf.mxu0
      %3230 = vmatprep.mubr.f32.mxu0 %v3063
      %3231 = vmatmul.mubr.f32.gmra.mxu0 %v2999
      %v3232 = vpop.f32.mrf.mxu0
      %v3233 = vadd.f32 0.0, %v3232
      %v3234 = vpop.f32.mrf.mxu0
      %3235 = vmatprep.mubr.f32.mxu0 %v3065
      %3236 = vmatmul.mubr.f32.gmra.mxu0 %v3000
      %v3237 = vpop.f32.mrf.mxu0
      %v3238 = vadd.f32 0.0, %v3237
      %v3239 = vpop.f32.mrf.mxu0
      %3240 = vmatprep.mubr.f32.mxu0 %v3067
      %3241 = vmatmul.mubr.f32.gmra.mxu0 %v3001
      %v3242 = vpop.f32.mrf.mxu0
      %v3243 = vadd.f32 0.0, %v3242
      %v3244 = vpop.f32.mrf.mxu0
      %3245 = vmatprep.mubr.f32.mxu0 %v3069
      %3246 = vmatmul.mubr.f32.gmra.mxu0 %v3002
      %v3247 = vpop.f32.mrf.mxu0
      %v3248 = vadd.f32 0.0, %v3247
      %v3249 = vpop.f32.mrf.mxu0
      %3250 = vmatprep.mubr.f32.mxu0 %v3071
      %3251 = vmatmul.mubr.f32.gmra.mxu0 %v3003
      %v3252 = vpop.f32.mrf.mxu0
      %v3253 = vadd.f32 0.0, %v3252
      %v3254 = vpop.f32.mrf.mxu0
      %3255 = vmatprep.mubr.f32.mxu0 %v3073
      %3256 = vmatmul.mubr.f32.gmra.mxu0 %v3004
      %v3257 = vpop.f32.mrf.mxu0
      %v3258 = vadd.f32 0.0, %v3257
      %v3259 = vpop.f32.mrf.mxu0
      %3260 = vmatprep.mubr.f32.mxu0 %v3075
      %3261 = vmatmul.mubr.f32.gmra.mxu0 %v3005
      %v3262 = vpop.f32.mrf.mxu0
      %v3263 = vadd.f32 0.0, %v3262
      %v3264 = vpop.f32.mrf.mxu0
      %3265 = vmatprep.mubr.f32.mxu0 %v3077
      %3266 = vmatmul.mubr.f32.gmra.mxu0 %v3006
      %v3267 = vpop.f32.mrf.mxu0
      %v3268 = vadd.f32 0.0, %v3267
      %v3269 = vpop.f32.mrf.mxu0
      %3270 = vmatprep.mubr.f32.mxu0 %v3079
      %3271 = vmatmul.mubr.f32.gmra.mxu0 %v3007
      %v3272 = vpop.f32.mrf.mxu0
      %v3273 = vadd.f32 0.0, %v3272
      %v3274 = vpop.f32.mrf.mxu0
      %3275 = vmatprep.mubr.f32.mxu0 %v3081
      %3276 = vmatmul.mubr.f32.gmra.mxu0 %v3008
      %v3277 = vpop.f32.mrf.mxu0
      %v3278 = vadd.f32 0.0, %v3277
      %v3279 = vpop.f32.mrf.mxu0
      %3280 = vmatprep.mubr.f32.mxu0 %v3083
      %3281 = vmatmul.mubr.f32.gmra.mxu0 %v3009
      %v3282 = vpop.f32.mrf.mxu0
      %v3283 = vadd.f32 0.0, %v3282
      %v3284 = vpop.f32.mrf.mxu0
      %3285 = vmatprep.mubr.f32.mxu0 %v3085
      %3286 = vmatmul.mubr.f32.gmra.mxu0 %v3010
      %v3287 = vpop.f32.mrf.mxu0
      %v3288 = vadd.f32 0.0, %v3287
      %v3289 = vpop.f32.mrf.mxu0
      %3290 = vmatprep.mubr.f32.mxu0 %v3087
      %3291 = vmatmul.mubr.f32.gmra.mxu0 %v3011
      %v3292 = vpop.f32.mrf.mxu0
      %v3293 = vadd.f32 0.0, %v3292
      %v3294 = vpop.f32.mrf.mxu0
      %3295 = vmatprep.mubr.f32.mxu0 %v3089
      %3296 = vmatmul.mubr.f32.gmra.mxu0 %v3012
      %v3297 = vpop.f32.mrf.mxu0
      %v3298 = vadd.f32 0.0, %v3297
      %v3299 = vpop.f32.mrf.mxu0
      %3300 = vmatprep.mubr.f32.mxu0 %v3091
      %3301 = vmatmul.mubr.f32.gmra.mxu0 %v3013
      %v3302 = vpop.f32.mrf.mxu0
      %v3303 = vadd.f32 0.0, %v3302
      %v3304 = vpop.f32.mrf.mxu0
      %3305 = vmatprep.mubr.f32.mxu0 %v3093
      %3306 = vmatmul.mubr.f32.gmra.mxu0 %v3014
      %v3307 = vpop.f32.mrf.mxu0
      %v3308 = vadd.f32 0.0, %v3307
      %v3309 = vpop.f32.mrf.mxu0
      %3310 = vmatprep.mubr.f32.mxu0 %v3095
      %3311 = vmatmul.mubr.f32.gmra.mxu0 %v3015
      %v3312 = vpop.f32.mrf.mxu0
      %v3313 = vadd.f32 0.0, %v3312
      %v3314 = vpop.f32.mrf.mxu0
      %3315 = vmatprep.mubr.f32.mxu0 %v3097
      %3316 = vmatmul.mubr.f32.gmra.mxu0 %v3016
      %v3317 = vpop.f32.mrf.mxu0
      %v3318 = vadd.f32 0.0, %v3317
      %v3319 = vpop.f32.mrf.mxu0
      %3320 = vmatprep.mubr.f32.mxu0 %v3099
      %3321 = vmatmul.mubr.f32.gmra.mxu0 %v3017
      %v3322 = vpop.f32.mrf.mxu0
      %v3323 = vadd.f32 0.0, %v3322
      %v3324 = vpop.f32.mrf.mxu0
      %3325 = vdwg.mxu0
      %v3326 = vrot.slane %v228, 7
      %v3327 = vrot.slane %v229, 7
      %v3328 = vsel %vm831, %v3326, %v3327
      %v3329 = vrot.slane %v230, 7
      %v3330 = vsel %vm831, %v3327, %v3329
      %v3331 = vrot.slane %v231, 7
      %v3332 = vrot.slane %v232, 7
      %v3333 = vsel %vm831, %v3331, %v3332
      %v3334 = vrot.slane %v233, 7
      %v3335 = vsel %vm831, %v3332, %v3334
      %v3336 = vrot.slane %v234, 7
      %v3337 = vrot.slane %v235, 7
      %v3338 = vsel %vm831, %v3336, %v3337
      %v3339 = vrot.slane %v236, 7
      %v3340 = vsel %vm831, %v3337, %v3339
      %v3341 = vrot.slane %v231, 6
      %v3342 = vrot.slane %v232, 6
      %v3343 = vsel %vm750, %v3341, %v3342
      %v3344 = vrot.slane %v233, 6
      %v3345 = vsel %vm750, %v3342, %v3344
      %v3346 = vrot.slane %v234, 6
      %v3347 = vrot.slane %v235, 6
      %v3348 = vsel %vm750, %v3346, %v3347
      %v3349 = vrot.slane %v236, 6
      %v3350 = vsel %vm750, %v3347, %v3349
      %v3351 = vrot.slane %v234, 5
      %v3352 = vrot.slane %v235, 5
      %v3353 = vsel %vm669, %v3351, %v3352
      %v3354 = vrot.slane %v236, 5
      %v3355 = vsel %vm669, %v3352, %v3354
      %v3356 = vrot.slane %v285, 3
      %v3357 = vrot.slane %v286, 3
      %v3358 = vsel %vm507, %v3356, %v3357
      %v3359 = vrot.slane %v287, 3
      %v3360 = vsel %vm507, %v3357, %v3359
      %v3361 = vrot.slane %v285, 2
      %v3362 = vrot.slane %v286, 2
      %v3363 = vsel %vm426, %v3361, %v3362
      %v3364 = vrot.slane %v287, 2
      %v3365 = vsel %vm426, %v3362, %v3364
      %v3366 = vrot.slane %v288, 2
      %v3367 = vrot.slane %v289, 2
      %v3368 = vsel %vm426, %v3366, %v3367
      %v3369 = vrot.slane %v290, 2
      %v3370 = vsel %vm426, %v3367, %v3369
      %v3371 = vrot.slane %v285, 1
      %v3372 = vrot.slane %v286, 1
      %v3373 = vsel %vm345, %v3371, %v3372
      %v3374 = vrot.slane %v287, 1
      %v3375 = vsel %vm345, %v3372, %v3374
      %v3376 = vrot.slane %v288, 1
      %v3377 = vrot.slane %v289, 1
      %v3378 = vsel %vm345, %v3376, %v3377
      %v3379 = vrot.slane %v290, 1
      %v3380 = vsel %vm345, %v3377, %v3379
      %v3381 = vrot.slane %v291, 1
      %v3382 = vrot.slane %v292, 1
      %v3383 = vsel %vm345, %v3381, %v3382
      %v3384 = vrot.slane %v293, 1
      %v3385 = vsel %vm345, %v3382, %v3384
      %3386 = vrot.lane.b32.xlu0 %v3328, 16
      %v3387 = vpop.permute.xlu0 %3386
      %3388 = vrot.lane.b32.xlu0 %v3330, 16
      %v3389 = vpop.permute.xlu0 %3388
      %3390 = vrot.lane.b32.xlu0 %v3333, 16
      %v3391 = vpop.permute.xlu0 %3390
      %3392 = vrot.lane.b32.xlu0 %v3335, 16
      %v3393 = vpop.permute.xlu0 %3392
      %3394 = vrot.lane.b32.xlu0 %v3338, 16
      %v3395 = vpop.permute.xlu0 %3394
      %3396 = vrot.lane.b32.xlu0 %v3340, 16
      %v3397 = vpop.permute.xlu0 %3396
      %3398 = vrot.lane.b32.xlu0 %v834, 16
      %v3399 = vpop.permute.xlu0 %3398
      %3400 = vrot.lane.b32.xlu0 %v836, 16
      %v3401 = vpop.permute.xlu0 %3400
      %3402 = vrot.lane.b32.xlu0 %v839, 16
      %v3403 = vpop.permute.xlu0 %3402
      %3404 = vrot.lane.b32.xlu0 %v841, 16
      %v3405 = vpop.permute.xlu0 %3404
      %3406 = vrot.lane.b32.xlu0 %v844, 16
      %v3407 = vpop.permute.xlu0 %3406
      %3408 = vrot.lane.b32.xlu0 %v846, 16
      %v3409 = vpop.permute.xlu0 %3408
      %3410 = vrot.lane.b32.xlu0 %v849, 16
      %v3411 = vpop.permute.xlu0 %3410
      %3412 = vrot.lane.b32.xlu0 %v851, 16
      %v3413 = vpop.permute.xlu0 %3412
      %3414 = vrot.lane.b32.xlu0 %v854, 16
      %v3415 = vpop.permute.xlu0 %3414
      %3416 = vrot.lane.b32.xlu0 %v856, 16
      %v3417 = vpop.permute.xlu0 %3416
      %3418 = vrot.lane.b32.xlu0 %v859, 16
      %v3419 = vpop.permute.xlu0 %3418
      %3420 = vrot.lane.b32.xlu0 %v861, 16
      %v3421 = vpop.permute.xlu0 %3420
      %3422 = vrot.lane.b32.xlu0 %v864, 16
      %v3423 = vpop.permute.xlu0 %3422
      %3424 = vrot.lane.b32.xlu0 %v866, 16
      %v3425 = vpop.permute.xlu0 %3424
      %3426 = vrot.lane.b32.xlu0 %v869, 16
      %v3427 = vpop.permute.xlu0 %3426
      %3428 = vrot.lane.b32.xlu0 %v871, 16
      %v3429 = vpop.permute.xlu0 %3428
      %3430 = vrot.lane.b32.xlu0 %v874, 16
      %v3431 = vpop.permute.xlu0 %3430
      %3432 = vrot.lane.b32.xlu0 %v876, 16
      %v3433 = vpop.permute.xlu0 %3432
      %3434 = vrot.lane.b32.xlu0 %v879, 16
      %v3435 = vpop.permute.xlu0 %3434
      %3436 = vrot.lane.b32.xlu0 %v881, 16
      %v3437 = vpop.permute.xlu0 %3436
      %3438 = vrot.lane.b32.xlu0 %v884, 16
      %v3439 = vpop.permute.xlu0 %3438
      %3440 = vrot.lane.b32.xlu0 %v886, 16
      %v3441 = vpop.permute.xlu0 %3440
      %3442 = vrot.lane.b32.xlu0 %v889, 16
      %v3443 = vpop.permute.xlu0 %3442
      %3444 = vrot.lane.b32.xlu0 %v891, 16
      %v3445 = vpop.permute.xlu0 %3444
      %3446 = vrot.lane.b32.xlu0 %v894, 16
      %v3447 = vpop.permute.xlu0 %3446
      %3448 = vrot.lane.b32.xlu0 %v896, 16
      %v3449 = vpop.permute.xlu0 %3448
      %3482 = vrot.lane.b32.xlu0 %v3343, 32
      %v3483 = vpop.permute.xlu0 %3482
      %3484 = vrot.lane.b32.xlu0 %v3345, 32
      %v3485 = vpop.permute.xlu0 %3484
      %3486 = vrot.lane.b32.xlu0 %v3348, 32
      %v3487 = vpop.permute.xlu0 %3486
      %3488 = vrot.lane.b32.xlu0 %v3350, 32
      %v3489 = vpop.permute.xlu0 %3488
      %3490 = vrot.lane.b32.xlu0 %v753, 32
      %v3491 = vpop.permute.xlu0 %3490
      %3492 = vrot.lane.b32.xlu0 %v755, 32
      %v3493 = vpop.permute.xlu0 %3492
      %3494 = vrot.lane.b32.xlu0 %v758, 32
      %v3495 = vpop.permute.xlu0 %3494
      %3496 = vrot.lane.b32.xlu0 %v760, 32
      %v3497 = vpop.permute.xlu0 %3496
      %3498 = vrot.lane.b32.xlu0 %v763, 32
      %v3499 = vpop.permute.xlu0 %3498
      %3500 = vrot.lane.b32.xlu0 %v765, 32
      %v3501 = vpop.permute.xlu0 %3500
      %3502 = vrot.lane.b32.xlu0 %v768, 32
      %v3503 = vpop.permute.xlu0 %3502
      %3504 = vrot.lane.b32.xlu0 %v770, 32
      %v3505 = vpop.permute.xlu0 %3504
      %3506 = vrot.lane.b32.xlu0 %v773, 32
      %v3507 = vpop.permute.xlu0 %3506
      %3508 = vrot.lane.b32.xlu0 %v775, 32
      %v3509 = vpop.permute.xlu0 %3508
      %3510 = vrot.lane.b32.xlu0 %v778, 32
      %v3511 = vpop.permute.xlu0 %3510
      %3512 = vrot.lane.b32.xlu0 %v780, 32
      %v3513 = vpop.permute.xlu0 %3512
      %3514 = vrot.lane.b32.xlu0 %v783, 32
      %v3515 = vpop.permute.xlu0 %3514
      %3516 = vrot.lane.b32.xlu0 %v785, 32
      %v3517 = vpop.permute.xlu0 %3516
      %3518 = vrot.lane.b32.xlu0 %v788, 32
      %v3519 = vpop.permute.xlu0 %3518
      %3520 = vrot.lane.b32.xlu0 %v790, 32
      %v3521 = vpop.permute.xlu0 %3520
      %3522 = vrot.lane.b32.xlu0 %v793, 32
      %v3523 = vpop.permute.xlu0 %3522
      %3524 = vrot.lane.b32.xlu0 %v795, 32
      %v3525 = vpop.permute.xlu0 %3524
      %3526 = vrot.lane.b32.xlu0 %v798, 32
      %v3527 = vpop.permute.xlu0 %3526
      %3528 = vrot.lane.b32.xlu0 %v800, 32
      %v3529 = vpop.permute.xlu0 %3528
      %3530 = vrot.lane.b32.xlu0 %v803, 32
      %v3531 = vpop.permute.xlu0 %3530
      %3532 = vrot.lane.b32.xlu0 %v805, 32
      %v3533 = vpop.permute.xlu0 %3532
      %3534 = vrot.lane.b32.xlu0 %v808, 32
      %v3535 = vpop.permute.xlu0 %3534
      %3536 = vrot.lane.b32.xlu0 %v810, 32
      %v3537 = vpop.permute.xlu0 %3536
      %3538 = vrot.lane.b32.xlu0 %v813, 32
      %v3539 = vpop.permute.xlu0 %3538
      %3540 = vrot.lane.b32.xlu0 %v815, 32
      %v3541 = vpop.permute.xlu0 %3540
      %3542 = vrot.lane.b32.xlu0 %v818, 32
      %v3543 = vpop.permute.xlu0 %3542
      %3544 = vrot.lane.b32.xlu0 %v820, 32
      %v3545 = vpop.permute.xlu0 %3544
      %3578 = vrot.lane.b32.xlu0 %v3353, 48
      %v3579 = vpop.permute.xlu0 %3578
      %3580 = vrot.lane.b32.xlu0 %v3355, 48
      %v3581 = vpop.permute.xlu0 %3580
      %3582 = vrot.lane.b32.xlu0 %v672, 48
      %v3583 = vpop.permute.xlu0 %3582
      %3584 = vrot.lane.b32.xlu0 %v674, 48
      %v3585 = vpop.permute.xlu0 %3584
      %3586 = vrot.lane.b32.xlu0 %v677, 48
      %v3587 = vpop.permute.xlu0 %3586
      %3588 = vrot.lane.b32.xlu0 %v679, 48
      %v3589 = vpop.permute.xlu0 %3588
      %3590 = vrot.lane.b32.xlu0 %v682, 48
      %v3591 = vpop.permute.xlu0 %3590
      %3592 = vrot.lane.b32.xlu0 %v684, 48
      %v3593 = vpop.permute.xlu0 %3592
      %3594 = vrot.lane.b32.xlu0 %v687, 48
      %v3595 = vpop.permute.xlu0 %3594
      %3596 = vrot.lane.b32.xlu0 %v689, 48
      %v3597 = vpop.permute.xlu0 %3596
      %3598 = vrot.lane.b32.xlu0 %v692, 48
      %v3599 = vpop.permute.xlu0 %3598
      %3600 = vrot.lane.b32.xlu0 %v694, 48
      %v3601 = vpop.permute.xlu0 %3600
      %3602 = vrot.lane.b32.xlu0 %v697, 48
      %v3603 = vpop.permute.xlu0 %3602
      %3604 = vrot.lane.b32.xlu0 %v699, 48
      %v3605 = vpop.permute.xlu0 %3604
      %3606 = vrot.lane.b32.xlu0 %v702, 48
      %v3607 = vpop.permute.xlu0 %3606
      %3608 = vrot.lane.b32.xlu0 %v704, 48
      %v3609 = vpop.permute.xlu0 %3608
      %3610 = vrot.lane.b32.xlu0 %v707, 48
      %v3611 = vpop.permute.xlu0 %3610
      %3612 = vrot.lane.b32.xlu0 %v709, 48
      %v3613 = vpop.permute.xlu0 %3612
      %3614 = vrot.lane.b32.xlu0 %v712, 48
      %v3615 = vpop.permute.xlu0 %3614
      %3616 = vrot.lane.b32.xlu0 %v714, 48
      %v3617 = vpop.permute.xlu0 %3616
      %3618 = vrot.lane.b32.xlu0 %v717, 48
      %v3619 = vpop.permute.xlu0 %3618
      %3620 = vrot.lane.b32.xlu0 %v719, 48
      %v3621 = vpop.permute.xlu0 %3620
      %3622 = vrot.lane.b32.xlu0 %v722, 48
      %v3623 = vpop.permute.xlu0 %3622
      %3624 = vrot.lane.b32.xlu0 %v724, 48
      %v3625 = vpop.permute.xlu0 %3624
      %3626 = vrot.lane.b32.xlu0 %v727, 48
      %v3627 = vpop.permute.xlu0 %3626
      %3628 = vrot.lane.b32.xlu0 %v729, 48
      %v3629 = vpop.permute.xlu0 %3628
      %3630 = vrot.lane.b32.xlu0 %v732, 48
      %v3631 = vpop.permute.xlu0 %3630
      %3632 = vrot.lane.b32.xlu0 %v734, 48
      %v3633 = vpop.permute.xlu0 %3632
      %3634 = vrot.lane.b32.xlu0 %v737, 48
      %v3635 = vpop.permute.xlu0 %3634
      %3636 = vrot.lane.b32.xlu0 %v739, 48
      %v3637 = vpop.permute.xlu0 %3636
      %3638 = vrot.lane.b32.xlu0 %v742, 48
      %v3639 = vpop.permute.xlu0 %3638
      %3640 = vrot.lane.b32.xlu0 %v744, 48
      %v3641 = vpop.permute.xlu0 %3640
      %3674 = vrot.lane.b32.xlu0 %v515, 80
      %v3675 = vpop.permute.xlu0 %3674
      %3676 = vrot.lane.b32.xlu0 %v517, 80
      %v3677 = vpop.permute.xlu0 %3676
      %3678 = vrot.lane.b32.xlu0 %v520, 80
      %v3679 = vpop.permute.xlu0 %3678
      %3680 = vrot.lane.b32.xlu0 %v522, 80
      %v3681 = vpop.permute.xlu0 %3680
      %3682 = vrot.lane.b32.xlu0 %v525, 80
      %v3683 = vpop.permute.xlu0 %3682
      %3684 = vrot.lane.b32.xlu0 %v527, 80
      %v3685 = vpop.permute.xlu0 %3684
      %3686 = vrot.lane.b32.xlu0 %v530, 80
      %v3687 = vpop.permute.xlu0 %3686
      %3688 = vrot.lane.b32.xlu0 %v532, 80
      %v3689 = vpop.permute.xlu0 %3688
      %3690 = vrot.lane.b32.xlu0 %v535, 80
      %v3691 = vpop.permute.xlu0 %3690
      %3692 = vrot.lane.b32.xlu0 %v537, 80
      %v3693 = vpop.permute.xlu0 %3692
      %3694 = vrot.lane.b32.xlu0 %v540, 80
      %v3695 = vpop.permute.xlu0 %3694
      %3696 = vrot.lane.b32.xlu0 %v542, 80
      %v3697 = vpop.permute.xlu0 %3696
      %3698 = vrot.lane.b32.xlu0 %v545, 80
      %v3699 = vpop.permute.xlu0 %3698
      %3700 = vrot.lane.b32.xlu0 %v547, 80
      %v3701 = vpop.permute.xlu0 %3700
      %3702 = vrot.lane.b32.xlu0 %v550, 80
      %v3703 = vpop.permute.xlu0 %3702
      %3704 = vrot.lane.b32.xlu0 %v552, 80
      %v3705 = vpop.permute.xlu0 %3704
      %3706 = vrot.lane.b32.xlu0 %v555, 80
      %v3707 = vpop.permute.xlu0 %3706
      %3708 = vrot.lane.b32.xlu0 %v557, 80
      %v3709 = vpop.permute.xlu0 %3708
      %3710 = vrot.lane.b32.xlu0 %v560, 80
      %v3711 = vpop.permute.xlu0 %3710
      %3712 = vrot.lane.b32.xlu0 %v562, 80
      %v3713 = vpop.permute.xlu0 %3712
      %3714 = vrot.lane.b32.xlu0 %v565, 80
      %v3715 = vpop.permute.xlu0 %3714
      %3716 = vrot.lane.b32.xlu0 %v567, 80
      %v3717 = vpop.permute.xlu0 %3716
      %3718 = vrot.lane.b32.xlu0 %v570, 80
      %v3719 = vpop.permute.xlu0 %3718
      %3720 = vrot.lane.b32.xlu0 %v572, 80
      %v3721 = vpop.permute.xlu0 %3720
      %3722 = vrot.lane.b32.xlu0 %v575, 80
      %v3723 = vpop.permute.xlu0 %3722
      %3724 = vrot.lane.b32.xlu0 %v577, 80
      %v3725 = vpop.permute.xlu0 %3724
      %3726 = vrot.lane.b32.xlu0 %v580, 80
      %v3727 = vpop.permute.xlu0 %3726
      %3728 = vrot.lane.b32.xlu0 %v582, 80
      %v3729 = vpop.permute.xlu0 %3728
      %3730 = vrot.lane.b32.xlu0 %v585, 80
      %v3731 = vpop.permute.xlu0 %3730
      %3732 = vrot.lane.b32.xlu0 %v587, 80
      %v3733 = vpop.permute.xlu0 %3732
      %3734 = vrot.lane.b32.xlu0 %v3358, 80
      %v3735 = vpop.permute.xlu0 %3734
      %3736 = vrot.lane.b32.xlu0 %v3360, 80
      %v3737 = vpop.permute.xlu0 %3736
      %3770 = vrot.lane.b32.xlu0 %v439, 96
      %v3771 = vpop.permute.xlu0 %3770
      %3772 = vrot.lane.b32.xlu0 %v441, 96
      %v3773 = vpop.permute.xlu0 %3772
      %3774 = vrot.lane.b32.xlu0 %v444, 96
      %v3775 = vpop.permute.xlu0 %3774
      %3776 = vrot.lane.b32.xlu0 %v446, 96
      %v3777 = vpop.permute.xlu0 %3776
      %3778 = vrot.lane.b32.xlu0 %v449, 96
      %v3779 = vpop.permute.xlu0 %3778
      %3780 = vrot.lane.b32.xlu0 %v451, 96
      %v3781 = vpop.permute.xlu0 %3780
      %3782 = vrot.lane.b32.xlu0 %v454, 96
      %v3783 = vpop.permute.xlu0 %3782
      %3784 = vrot.lane.b32.xlu0 %v456, 96
      %v3785 = vpop.permute.xlu0 %3784
      %3786 = vrot.lane.b32.xlu0 %v459, 96
      %v3787 = vpop.permute.xlu0 %3786
      %3788 = vrot.lane.b32.xlu0 %v461, 96
      %v3789 = vpop.permute.xlu0 %3788
      %3790 = vrot.lane.b32.xlu0 %v464, 96
      %v3791 = vpop.permute.xlu0 %3790
      %3792 = vrot.lane.b32.xlu0 %v466, 96
      %v3793 = vpop.permute.xlu0 %3792
      %3794 = vrot.lane.b32.xlu0 %v469, 96
      %v3795 = vpop.permute.xlu0 %3794
      %3796 = vrot.lane.b32.xlu0 %v471, 96
      %v3797 = vpop.permute.xlu0 %3796
      %3798 = vrot.lane.b32.xlu0 %v474, 96
      %v3799 = vpop.permute.xlu0 %3798
      %3800 = vrot.lane.b32.xlu0 %v476, 96
      %v3801 = vpop.permute.xlu0 %3800
      %3802 = vrot.lane.b32.xlu0 %v479, 96
      %v3803 = vpop.permute.xlu0 %3802
      %3804 = vrot.lane.b32.xlu0 %v481, 96
      %v3805 = vpop.permute.xlu0 %3804
      %3806 = vrot.lane.b32.xlu0 %v484, 96
      %v3807 = vpop.permute.xlu0 %3806
      %3808 = vrot.lane.b32.xlu0 %v486, 96
      %v3809 = vpop.permute.xlu0 %3808
      %3810 = vrot.lane.b32.xlu0 %v489, 96
      %v3811 = vpop.permute.xlu0 %3810
      %3812 = vrot.lane.b32.xlu0 %v491, 96
      %v3813 = vpop.permute.xlu0 %3812
      %3814 = vrot.lane.b32.xlu0 %v494, 96
      %v3815 = vpop.permute.xlu0 %3814
      %3816 = vrot.lane.b32.xlu0 %v496, 96
      %v3817 = vpop.permute.xlu0 %3816
      %3818 = vrot.lane.b32.xlu0 %v499, 96
      %v3819 = vpop.permute.xlu0 %3818
      %3820 = vrot.lane.b32.xlu0 %v501, 96
      %v3821 = vpop.permute.xlu0 %3820
      %3822 = vrot.lane.b32.xlu0 %v504, 96
      %v3823 = vpop.permute.xlu0 %3822
      %3824 = vrot.lane.b32.xlu0 %v506, 96
      %v3825 = vpop.permute.xlu0 %3824
      %3826 = vrot.lane.b32.xlu0 %v3363, 96
      %v3827 = vpop.permute.xlu0 %3826
      %3828 = vrot.lane.b32.xlu0 %v3365, 96
      %v3829 = vpop.permute.xlu0 %3828
      %3830 = vrot.lane.b32.xlu0 %v3368, 96
      %v3831 = vpop.permute.xlu0 %3830
      %3832 = vrot.lane.b32.xlu0 %v3370, 96
      %v3833 = vpop.permute.xlu0 %3832
      %3866 = vrot.lane.b32.xlu0 %v363, 112
      %v3867 = vpop.permute.xlu0 %3866
      %3868 = vrot.lane.b32.xlu0 %v365, 112
      %v3869 = vpop.permute.xlu0 %3868
      %3870 = vrot.lane.b32.xlu0 %v368, 112
      %v3871 = vpop.permute.xlu0 %3870
      %3872 = vrot.lane.b32.xlu0 %v370, 112
      %v3873 = vpop.permute.xlu0 %3872
      %3874 = vrot.lane.b32.xlu0 %v373, 112
      %v3875 = vpop.permute.xlu0 %3874
      %3876 = vrot.lane.b32.xlu0 %v375, 112
      %v3877 = vpop.permute.xlu0 %3876
      %3878 = vrot.lane.b32.xlu0 %v378, 112
      %v3879 = vpop.permute.xlu0 %3878
      %3880 = vrot.lane.b32.xlu0 %v380, 112
      %v3881 = vpop.permute.xlu0 %3880
      %3882 = vrot.lane.b32.xlu0 %v383, 112
      %v3883 = vpop.permute.xlu0 %3882
      %3884 = vrot.lane.b32.xlu0 %v385, 112
      %v3885 = vpop.permute.xlu0 %3884
      %3886 = vrot.lane.b32.xlu0 %v388, 112
      %v3887 = vpop.permute.xlu0 %3886
      %3888 = vrot.lane.b32.xlu0 %v390, 112
      %v3889 = vpop.permute.xlu0 %3888
      %3890 = vrot.lane.b32.xlu0 %v393, 112
      %v3891 = vpop.permute.xlu0 %3890
      %3892 = vrot.lane.b32.xlu0 %v395, 112
      %v3893 = vpop.permute.xlu0 %3892
      %3894 = vrot.lane.b32.xlu0 %v398, 112
      %v3895 = vpop.permute.xlu0 %3894
      %3896 = vrot.lane.b32.xlu0 %v400, 112
      %v3897 = vpop.permute.xlu0 %3896
      %3898 = vrot.lane.b32.xlu0 %v403, 112
      %v3899 = vpop.permute.xlu0 %3898
      %3900 = vrot.lane.b32.xlu0 %v405, 112
      %v3901 = vpop.permute.xlu0 %3900
      %3902 = vrot.lane.b32.xlu0 %v408, 112
      %v3903 = vpop.permute.xlu0 %3902
      %3904 = vrot.lane.b32.xlu0 %v410, 112
      %v3905 = vpop.permute.xlu0 %3904
      %3906 = vrot.lane.b32.xlu0 %v413, 112
      %v3907 = vpop.permute.xlu0 %3906
      %3908 = vrot.lane.b32.xlu0 %v415, 112
      %v3909 = vpop.permute.xlu0 %3908
      %3910 = vrot.lane.b32.xlu0 %v418, 112
      %v3911 = vpop.permute.xlu0 %3910
      %3912 = vrot.lane.b32.xlu0 %v420, 112
      %v3913 = vpop.permute.xlu0 %3912
      %3914 = vrot.lane.b32.xlu0 %v423, 112
      %v3915 = vpop.permute.xlu0 %3914
      %3916 = vrot.lane.b32.xlu0 %v425, 112
      %v3917 = vpop.permute.xlu0 %3916
      %3918 = vrot.lane.b32.xlu0 %v3373, 112
      %v3919 = vpop.permute.xlu0 %3918
      %3920 = vrot.lane.b32.xlu0 %v3375, 112
      %v3921 = vpop.permute.xlu0 %3920
      %3922 = vrot.lane.b32.xlu0 %v3378, 112
      %v3923 = vpop.permute.xlu0 %3922
      %3924 = vrot.lane.b32.xlu0 %v3380, 112
      %v3925 = vpop.permute.xlu0 %3924
      %3926 = vrot.lane.b32.xlu0 %v3383, 112
      %v3927 = vpop.permute.xlu0 %3926
      %3928 = vrot.lane.b32.xlu0 %v3385, 112
      %v3929 = vpop.permute.xlu0 %3928
      %v3962 = vsel %vm1584, %v226, %v3387
      %v3963 = vsel %vm1584, %v227, %v3389
      %v3964 = vsel %vm1584, %v229, %v3391
      %v3965 = vsel %vm1584, %v230, %v3393
      %v3966 = vsel %vm1584, %v232, %v3395
      %v3967 = vsel %vm1584, %v233, %v3397
      %v3968 = vsel %vm1584, %v235, %v3399
      %v3969 = vsel %vm1584, %v236, %v3401
      %v3970 = vsel %vm1584, %v238, %v3403
      %v3971 = vsel %vm1584, %v239, %v3405
      %v3972 = vsel %vm1584, %v241, %v3407
      %v3973 = vsel %vm1584, %v242, %v3409
      %v3974 = vsel %vm1584, %v244, %v3411
      %v3975 = vsel %vm1584, %v245, %v3413
      %v3976 = vsel %vm1584, %v247, %v3415
      %v3977 = vsel %vm1584, %v248, %v3417
      %v3978 = vsel %vm1584, %v250, %v3419
      %v3979 = vsel %vm1584, %v251, %v3421
      %v3980 = vsel %vm1584, %v253, %v3423
      %v3981 = vsel %vm1584, %v254, %v3425
      %v3982 = vsel %vm1584, %v256, %v3427
      %v3983 = vsel %vm1584, %v257, %v3429
      %v3984 = vsel %vm1584, %v259, %v3431
      %v3985 = vsel %vm1584, %v260, %v3433
      %v3986 = vsel %vm1584, %v262, %v3435
      %v3987 = vsel %vm1584, %v263, %v3437
      %v3988 = vsel %vm1584, %v265, %v3439
      %v3989 = vsel %vm1584, %v266, %v3441
      %v3990 = vsel %vm1584, %v268, %v3443
      %v3991 = vsel %vm1584, %v269, %v3445
      %v3992 = vsel %vm1584, %v271, %v3447
      %v3993 = vsel %vm1584, %v272, %v3449
      %v3994 = vsel %vm1617, %v3962, %v3483
      %v3995 = vsel %vm1617, %v3963, %v3485
      %v3996 = vsel %vm1617, %v3964, %v3487
      %v3997 = vsel %vm1617, %v3965, %v3489
      %v3998 = vsel %vm1617, %v3966, %v3491
      %v3999 = vsel %vm1617, %v3967, %v3493
      %v4000 = vsel %vm1617, %v3968, %v3495
      %v4001 = vsel %vm1617, %v3969, %v3497
      %v4002 = vsel %vm1617, %v3970, %v3499
      %v4003 = vsel %vm1617, %v3971, %v3501
      %v4004 = vsel %vm1617, %v3972, %v3503
      %v4005 = vsel %vm1617, %v3973, %v3505
      %v4006 = vsel %vm1617, %v3974, %v3507
      %v4007 = vsel %vm1617, %v3975, %v3509
      %v4008 = vsel %vm1617, %v3976, %v3511
      %v4009 = vsel %vm1617, %v3977, %v3513
      %v4010 = vsel %vm1617, %v3978, %v3515
      %v4011 = vsel %vm1617, %v3979, %v3517
      %v4012 = vsel %vm1617, %v3980, %v3519
      %v4013 = vsel %vm1617, %v3981, %v3521
      %v4014 = vsel %vm1617, %v3982, %v3523
      %v4015 = vsel %vm1617, %v3983, %v3525
      %v4016 = vsel %vm1617, %v3984, %v3527
      %v4017 = vsel %vm1617, %v3985, %v3529
      %v4018 = vsel %vm1617, %v3986, %v3531
      %v4019 = vsel %vm1617, %v3987, %v3533
      %v4020 = vsel %vm1617, %v3988, %v3535
      %v4021 = vsel %vm1617, %v3989, %v3537
      %v4022 = vsel %vm1617, %v3990, %v3539
      %v4023 = vsel %vm1617, %v3991, %v3541
      %v4024 = vsel %vm1617, %v3992, %v3543
      %v4025 = vsel %vm1617, %v3993, %v3545
      %v4026 = vsel %vm1650, %v3994, %v3579
      %v4027 = vsel %vm1650, %v3995, %v3581
      %v4028 = vsel %vm1650, %v3996, %v3583
      %v4029 = vsel %vm1650, %v3997, %v3585
      %v4030 = vsel %vm1650, %v3998, %v3587
      %v4031 = vsel %vm1650, %v3999, %v3589
      %v4032 = vsel %vm1650, %v4000, %v3591
      %v4033 = vsel %vm1650, %v4001, %v3593
      %v4034 = vsel %vm1650, %v4002, %v3595
      %v4035 = vsel %vm1650, %v4003, %v3597
      %v4036 = vsel %vm1650, %v4004, %v3599
      %v4037 = vsel %vm1650, %v4005, %v3601
      %v4038 = vsel %vm1650, %v4006, %v3603
      %v4039 = vsel %vm1650, %v4007, %v3605
      %v4040 = vsel %vm1650, %v4008, %v3607
      %v4041 = vsel %vm1650, %v4009, %v3609
      %v4042 = vsel %vm1650, %v4010, %v3611
      %v4043 = vsel %vm1650, %v4011, %v3613
      %v4044 = vsel %vm1650, %v4012, %v3615
      %v4045 = vsel %vm1650, %v4013, %v3617
      %v4046 = vsel %vm1650, %v4014, %v3619
      %v4047 = vsel %vm1650, %v4015, %v3621
      %v4048 = vsel %vm1650, %v4016, %v3623
      %v4049 = vsel %vm1650, %v4017, %v3625
      %v4050 = vsel %vm1650, %v4018, %v3627
      %v4051 = vsel %vm1650, %v4019, %v3629
      %v4052 = vsel %vm1650, %v4020, %v3631
      %v4053 = vsel %vm1650, %v4021, %v3633
      %v4054 = vsel %vm1650, %v4022, %v3635
      %v4055 = vsel %vm1650, %v4023, %v3637
      %v4056 = vsel %vm1650, %v4024, %v3639
      %v4057 = vsel %vm1650, %v4025, %v3641
      %v4058 = vsel %vm1683, %v4026, %v1201
      %v4059 = vsel %vm1683, %v4027, %v1203
      %v4060 = vsel %vm1683, %v4028, %v1205
      %v4061 = vsel %vm1683, %v4029, %v1207
      %v4062 = vsel %vm1683, %v4030, %v1209
      %v4063 = vsel %vm1683, %v4031, %v1211
      %v4064 = vsel %vm1683, %v4032, %v1213
      %v4065 = vsel %vm1683, %v4033, %v1215
      %v4066 = vsel %vm1683, %v4034, %v1217
      %v4067 = vsel %vm1683, %v4035, %v1219
      %v4068 = vsel %vm1683, %v4036, %v1221
      %v4069 = vsel %vm1683, %v4037, %v1223
      %v4070 = vsel %vm1683, %v4038, %v1225
      %v4071 = vsel %vm1683, %v4039, %v1227
      %v4072 = vsel %vm1683, %v4040, %v1229
      %v4073 = vsel %vm1683, %v4041, %v1231
      %v4074 = vsel %vm1683, %v4042, %v1233
      %v4075 = vsel %vm1683, %v4043, %v1235
      %v4076 = vsel %vm1683, %v4044, %v1237
      %v4077 = vsel %vm1683, %v4045, %v1239
      %v4078 = vsel %vm1683, %v4046, %v1241
      %v4079 = vsel %vm1683, %v4047, %v1243
      %v4080 = vsel %vm1683, %v4048, %v1245
      %v4081 = vsel %vm1683, %v4049, %v1247
      %v4082 = vsel %vm1683, %v4050, %v1249
      %v4083 = vsel %vm1683, %v4051, %v1251
      %v4084 = vsel %vm1683, %v4052, %v1253
      %v4085 = vsel %vm1683, %v4053, %v1255
      %v4086 = vsel %vm1683, %v4054, %v1257
      %v4087 = vsel %vm1683, %v4055, %v1259
      %v4088 = vsel %vm1683, %v4056, %v1261
      %v4089 = vsel %vm1683, %v4057, %v1263
      %v4090 = vsel %vm1716, %v4058, %v3675
      %v4091 = vsel %vm1716, %v4059, %v3677
      %v4092 = vsel %vm1716, %v4060, %v3679
      %v4093 = vsel %vm1716, %v4061, %v3681
      %v4094 = vsel %vm1716, %v4062, %v3683
      %v4095 = vsel %vm1716, %v4063, %v3685
      %v4096 = vsel %vm1716, %v4064, %v3687
      %v4097 = vsel %vm1716, %v4065, %v3689
      %v4098 = vsel %vm1716, %v4066, %v3691
      %v4099 = vsel %vm1716, %v4067, %v3693
      %v4100 = vsel %vm1716, %v4068, %v3695
      %v4101 = vsel %vm1716, %v4069, %v3697
      %v4102 = vsel %vm1716, %v4070, %v3699
      %v4103 = vsel %vm1716, %v4071, %v3701
      %v4104 = vsel %vm1716, %v4072, %v3703
      %v4105 = vsel %vm1716, %v4073, %v3705
      %v4106 = vsel %vm1716, %v4074, %v3707
      %v4107 = vsel %vm1716, %v4075, %v3709
      %v4108 = vsel %vm1716, %v4076, %v3711
      %v4109 = vsel %vm1716, %v4077, %v3713
      %v4110 = vsel %vm1716, %v4078, %v3715
      %v4111 = vsel %vm1716, %v4079, %v3717
      %v4112 = vsel %vm1716, %v4080, %v3719
      %v4113 = vsel %vm1716, %v4081, %v3721
      %v4114 = vsel %vm1716, %v4082, %v3723
      %v4115 = vsel %vm1716, %v4083, %v3725
      %v4116 = vsel %vm1716, %v4084, %v3727
      %v4117 = vsel %vm1716, %v4085, %v3729
      %v4118 = vsel %vm1716, %v4086, %v3731
      %v4119 = vsel %vm1716, %v4087, %v3733
      %v4120 = vsel %vm1716, %v4088, %v3735
      %v4121 = vsel %vm1716, %v4089, %v3737
      %v4122 = vsel %vm1749, %v4090, %v3771
      %v4123 = vsel %vm1749, %v4091, %v3773
      %v4124 = vsel %vm1749, %v4092, %v3775
      %v4125 = vsel %vm1749, %v4093, %v3777
      %v4126 = vsel %vm1749, %v4094, %v3779
      %v4127 = vsel %vm1749, %v4095, %v3781
      %v4128 = vsel %vm1749, %v4096, %v3783
      %v4129 = vsel %vm1749, %v4097, %v3785
      %v4130 = vsel %vm1749, %v4098, %v3787
      %v4131 = vsel %vm1749, %v4099, %v3789
      %v4132 = vsel %vm1749, %v4100, %v3791
      %v4133 = vsel %vm1749, %v4101, %v3793
      %v4134 = vsel %vm1749, %v4102, %v3795
      %v4135 = vsel %vm1749, %v4103, %v3797
      %v4136 = vsel %vm1749, %v4104, %v3799
      %v4137 = vsel %vm1749, %v4105, %v3801
      %v4138 = vsel %vm1749, %v4106, %v3803
      %v4139 = vsel %vm1749, %v4107, %v3805
      %v4140 = vsel %vm1749, %v4108, %v3807
      %v4141 = vsel %vm1749, %v4109, %v3809
      %v4142 = vsel %vm1749, %v4110, %v3811
      %v4143 = vsel %vm1749, %v4111, %v3813
      %v4144 = vsel %vm1749, %v4112, %v3815
      %v4145 = vsel %vm1749, %v4113, %v3817
      %v4146 = vsel %vm1749, %v4114, %v3819
      %v4147 = vsel %vm1749, %v4115, %v3821
      %v4148 = vsel %vm1749, %v4116, %v3823
      %v4149 = vsel %vm1749, %v4117, %v3825
      %v4150 = vsel %vm1749, %v4118, %v3827
      %v4151 = vsel %vm1749, %v4119, %v3829
      %v4152 = vsel %vm1749, %v4120, %v3831
      %v4153 = vsel %vm1749, %v4121, %v3833
      %v4154 = vsel %vm1782, %v4122, %v3867
      %v4155 = vsel %vm1782, %v4123, %v3869
      %v4156 = vsel %vm1782, %v4124, %v3871
      %v4157 = vsel %vm1782, %v4125, %v3873
      %v4158 = vsel %vm1782, %v4126, %v3875
      %v4159 = vsel %vm1782, %v4127, %v3877
      %v4160 = vsel %vm1782, %v4128, %v3879
      %v4161 = vsel %vm1782, %v4129, %v3881
      %v4162 = vsel %vm1782, %v4130, %v3883
      %v4163 = vsel %vm1782, %v4131, %v3885
      %v4164 = vsel %vm1782, %v4132, %v3887
      %v4165 = vsel %vm1782, %v4133, %v3889
      %v4166 = vsel %vm1782, %v4134, %v3891
      %v4167 = vsel %vm1782, %v4135, %v3893
      %v4168 = vsel %vm1782, %v4136, %v3895
      %v4169 = vsel %vm1782, %v4137, %v3897
      %v4170 = vsel %vm1782, %v4138, %v3899
      %v4171 = vsel %vm1782, %v4139, %v3901
      %v4172 = vsel %vm1782, %v4140, %v3903
      %v4173 = vsel %vm1782, %v4141, %v3905
      %v4174 = vsel %vm1782, %v4142, %v3907
      %v4175 = vsel %vm1782, %v4143, %v3909
      %v4176 = vsel %vm1782, %v4144, %v3911
      %v4177 = vsel %vm1782, %v4145, %v3913
      %v4178 = vsel %vm1782, %v4146, %v3915
      %v4179 = vsel %vm1782, %v4147, %v3917
      %v4180 = vsel %vm1782, %v4148, %v3919
      %v4181 = vsel %vm1782, %v4149, %v3921
      %v4182 = vsel %vm1782, %v4150, %v3923
      %v4183 = vsel %vm1782, %v4151, %v3925
      %v4184 = vsel %vm1782, %v4152, %v3927
      %v4185 = vsel %vm1782, %v4153, %v3929
      %s4186 = scalar_lea.vmem %s1, 288
      %v4187 = vld [vmem:[%s4186] sm:$0xff]
      %v4188 = vld [vmem:[%s4186 + $0x8] sm:$0xff]
      %v4189 = vld [vmem:[%s4186 + $0x10] sm:$0xff]
      %v4190 = vld [vmem:[%s4186 + $0x18] sm:$0xff]
      %v4191 = vld [vmem:[%s4186 + $0x20] sm:$0xff]
      %v4192 = vld [vmem:[%s4186 + $0x28] sm:$0xff]
      %v4193 = vld [vmem:[%s4186 + $0x30] sm:$0xff]
      %v4194 = vld [vmem:[%s4186 + $0x38] sm:$0xff]
      %v4195 = vld [vmem:[%s4186 + $0x40] sm:$0xff]
      %v4196 = vld [vmem:[%s4186 + $0x48] sm:$0xff]
      %v4197 = vld [vmem:[%s4186 + $0x50] sm:$0xff]
      %v4198 = vld [vmem:[%s4186 + $0x58] sm:$0xff]
      %v4199 = vld [vmem:[%s4186 + $0x60] sm:$0xff]
      %v4200 = vld [vmem:[%s4186 + $0x68] sm:$0xff]
      %v4201 = vld [vmem:[%s4186 + $0x70] sm:$0xff]
      %v4202 = vld [vmem:[%s4186 + $0x78] sm:$0xff]
      %v4203 = vld [vmem:[%s4186 + $0x80] sm:$0xff]
      %v4204 = vld [vmem:[%s4186 + $0x88] sm:$0xff]
      %v4205 = vsel %vm1584, %v249, 0
      %v4207 = vsel %vm1584, %v252, 0
      %v4209 = vsel %vm1584, %v255, 0
      %v4211 = vsel %vm1584, %v258, 0
      %v4213 = vsel %vm1584, %v261, 0
      %v4215 = vsel %vm1584, %v264, 0
      %v4217 = vsel %vm1584, %v267, 0
      %v4219 = vsel %vm1584, %v270, 0
      %v4221 = vsel %vm1584, %v273, 0
      %v4223 = vsel %vm1584, %v276, 0
      %v4225 = vsel %vm1584, %v279, 0
      %v4227 = vsel %vm1584, %v282, 0
      %v4229 = vsel %vm1584, %v285, 0
      %v4231 = vsel %vm1584, %v286, 0
      %v4233 = vsel %vm1584, %v288, 0
      %v4235 = vsel %vm1584, %v289, 0
      %v4237 = vsel %vm1584, %v291, 0
      %v4239 = vsel %vm1584, %v292, 0
      %v4241 = vsel %vm1584, %v294, 0
      %v4243 = vsel %vm1584, %v295, 0
      %4245 = vmatprep.subr.mxu0 0.0
      %4246 = vmatpush1.msra.mxu0 %v4202
      %4247 = vmatprep.subr.mxu0 0.0
      %4248 = vmatpush1.msra.mxu0 %v4201
      %4249 = vmatprep.subr.mxu0 0.0
      %4250 = vmatpush1.msra.mxu0 %v4200
      %4251 = vmatprep.subr.mxu0 0.0
      %4252 = vmatpush1.msra.mxu0 %v4199
      %4253 = vmatprep.subr.mxu0 0.0
      %4254 = vmatpush1.msra.mxu0 %v4198
      %4255 = vmatprep.subr.mxu0 0.0
      %4256 = vmatpush1.msra.mxu0 %v4197
      %4257 = vmatprep.subr.mxu0 0.0
      %4258 = vmatpush1.msra.mxu0 %v4196
      %4259 = vmatprep.subr.mxu0 0.0
      %4260 = vmatpush1.msra.mxu0 %v4195
      %4261 = vmatprep.subr.mxu0 0.0
      %4262 = vmatpush1.msra.mxu0 %v4194
      %4263 = vmatprep.subr.mxu0 0.0
      %4264 = vmatpush1.msra.mxu0 %v4193
      %4265 = vmatprep.subr.mxu0 0.0
      %4266 = vmatpush1.msra.mxu0 %v4192
      %4267 = vmatprep.subr.mxu0 0.0
      %4268 = vmatpush1.msra.mxu0 %v4191
      %4269 = vmatprep.subr.mxu0 0.0
      %4270 = vmatpush1.msra.mxu0 %v4190
      %4271 = vmatprep.subr.mxu0 0.0
      %4272 = vmatpush1.msra.mxu0 %v4189
      %4273 = vmatprep.subr.mxu0 0.0
      %4274 = vmatpush1.msra.mxu0 %v4188
      %4275 = vmatprep.subr.mxu0 0.0
      %4276 = vmatpush1.msra.mxu0 %v4187
      %4277 = vmatprep.subr.mxu0 0.0
      %4278 = vmatpush2.msra.mxu0 0.0
      %4279 = vmatprep.subr.mxu0 0.0
      %4280 = vmatpush2.msra.mxu0 0.0
      %4281 = vmatprep.subr.mxu0 0.0
      %4282 = vmatpush2.msra.mxu0 0.0
      %4283 = vmatprep.subr.mxu0 0.0
      %4284 = vmatpush2.msra.mxu0 0.0
      %4285 = vmatprep.subr.mxu0 0.0
      %4286 = vmatpush2.msra.mxu0 0.0
      %4287 = vmatprep.subr.mxu0 0.0
      %4288 = vmatpush2.msra.mxu0 0.0
      %4289 = vmatprep.subr.mxu0 0.0
      %4290 = vmatpush2.msra.mxu0 0.0
      %4291 = vmatprep.subr.mxu0 0.0
      %4292 = vmatpush2.msra.mxu0 0.0
      %4293 = vmatprep.subr.mxu0 0.0
      %4294 = vmatpush2.msra.mxu0 0.0
      %4295 = vmatprep.subr.mxu0 0.0
      %4296 = vmatpush2.msra.mxu0 0.0
      %4297 = vmatprep.subr.mxu0 0.0
      %4298 = vmatpush2.msra.mxu0 0.0
      %4299 = vmatprep.subr.mxu0 0.0
      %4300 = vmatpush2.msra.mxu0 0.0
      %4301 = vmatprep.subr.mxu0 0.0
      %4302 = vmatpush2.msra.mxu0 0.0
      %4303 = vmatprep.subr.mxu0 0.0
      %4304 = vmatpush2.msra.mxu0 0.0
      %4305 = vmatprep.subr.mxu0 0.0
      %4306 = vmatpush2.msra.mxu0 %v4204
      %4307 = vmatprep.subr.mxu0 0.0
      %4308 = vmatpush2.msra.mxu0 %v4203
      %4309 = vmatprep.mubr.f32.mxu0 %v4205
      %4310 = vmatmul.mubr.f32.gmra.mxu0 %v4154
      %v4311 = vpop.f32.mrf.mxu0
      %v4312 = vadd.f32 0.0, %v4311
      %v4313 = vpop.f32.mrf.mxu0
      %4314 = vmatprep.mubr.f32.mxu0 %v1849
      %4315 = vmatmul.mubr.f32.gmra.mxu0 %v4155
      %v4316 = vpop.f32.mrf.mxu0
      %v4317 = vadd.f32 0.0, %v4316
      %v4318 = vpop.f32.mrf.mxu0
      %4319 = vmatprep.mubr.f32.mxu0 %v4207
      %4320 = vmatmul.mubr.f32.gmra.mxu0 %v4156
      %v4321 = vpop.f32.mrf.mxu0
      %v4322 = vadd.f32 0.0, %v4321
      %v4323 = vpop.f32.mrf.mxu0
      %4324 = vmatprep.mubr.f32.mxu0 %v1853
      %4325 = vmatmul.mubr.f32.gmra.mxu0 %v4157
      %v4326 = vpop.f32.mrf.mxu0
      %v4327 = vadd.f32 0.0, %v4326
      %v4328 = vpop.f32.mrf.mxu0
      %4329 = vmatprep.mubr.f32.mxu0 %v4209
      %4330 = vmatmul.mubr.f32.gmra.mxu0 %v4158
      %v4331 = vpop.f32.mrf.mxu0
      %v4332 = vadd.f32 0.0, %v4331
      %v4333 = vpop.f32.mrf.mxu0
      %4334 = vmatprep.mubr.f32.mxu0 %v1857
      %4335 = vmatmul.mubr.f32.gmra.mxu0 %v4159
      %v4336 = vpop.f32.mrf.mxu0
      %v4337 = vadd.f32 0.0, %v4336
      %v4338 = vpop.f32.mrf.mxu0
      %4339 = vmatprep.mubr.f32.mxu0 %v4211
      %4340 = vmatmul.mubr.f32.gmra.mxu0 %v4160
      %v4341 = vpop.f32.mrf.mxu0
      %v4342 = vadd.f32 0.0, %v4341
      %v4343 = vpop.f32.mrf.mxu0
      %4344 = vmatprep.mubr.f32.mxu0 %v1861
      %4345 = vmatmul.mubr.f32.gmra.mxu0 %v4161
      %v4346 = vpop.f32.mrf.mxu0
      %v4347 = vadd.f32 0.0, %v4346
      %v4348 = vpop.f32.mrf.mxu0
      %4349 = vmatprep.mubr.f32.mxu0 %v4213
      %4350 = vmatmul.mubr.f32.gmra.mxu0 %v4162
      %v4351 = vpop.f32.mrf.mxu0
      %v4352 = vadd.f32 0.0, %v4351
      %v4353 = vpop.f32.mrf.mxu0
      %4354 = vmatprep.mubr.f32.mxu0 %v1865
      %4355 = vmatmul.mubr.f32.gmra.mxu0 %v4163
      %v4356 = vpop.f32.mrf.mxu0
      %v4357 = vadd.f32 0.0, %v4356
      %v4358 = vpop.f32.mrf.mxu0
      %4359 = vmatprep.mubr.f32.mxu0 %v4215
      %4360 = vmatmul.mubr.f32.gmra.mxu0 %v4164
      %v4361 = vpop.f32.mrf.mxu0
      %v4362 = vadd.f32 0.0, %v4361
      %v4363 = vpop.f32.mrf.mxu0
      %4364 = vmatprep.mubr.f32.mxu0 %v1869
      %4365 = vmatmul.mubr.f32.gmra.mxu0 %v4165
      %v4366 = vpop.f32.mrf.mxu0
      %v4367 = vadd.f32 0.0, %v4366
      %v4368 = vpop.f32.mrf.mxu0
      %4369 = vmatprep.mubr.f32.mxu0 %v4217
      %4370 = vmatmul.mubr.f32.gmra.mxu0 %v4166
      %v4371 = vpop.f32.mrf.mxu0
      %v4372 = vadd.f32 0.0, %v4371
      %v4373 = vpop.f32.mrf.mxu0
      %4374 = vmatprep.mubr.f32.mxu0 %v1873
      %4375 = vmatmul.mubr.f32.gmra.mxu0 %v4167
      %v4376 = vpop.f32.mrf.mxu0
      %v4377 = vadd.f32 0.0, %v4376
      %v4378 = vpop.f32.mrf.mxu0
      %4379 = vmatprep.mubr.f32.mxu0 %v4219
      %4380 = vmatmul.mubr.f32.gmra.mxu0 %v4168
      %v4381 = vpop.f32.mrf.mxu0
      %v4382 = vadd.f32 0.0, %v4381
      %v4383 = vpop.f32.mrf.mxu0
      %4384 = vmatprep.mubr.f32.mxu0 %v1877
      %4385 = vmatmul.mubr.f32.gmra.mxu0 %v4169
      %v4386 = vpop.f32.mrf.mxu0
      %v4387 = vadd.f32 0.0, %v4386
      %v4388 = vpop.f32.mrf.mxu0
      %4389 = vmatprep.mubr.f32.mxu0 %v4221
      %4390 = vmatmul.mubr.f32.gmra.mxu0 %v4170
      %v4391 = vpop.f32.mrf.mxu0
      %v4392 = vadd.f32 0.0, %v4391
      %v4393 = vpop.f32.mrf.mxu0
      %4394 = vmatprep.mubr.f32.mxu0 %v1881
      %4395 = vmatmul.mubr.f32.gmra.mxu0 %v4171
      %v4396 = vpop.f32.mrf.mxu0
      %v4397 = vadd.f32 0.0, %v4396
      %v4398 = vpop.f32.mrf.mxu0
      %4399 = vmatprep.mubr.f32.mxu0 %v4223
      %4400 = vmatmul.mubr.f32.gmra.mxu0 %v4172
      %v4401 = vpop.f32.mrf.mxu0
      %v4402 = vadd.f32 0.0, %v4401
      %v4403 = vpop.f32.mrf.mxu0
      %4404 = vmatprep.mubr.f32.mxu0 %v1885
      %4405 = vmatmul.mubr.f32.gmra.mxu0 %v4173
      %v4406 = vpop.f32.mrf.mxu0
      %v4407 = vadd.f32 0.0, %v4406
      %v4408 = vpop.f32.mrf.mxu0
      %4409 = vmatprep.mubr.f32.mxu0 %v4225
      %4410 = vmatmul.mubr.f32.gmra.mxu0 %v4174
      %v4411 = vpop.f32.mrf.mxu0
      %v4412 = vadd.f32 0.0, %v4411
      %v4413 = vpop.f32.mrf.mxu0
      %4414 = vmatprep.mubr.f32.mxu0 %v1889
      %4415 = vmatmul.mubr.f32.gmra.mxu0 %v4175
      %v4416 = vpop.f32.mrf.mxu0
      %v4417 = vadd.f32 0.0, %v4416
      %v4418 = vpop.f32.mrf.mxu0
      %4419 = vmatprep.mubr.f32.mxu0 %v4227
      %4420 = vmatmul.mubr.f32.gmra.mxu0 %v4176
      %v4421 = vpop.f32.mrf.mxu0
      %v4422 = vadd.f32 0.0, %v4421
      %v4423 = vpop.f32.mrf.mxu0
      %4424 = vmatprep.mubr.f32.mxu0 %v1893
      %4425 = vmatmul.mubr.f32.gmra.mxu0 %v4177
      %v4426 = vpop.f32.mrf.mxu0
      %v4427 = vadd.f32 0.0, %v4426
      %v4428 = vpop.f32.mrf.mxu0
      %4429 = vmatprep.mubr.f32.mxu0 %v4229
      %4430 = vmatmul.mubr.f32.gmra.mxu0 %v4178
      %v4431 = vpop.f32.mrf.mxu0
      %v4432 = vadd.f32 0.0, %v4431
      %v4433 = vpop.f32.mrf.mxu0
      %4434 = vmatprep.mubr.f32.mxu0 %v4231
      %4435 = vmatmul.mubr.f32.gmra.mxu0 %v4179
      %v4436 = vpop.f32.mrf.mxu0
      %v4437 = vadd.f32 0.0, %v4436
      %v4438 = vpop.f32.mrf.mxu0
      %4439 = vmatprep.mubr.f32.mxu0 %v4233
      %4440 = vmatmul.mubr.f32.gmra.mxu0 %v4180
      %v4441 = vpop.f32.mrf.mxu0
      %v4442 = vadd.f32 0.0, %v4441
      %v4443 = vpop.f32.mrf.mxu0
      %4444 = vmatprep.mubr.f32.mxu0 %v4235
      %4445 = vmatmul.mubr.f32.gmra.mxu0 %v4181
      %v4446 = vpop.f32.mrf.mxu0
      %v4447 = vadd.f32 0.0, %v4446
      %v4448 = vpop.f32.mrf.mxu0
      %4449 = vmatprep.mubr.f32.mxu0 %v4237
      %4450 = vmatmul.mubr.f32.gmra.mxu0 %v4182
      %v4451 = vpop.f32.mrf.mxu0
      %v4452 = vadd.f32 0.0, %v4451
      %v4453 = vpop.f32.mrf.mxu0
      %4454 = vmatprep.mubr.f32.mxu0 %v4239
      %4455 = vmatmul.mubr.f32.gmra.mxu0 %v4183
      %v4456 = vpop.f32.mrf.mxu0
      %v4457 = vadd.f32 0.0, %v4456
      %v4458 = vpop.f32.mrf.mxu0
      %4459 = vmatprep.mubr.f32.mxu0 %v4241
      %4460 = vmatmul.mubr.f32.gmra.mxu0 %v4184
      %v4461 = vpop.f32.mrf.mxu0
      %v4462 = vadd.f32 0.0, %v4461
      %v4463 = vpop.f32.mrf.mxu0
      %4464 = vmatprep.mubr.f32.mxu0 %v4243
      %4465 = vmatmul.mubr.f32.gmra.mxu0 %v4185
      %v4466 = vpop.f32.mrf.mxu0
      %v4467 = vadd.f32 0.0, %v4466
      %v4468 = vpop.f32.mrf.mxu0
      %4469 = vdwg.mxu0
      %4470 = vrot.lane.b32.xlu0 %v3373, 16
      %v4471 = vpop.permute.xlu0 %4470
      %4472 = vrot.lane.b32.xlu0 %v3375, 16
      %v4473 = vpop.permute.xlu0 %4472
      %4474 = vrot.lane.b32.xlu0 %v3378, 16
      %v4475 = vpop.permute.xlu0 %4474
      %4476 = vrot.lane.b32.xlu0 %v3380, 16
      %v4477 = vpop.permute.xlu0 %4476
      %4478 = vrot.lane.b32.xlu0 %v3383, 16
      %v4479 = vpop.permute.xlu0 %4478
      %4480 = vrot.lane.b32.xlu0 %v3385, 16
      %v4481 = vpop.permute.xlu0 %4480
      %4488 = vrot.lane.b32.xlu0 %v3363, 32
      %v4489 = vpop.permute.xlu0 %4488
      %4490 = vrot.lane.b32.xlu0 %v3365, 32
      %v4491 = vpop.permute.xlu0 %4490
      %4492 = vrot.lane.b32.xlu0 %v3368, 32
      %v4493 = vpop.permute.xlu0 %4492
      %4494 = vrot.lane.b32.xlu0 %v3370, 32
      %v4495 = vpop.permute.xlu0 %4494
      %4500 = vrot.lane.b32.xlu0 %v3358, 48
      %v4501 = vpop.permute.xlu0 %4500
      %4502 = vrot.lane.b32.xlu0 %v3360, 48
      %v4503 = vpop.permute.xlu0 %4502
      %4506 = vrot.lane.b32.xlu0 %v3353, 80
      %v4507 = vpop.permute.xlu0 %4506
      %4508 = vrot.lane.b32.xlu0 %v3355, 80
      %v4509 = vpop.permute.xlu0 %4508
      %4512 = vrot.lane.b32.xlu0 %v3343, 96
      %v4513 = vpop.permute.xlu0 %4512
      %4514 = vrot.lane.b32.xlu0 %v3345, 96
      %v4515 = vpop.permute.xlu0 %4514
      %4516 = vrot.lane.b32.xlu0 %v3348, 96
      %v4517 = vpop.permute.xlu0 %4516
      %4518 = vrot.lane.b32.xlu0 %v3350, 96
      %v4519 = vpop.permute.xlu0 %4518
      %4524 = vrot.lane.b32.xlu0 %v3328, 112
      %v4525 = vpop.permute.xlu0 %4524
      %4526 = vrot.lane.b32.xlu0 %v3330, 112
      %v4527 = vpop.permute.xlu0 %4526
      %4528 = vrot.lane.b32.xlu0 %v3333, 112
      %v4529 = vpop.permute.xlu0 %4528
      %4530 = vrot.lane.b32.xlu0 %v3335, 112
      %v4531 = vpop.permute.xlu0 %4530
      %4532 = vrot.lane.b32.xlu0 %v3338, 112
      %v4533 = vpop.permute.xlu0 %4532
      %4534 = vrot.lane.b32.xlu0 %v3340, 112
      %v4535 = vpop.permute.xlu0 %4534
      %v4542 = vsel %vm1584, %v249, %v925
      %v4543 = vsel %vm1584, %v250, %v927
      %v4544 = vsel %vm1584, %v252, %v929
      %v4545 = vsel %vm1584, %v253, %v931
      %v4546 = vsel %vm1584, %v255, %v933
      %v4547 = vsel %vm1584, %v256, %v935
      %v4548 = vsel %vm1584, %v258, %v937
      %v4549 = vsel %vm1584, %v259, %v939
      %v4550 = vsel %vm1584, %v261, %v941
      %v4551 = vsel %vm1584, %v262, %v943
      %v4552 = vsel %vm1584, %v264, %v945
      %v4553 = vsel %vm1584, %v265, %v947
      %v4554 = vsel %vm1584, %v267, %v949
      %v4555 = vsel %vm1584, %v268, %v951
      %v4556 = vsel %vm1584, %v270, %v953
      %v4557 = vsel %vm1584, %v271, %v955
      %v4558 = vsel %vm1584, %v273, %v957
      %v4559 = vsel %vm1584, %v274, %v959
      %v4560 = vsel %vm1584, %v276, %v961
      %v4561 = vsel %vm1584, %v277, %v963
      %v4562 = vsel %vm1584, %v279, %v965
      %v4563 = vsel %vm1584, %v280, %v967
      %v4564 = vsel %vm1584, %v282, %v969
      %v4565 = vsel %vm1584, %v283, %v971
      %v4566 = vsel %vm1584, %v285, %v973
      %v4567 = vsel %vm1584, %v286, %v975
      %v4568 = vsel %vm1584, %v288, %v4471
      %v4569 = vsel %vm1584, %v289, %v4473
      %v4570 = vsel %vm1584, %v291, %v4475
      %v4571 = vsel %vm1584, %v292, %v4477
      %v4572 = vsel %vm1584, %v294, %v4479
      %v4573 = vsel %vm1584, %v295, %v4481
      %v4574 = vsel %vm1617, %v4542, %v1017
      %v4575 = vsel %vm1617, %v4543, %v1019
      %v4576 = vsel %vm1617, %v4544, %v1021
      %v4577 = vsel %vm1617, %v4545, %v1023
      %v4578 = vsel %vm1617, %v4546, %v1025
      %v4579 = vsel %vm1617, %v4547, %v1027
      %v4580 = vsel %vm1617, %v4548, %v1029
      %v4581 = vsel %vm1617, %v4549, %v1031
      %v4582 = vsel %vm1617, %v4550, %v1033
      %v4583 = vsel %vm1617, %v4551, %v1035
      %v4584 = vsel %vm1617, %v4552, %v1037
      %v4585 = vsel %vm1617, %v4553, %v1039
      %v4586 = vsel %vm1617, %v4554, %v1041
      %v4587 = vsel %vm1617, %v4555, %v1043
      %v4588 = vsel %vm1617, %v4556, %v1045
      %v4589 = vsel %vm1617, %v4557, %v1047
      %v4590 = vsel %vm1617, %v4558, %v1049
      %v4591 = vsel %vm1617, %v4559, %v1051
      %v4592 = vsel %vm1617, %v4560, %v1053
      %v4593 = vsel %vm1617, %v4561, %v1055
      %v4594 = vsel %vm1617, %v4562, %v1057
      %v4595 = vsel %vm1617, %v4563, %v1059
      %v4596 = vsel %vm1617, %v4564, %v1061
      %v4597 = vsel %vm1617, %v4565, %v1063
      %v4598 = vsel %vm1617, %v4566, %v1065
      %v4599 = vsel %vm1617, %v4567, %v1067
      %v4600 = vsel %vm1617, %v4568, %v1069
      %v4601 = vsel %vm1617, %v4569, %v1071
      %v4602 = vsel %vm1617, %v4570, %v4489
      %v4603 = vsel %vm1617, %v4571, %v4491
      %v4604 = vsel %vm1617, %v4572, %v4493
      %v4605 = vsel %vm1617, %v4573, %v4495
      %v4606 = vsel %vm1650, %v4574, %v1109
      %v4607 = vsel %vm1650, %v4575, %v1111
      %v4608 = vsel %vm1650, %v4576, %v1113
      %v4609 = vsel %vm1650, %v4577, %v1115
      %v4610 = vsel %vm1650, %v4578, %v1117
      %v4611 = vsel %vm1650, %v4579, %v1119
      %v4612 = vsel %vm1650, %v4580, %v1121
      %v4613 = vsel %vm1650, %v4581, %v1123
      %v4614 = vsel %vm1650, %v4582, %v1125
      %v4615 = vsel %vm1650, %v4583, %v1127
      %v4616 = vsel %vm1650, %v4584, %v1129
      %v4617 = vsel %vm1650, %v4585, %v1131
      %v4618 = vsel %vm1650, %v4586, %v1133
      %v4619 = vsel %vm1650, %v4587, %v1135
      %v4620 = vsel %vm1650, %v4588, %v1137
      %v4621 = vsel %vm1650, %v4589, %v1139
      %v4622 = vsel %vm1650, %v4590, %v1141
      %v4623 = vsel %vm1650, %v4591, %v1143
      %v4624 = vsel %vm1650, %v4592, %v1145
      %v4625 = vsel %vm1650, %v4593, %v1147
      %v4626 = vsel %vm1650, %v4594, %v1149
      %v4627 = vsel %vm1650, %v4595, %v1151
      %v4628 = vsel %vm1650, %v4596, %v1153
      %v4629 = vsel %vm1650, %v4597, %v1155
      %v4630 = vsel %vm1650, %v4598, %v1157
      %v4631 = vsel %vm1650, %v4599, %v1159
      %v4632 = vsel %vm1650, %v4600, %v1161
      %v4633 = vsel %vm1650, %v4601, %v1163
      %v4634 = vsel %vm1650, %v4602, %v1165
      %v4635 = vsel %vm1650, %v4603, %v1167
      %v4636 = vsel %vm1650, %v4604, %v4501
      %v4637 = vsel %vm1650, %v4605, %v4503
      %v4638 = vsel %vm1683, %v4606, %v1201
      %v4639 = vsel %vm1683, %v4607, %v1203
      %v4640 = vsel %vm1683, %v4608, %v1205
      %v4641 = vsel %vm1683, %v4609, %v1207
      %v4642 = vsel %vm1683, %v4610, %v1209
      %v4643 = vsel %vm1683, %v4611, %v1211
      %v4644 = vsel %vm1683, %v4612, %v1213
      %v4645 = vsel %vm1683, %v4613, %v1215
      %v4646 = vsel %vm1683, %v4614, %v1217
      %v4647 = vsel %vm1683, %v4615, %v1219
      %v4648 = vsel %vm1683, %v4616, %v1221
      %v4649 = vsel %vm1683, %v4617, %v1223
      %v4650 = vsel %vm1683, %v4618, %v1225
      %v4651 = vsel %vm1683, %v4619, %v1227
      %v4652 = vsel %vm1683, %v4620, %v1229
      %v4653 = vsel %vm1683, %v4621, %v1231
      %v4654 = vsel %vm1683, %v4622, %v1233
      %v4655 = vsel %vm1683, %v4623, %v1235
      %v4656 = vsel %vm1683, %v4624, %v1237
      %v4657 = vsel %vm1683, %v4625, %v1239
      %v4658 = vsel %vm1683, %v4626, %v1241
      %v4659 = vsel %vm1683, %v4627, %v1243
      %v4660 = vsel %vm1683, %v4628, %v1245
      %v4661 = vsel %vm1683, %v4629, %v1247
      %v4662 = vsel %vm1683, %v4630, %v1249
      %v4663 = vsel %vm1683, %v4631, %v1251
      %v4664 = vsel %vm1683, %v4632, %v1253
      %v4665 = vsel %vm1683, %v4633, %v1255
      %v4666 = vsel %vm1683, %v4634, %v1257
      %v4667 = vsel %vm1683, %v4635, %v1259
      %v4668 = vsel %vm1683, %v4636, %v1261
      %v4669 = vsel %vm1683, %v4637, %v1263
      %v4670 = vsel %vm1716, %v4638, %v4507
      %v4671 = vsel %vm1716, %v4639, %v4509
      %v4672 = vsel %vm1716, %v4640, %v1297
      %v4673 = vsel %vm1716, %v4641, %v1299
      %v4674 = vsel %vm1716, %v4642, %v1301
      %v4675 = vsel %vm1716, %v4643, %v1303
      %v4676 = vsel %vm1716, %v4644, %v1305
      %v4677 = vsel %vm1716, %v4645, %v1307
      %v4678 = vsel %vm1716, %v4646, %v1309
      %v4679 = vsel %vm1716, %v4647, %v1311
      %v4680 = vsel %vm1716, %v4648, %v1313
      %v4681 = vsel %vm1716, %v4649, %v1315
      %v4682 = vsel %vm1716, %v4650, %v1317
      %v4683 = vsel %vm1716, %v4651, %v1319
      %v4684 = vsel %vm1716, %v4652, %v1321
      %v4685 = vsel %vm1716, %v4653, %v1323
      %v4686 = vsel %vm1716, %v4654, %v1325
      %v4687 = vsel %vm1716, %v4655, %v1327
      %v4688 = vsel %vm1716, %v4656, %v1329
      %v4689 = vsel %vm1716, %v4657, %v1331
      %v4690 = vsel %vm1716, %v4658, %v1333
      %v4691 = vsel %vm1716, %v4659, %v1335
      %v4692 = vsel %vm1716, %v4660, %v1337
      %v4693 = vsel %vm1716, %v4661, %v1339
      %v4694 = vsel %vm1716, %v4662, %v1341
      %v4695 = vsel %vm1716, %v4663, %v1343
      %v4696 = vsel %vm1716, %v4664, %v1345
      %v4697 = vsel %vm1716, %v4665, %v1347
      %v4698 = vsel %vm1716, %v4666, %v1349
      %v4699 = vsel %vm1716, %v4667, %v1351
      %v4700 = vsel %vm1716, %v4668, %v1353
      %v4701 = vsel %vm1716, %v4669, %v1355
      %v4702 = vsel %vm1749, %v4670, %v4513
      %v4703 = vsel %vm1749, %v4671, %v4515
      %v4704 = vsel %vm1749, %v4672, %v4517
      %v4705 = vsel %vm1749, %v4673, %v4519
      %v4706 = vsel %vm1749, %v4674, %v1393
      %v4707 = vsel %vm1749, %v4675, %v1395
      %v4708 = vsel %vm1749, %v4676, %v1397
      %v4709 = vsel %vm1749, %v4677, %v1399
      %v4710 = vsel %vm1749, %v4678, %v1401
      %v4711 = vsel %vm1749, %v4679, %v1403
      %v4712 = vsel %vm1749, %v4680, %v1405
      %v4713 = vsel %vm1749, %v4681, %v1407
      %v4714 = vsel %vm1749, %v4682, %v1409
      %v4715 = vsel %vm1749, %v4683, %v1411
      %v4716 = vsel %vm1749, %v4684, %v1413
      %v4717 = vsel %vm1749, %v4685, %v1415
      %v4718 = vsel %vm1749, %v4686, %v1417
      %v4719 = vsel %vm1749, %v4687, %v1419
      %v4720 = vsel %vm1749, %v4688, %v1421
      %v4721 = vsel %vm1749, %v4689, %v1423
      %v4722 = vsel %vm1749, %v4690, %v1425
      %v4723 = vsel %vm1749, %v4691, %v1427
      %v4724 = vsel %vm1749, %v4692, %v1429
      %v4725 = vsel %vm1749, %v4693, %v1431
      %v4726 = vsel %vm1749, %v4694, %v1433
      %v4727 = vsel %vm1749, %v4695, %v1435
      %v4728 = vsel %vm1749, %v4696, %v1437
      %v4729 = vsel %vm1749, %v4697, %v1439
      %v4730 = vsel %vm1749, %v4698, %v1441
      %v4731 = vsel %vm1749, %v4699, %v1443
      %v4732 = vsel %vm1749, %v4700, %v1445
      %v4733 = vsel %vm1749, %v4701, %v1447
      %v4734 = vsel %vm1782, %v4702, %v4525
      %v4735 = vsel %vm1782, %v4703, %v4527
      %v4736 = vsel %vm1782, %v4704, %v4529
      %v4737 = vsel %vm1782, %v4705, %v4531
      %v4738 = vsel %vm1782, %v4706, %v4533
      %v4739 = vsel %vm1782, %v4707, %v4535
      %v4740 = vsel %vm1782, %v4708, %v1489
      %v4741 = vsel %vm1782, %v4709, %v1491
      %v4742 = vsel %vm1782, %v4710, %v1493
      %v4743 = vsel %vm1782, %v4711, %v1495
      %v4744 = vsel %vm1782, %v4712, %v1497
      %v4745 = vsel %vm1782, %v4713, %v1499
      %v4746 = vsel %vm1782, %v4714, %v1501
      %v4747 = vsel %vm1782, %v4715, %v1503
      %v4748 = vsel %vm1782, %v4716, %v1505
      %v4749 = vsel %vm1782, %v4717, %v1507
      %v4750 = vsel %vm1782, %v4718, %v1509
      %v4751 = vsel %vm1782, %v4719, %v1511
      %v4752 = vsel %vm1782, %v4720, %v1513
      %v4753 = vsel %vm1782, %v4721, %v1515
      %v4754 = vsel %vm1782, %v4722, %v1517
      %v4755 = vsel %vm1782, %v4723, %v1519
      %v4756 = vsel %vm1782, %v4724, %v1521
      %v4757 = vsel %vm1782, %v4725, %v1523
      %v4758 = vsel %vm1782, %v4726, %v1525
      %v4759 = vsel %vm1782, %v4727, %v1527
      %v4760 = vsel %vm1782, %v4728, %v1529
      %v4761 = vsel %vm1782, %v4729, %v1531
      %v4762 = vsel %vm1782, %v4730, %v1533
      %v4763 = vsel %vm1782, %v4731, %v1535
      %v4764 = vsel %vm1782, %v4732, %v1537
      %v4765 = vsel %vm1782, %v4733, %v1539
      %s4766 = scalar_lea.vmem %s1, 432
      %v4767 = vld [vmem:[%s4766] sm:$0xff]
      %v4768 = vld [vmem:[%s4766 + $0x8] sm:$0xff]
      %v4769 = vld [vmem:[%s4766 + $0x10] sm:$0xff]
      %v4770 = vld [vmem:[%s4766 + $0x18] sm:$0xff]
      %v4771 = vld [vmem:[%s4766 + $0x20] sm:$0xff]
      %v4772 = vld [vmem:[%s4766 + $0x28] sm:$0xff]
      %v4773 = vld [vmem:[%s4766 + $0x30] sm:$0xff]
      %v4774 = vld [vmem:[%s4766 + $0x38] sm:$0xff]
      %v4775 = vld [vmem:[%s4766 + $0x40] sm:$0xff]
      %v4776 = vld [vmem:[%s4766 + $0x48] sm:$0xff]
      %v4777 = vld [vmem:[%s4766 + $0x50] sm:$0xff]
      %v4778 = vld [vmem:[%s4766 + $0x58] sm:$0xff]
      %v4779 = vld [vmem:[%s4766 + $0x60] sm:$0xff]
      %v4780 = vld [vmem:[%s4766 + $0x68] sm:$0xff]
      %v4781 = vld [vmem:[%s4766 + $0x70] sm:$0xff]
      %v4782 = vld [vmem:[%s4766 + $0x78] sm:$0xff]
      %v4783 = vld [vmem:[%s4766 + $0x80] sm:$0xff]
      %v4784 = vld [vmem:[%s4766 + $0x88] sm:$0xff]
      %v4785 = vsel %vm1584, %v226, 0
      %v4787 = vsel %vm1584, %v227, 0
      %v4789 = vsel %vm1584, %v229, 0
      %v4791 = vsel %vm1584, %v230, 0
      %v4793 = vsel %vm1584, %v232, 0
      %v4795 = vsel %vm1584, %v233, 0
      %v4797 = vsel %vm1584, %v235, 0
      %v4799 = vsel %vm1584, %v236, 0
      %4801 = vmatprep.subr.mxu0 0.0
      %4802 = vmatpush1.msra.mxu0 %v4782
      %4803 = vmatprep.subr.mxu0 0.0
      %4804 = vmatpush1.msra.mxu0 %v4781
      %4805 = vmatprep.subr.mxu0 0.0
      %4806 = vmatpush1.msra.mxu0 %v4780
      %4807 = vmatprep.subr.mxu0 0.0
      %4808 = vmatpush1.msra.mxu0 %v4779
      %4809 = vmatprep.subr.mxu0 0.0
      %4810 = vmatpush1.msra.mxu0 %v4778
      %4811 = vmatprep.subr.mxu0 0.0
      %4812 = vmatpush1.msra.mxu0 %v4777
      %4813 = vmatprep.subr.mxu0 0.0
      %4814 = vmatpush1.msra.mxu0 %v4776
      %4815 = vmatprep.subr.mxu0 0.0
      %4816 = vmatpush1.msra.mxu0 %v4775
      %4817 = vmatprep.subr.mxu0 0.0
      %4818 = vmatpush1.msra.mxu0 %v4774
      %4819 = vmatprep.subr.mxu0 0.0
      %4820 = vmatpush1.msra.mxu0 %v4773
      %4821 = vmatprep.subr.mxu0 0.0
      %4822 = vmatpush1.msra.mxu0 %v4772
      %4823 = vmatprep.subr.mxu0 0.0
      %4824 = vmatpush1.msra.mxu0 %v4771
      %4825 = vmatprep.subr.mxu0 0.0
      %4826 = vmatpush1.msra.mxu0 %v4770
      %4827 = vmatprep.subr.mxu0 0.0
      %4828 = vmatpush1.msra.mxu0 %v4769
      %4829 = vmatprep.subr.mxu0 0.0
      %4830 = vmatpush1.msra.mxu0 %v4768
      %4831 = vmatprep.subr.mxu0 0.0
      %4832 = vmatpush1.msra.mxu0 %v4767
      %4833 = vmatprep.subr.mxu0 0.0
      %4834 = vmatpush2.msra.mxu0 0.0
      %4835 = vmatprep.subr.mxu0 0.0
      %4836 = vmatpush2.msra.mxu0 0.0
      %4837 = vmatprep.subr.mxu0 0.0
      %4838 = vmatpush2.msra.mxu0 0.0
      %4839 = vmatprep.subr.mxu0 0.0
      %4840 = vmatpush2.msra.mxu0 0.0
      %4841 = vmatprep.subr.mxu0 0.0
      %4842 = vmatpush2.msra.mxu0 0.0
      %4843 = vmatprep.subr.mxu0 0.0
      %4844 = vmatpush2.msra.mxu0 0.0
      %4845 = vmatprep.subr.mxu0 0.0
      %4846 = vmatpush2.msra.mxu0 0.0
      %4847 = vmatprep.subr.mxu0 0.0
      %4848 = vmatpush2.msra.mxu0 0.0
      %4849 = vmatprep.subr.mxu0 0.0
      %4850 = vmatpush2.msra.mxu0 0.0
      %4851 = vmatprep.subr.mxu0 0.0
      %4852 = vmatpush2.msra.mxu0 0.0
      %4853 = vmatprep.subr.mxu0 0.0
      %4854 = vmatpush2.msra.mxu0 0.0
      %4855 = vmatprep.subr.mxu0 0.0
      %4856 = vmatpush2.msra.mxu0 0.0
      %4857 = vmatprep.subr.mxu0 0.0
      %4858 = vmatpush2.msra.mxu0 0.0
      %4859 = vmatprep.subr.mxu0 0.0
      %4860 = vmatpush2.msra.mxu0 0.0
      %4861 = vmatprep.subr.mxu0 0.0
      %4862 = vmatpush2.msra.mxu0 %v4784
      %4863 = vmatprep.subr.mxu0 0.0
      %4864 = vmatpush2.msra.mxu0 %v4783
      %4865 = vmatprep.mubr.f32.mxu0 %v4785
      %4866 = vmatmul.mubr.f32.gmra.mxu0 %v4734
      %v4867 = vpop.f32.mrf.mxu0
      %v4868 = vadd.f32 0.0, %v4867
      %v4869 = vpop.f32.mrf.mxu0
      %4870 = vmatprep.mubr.f32.mxu0 %v4787
      %4871 = vmatmul.mubr.f32.gmra.mxu0 %v4735
      %v4872 = vpop.f32.mrf.mxu0
      %v4873 = vadd.f32 0.0, %v4872
      %v4874 = vpop.f32.mrf.mxu0
      %4875 = vmatprep.mubr.f32.mxu0 %v4789
      %4876 = vmatmul.mubr.f32.gmra.mxu0 %v4736
      %v4877 = vpop.f32.mrf.mxu0
      %v4878 = vadd.f32 0.0, %v4877
      %v4879 = vpop.f32.mrf.mxu0
      %4880 = vmatprep.mubr.f32.mxu0 %v4791
      %4881 = vmatmul.mubr.f32.gmra.mxu0 %v4737
      %v4882 = vpop.f32.mrf.mxu0
      %v4883 = vadd.f32 0.0, %v4882
      %v4884 = vpop.f32.mrf.mxu0
      %4885 = vmatprep.mubr.f32.mxu0 %v4793
      %4886 = vmatmul.mubr.f32.gmra.mxu0 %v4738
      %v4887 = vpop.f32.mrf.mxu0
      %v4888 = vadd.f32 0.0, %v4887
      %v4889 = vpop.f32.mrf.mxu0
      %4890 = vmatprep.mubr.f32.mxu0 %v4795
      %4891 = vmatmul.mubr.f32.gmra.mxu0 %v4739
      %v4892 = vpop.f32.mrf.mxu0
      %v4893 = vadd.f32 0.0, %v4892
      %v4894 = vpop.f32.mrf.mxu0
      %4895 = vmatprep.mubr.f32.mxu0 %v4797
      %4896 = vmatmul.mubr.f32.gmra.mxu0 %v4740
      %v4897 = vpop.f32.mrf.mxu0
      %v4898 = vadd.f32 0.0, %v4897
      %v4899 = vpop.f32.mrf.mxu0
      %4900 = vmatprep.mubr.f32.mxu0 %v4799
      %4901 = vmatmul.mubr.f32.gmra.mxu0 %v4741
      %v4902 = vpop.f32.mrf.mxu0
      %v4903 = vadd.f32 0.0, %v4902
      %v4904 = vpop.f32.mrf.mxu0
      %4905 = vmatprep.mubr.f32.mxu0 %v1833
      %4906 = vmatmul.mubr.f32.gmra.mxu0 %v4742
      %v4907 = vpop.f32.mrf.mxu0
      %v4908 = vadd.f32 0.0, %v4907
      %v4909 = vpop.f32.mrf.mxu0
      %4910 = vmatprep.mubr.f32.mxu0 %v1835
      %4911 = vmatmul.mubr.f32.gmra.mxu0 %v4743
      %v4912 = vpop.f32.mrf.mxu0
      %v4913 = vadd.f32 0.0, %v4912
      %v4914 = vpop.f32.mrf.mxu0
      %4915 = vmatprep.mubr.f32.mxu0 %v1837
      %4916 = vmatmul.mubr.f32.gmra.mxu0 %v4744
      %v4917 = vpop.f32.mrf.mxu0
      %v4918 = vadd.f32 0.0, %v4917
      %v4919 = vpop.f32.mrf.mxu0
      %4920 = vmatprep.mubr.f32.mxu0 %v1839
      %4921 = vmatmul.mubr.f32.gmra.mxu0 %v4745
      %v4922 = vpop.f32.mrf.mxu0
      %v4923 = vadd.f32 0.0, %v4922
      %v4924 = vpop.f32.mrf.mxu0
      %4925 = vmatprep.mubr.f32.mxu0 %v1841
      %4926 = vmatmul.mubr.f32.gmra.mxu0 %v4746
      %v4927 = vpop.f32.mrf.mxu0
      %v4928 = vadd.f32 0.0, %v4927
      %v4929 = vpop.f32.mrf.mxu0
      %4930 = vmatprep.mubr.f32.mxu0 %v1843
      %4931 = vmatmul.mubr.f32.gmra.mxu0 %v4747
      %v4932 = vpop.f32.mrf.mxu0
      %v4933 = vadd.f32 0.0, %v4932
      %v4934 = vpop.f32.mrf.mxu0
      %4935 = vmatprep.mubr.f32.mxu0 %v1845
      %4936 = vmatmul.mubr.f32.gmra.mxu0 %v4748
      %v4937 = vpop.f32.mrf.mxu0
      %v4938 = vadd.f32 0.0, %v4937
      %v4939 = vpop.f32.mrf.mxu0
      %4940 = vmatprep.mubr.f32.mxu0 %v1847
      %4941 = vmatmul.mubr.f32.gmra.mxu0 %v4749
      %v4942 = vpop.f32.mrf.mxu0
      %v4943 = vadd.f32 0.0, %v4942
      %v4944 = vpop.f32.mrf.mxu0
      %4945 = vmatprep.mubr.f32.mxu0 %v1849
      %4946 = vmatmul.mubr.f32.gmra.mxu0 %v4750
      %v4947 = vpop.f32.mrf.mxu0
      %v4948 = vadd.f32 0.0, %v4947
      %v4949 = vpop.f32.mrf.mxu0
      %4950 = vmatprep.mubr.f32.mxu0 %v1851
      %4951 = vmatmul.mubr.f32.gmra.mxu0 %v4751
      %v4952 = vpop.f32.mrf.mxu0
      %v4953 = vadd.f32 0.0, %v4952
      %v4954 = vpop.f32.mrf.mxu0
      %4955 = vmatprep.mubr.f32.mxu0 %v1853
      %4956 = vmatmul.mubr.f32.gmra.mxu0 %v4752
      %v4957 = vpop.f32.mrf.mxu0
      %v4958 = vadd.f32 0.0, %v4957
      %v4959 = vpop.f32.mrf.mxu0
      %4960 = vmatprep.mubr.f32.mxu0 %v1855
      %4961 = vmatmul.mubr.f32.gmra.mxu0 %v4753
      %v4962 = vpop.f32.mrf.mxu0
      %v4963 = vadd.f32 0.0, %v4962
      %v4964 = vpop.f32.mrf.mxu0
      %4965 = vmatprep.mubr.f32.mxu0 %v1857
      %4966 = vmatmul.mubr.f32.gmra.mxu0 %v4754
      %v4967 = vpop.f32.mrf.mxu0
      %v4968 = vadd.f32 0.0, %v4967
      %v4969 = vpop.f32.mrf.mxu0
      %4970 = vmatprep.mubr.f32.mxu0 %v1859
      %4971 = vmatmul.mubr.f32.gmra.mxu0 %v4755
      %v4972 = vpop.f32.mrf.mxu0
      %v4973 = vadd.f32 0.0, %v4972
      %v4974 = vpop.f32.mrf.mxu0
      %4975 = vmatprep.mubr.f32.mxu0 %v1861
      %4976 = vmatmul.mubr.f32.gmra.mxu0 %v4756
      %v4977 = vpop.f32.mrf.mxu0
      %v4978 = vadd.f32 0.0, %v4977
      %v4979 = vpop.f32.mrf.mxu0
      %4980 = vmatprep.mubr.f32.mxu0 %v1863
      %4981 = vmatmul.mubr.f32.gmra.mxu0 %v4757
      %v4982 = vpop.f32.mrf.mxu0
      %v4983 = vadd.f32 0.0, %v4982
      %v4984 = vpop.f32.mrf.mxu0
      %4985 = vmatprep.mubr.f32.mxu0 %v1865
      %4986 = vmatmul.mubr.f32.gmra.mxu0 %v4758
      %v4987 = vpop.f32.mrf.mxu0
      %v4988 = vadd.f32 0.0, %v4987
      %v4989 = vpop.f32.mrf.mxu0
      %4990 = vmatprep.mubr.f32.mxu0 %v1867
      %4991 = vmatmul.mubr.f32.gmra.mxu0 %v4759
      %v4992 = vpop.f32.mrf.mxu0
      %v4993 = vadd.f32 0.0, %v4992
      %v4994 = vpop.f32.mrf.mxu0
      %4995 = vmatprep.mubr.f32.mxu0 %v1869
      %4996 = vmatmul.mubr.f32.gmra.mxu0 %v4760
      %v4997 = vpop.f32.mrf.mxu0
      %v4998 = vadd.f32 0.0, %v4997
      %v4999 = vpop.f32.mrf.mxu0
      %5000 = vmatprep.mubr.f32.mxu0 %v1871
      %5001 = vmatmul.mubr.f32.gmra.mxu0 %v4761
      %v5002 = vpop.f32.mrf.mxu0
      %v5003 = vadd.f32 0.0, %v5002
      %v5004 = vpop.f32.mrf.mxu0
      %5005 = vmatprep.mubr.f32.mxu0 %v1873
      %5006 = vmatmul.mubr.f32.gmra.mxu0 %v4762
      %v5007 = vpop.f32.mrf.mxu0
      %v5008 = vadd.f32 0.0, %v5007
      %v5009 = vpop.f32.mrf.mxu0
      %5010 = vmatprep.mubr.f32.mxu0 %v1875
      %5011 = vmatmul.mubr.f32.gmra.mxu0 %v4763
      %v5012 = vpop.f32.mrf.mxu0
      %v5013 = vadd.f32 0.0, %v5012
      %v5014 = vpop.f32.mrf.mxu0
      %5015 = vmatprep.mubr.f32.mxu0 %v1877
      %5016 = vmatmul.mubr.f32.gmra.mxu0 %v4764
      %v5017 = vpop.f32.mrf.mxu0
      %v5018 = vadd.f32 0.0, %v5017
      %v5019 = vpop.f32.mrf.mxu0
      %5020 = vmatprep.mubr.f32.mxu0 %v1879
      %5021 = vmatmul.mubr.f32.gmra.mxu0 %v4765
      %v5022 = vpop.f32.mrf.mxu0
      %v5023 = vadd.f32 0.0, %v5022
      %v5024 = vpop.f32.mrf.mxu0
      %5025 = vdwg.mxu0
      %5058 = vrot.lane.b32.xlu0 %v3168, 2
      %v5059 = vpop.permute.xlu0 %5058
      %5060 = vrot.lane.b32.xlu0 %v3173, 2
      %v5061 = vpop.permute.xlu0 %5060
      %5062 = vrot.lane.b32.xlu0 %v3178, 2
      %v5063 = vpop.permute.xlu0 %5062
      %5064 = vrot.lane.b32.xlu0 %v3183, 2
      %v5065 = vpop.permute.xlu0 %5064
      %5066 = vrot.lane.b32.xlu0 %v3188, 2
      %v5067 = vpop.permute.xlu0 %5066
      %5068 = vrot.lane.b32.xlu0 %v3193, 2
      %v5069 = vpop.permute.xlu0 %5068
      %5070 = vrot.lane.b32.xlu0 %v3198, 2
      %v5071 = vpop.permute.xlu0 %5070
      %5072 = vrot.lane.b32.xlu0 %v3203, 2
      %v5073 = vpop.permute.xlu0 %5072
      %5074 = vrot.lane.b32.xlu0 %v3208, 2
      %v5075 = vpop.permute.xlu0 %5074
      %5076 = vrot.lane.b32.xlu0 %v3213, 2
      %v5077 = vpop.permute.xlu0 %5076
      %5078 = vrot.lane.b32.xlu0 %v3218, 2
      %v5079 = vpop.permute.xlu0 %5078
      %5080 = vrot.lane.b32.xlu0 %v3223, 2
      %v5081 = vpop.permute.xlu0 %5080
      %5082 = vrot.lane.b32.xlu0 %v3228, 2
      %v5083 = vpop.permute.xlu0 %5082
      %5084 = vrot.lane.b32.xlu0 %v3233, 2
      %v5085 = vpop.permute.xlu0 %5084
      %5086 = vrot.lane.b32.xlu0 %v3238, 2
      %v5087 = vpop.permute.xlu0 %5086
      %5088 = vrot.lane.b32.xlu0 %v3243, 2
      %v5089 = vpop.permute.xlu0 %5088
      %5090 = vrot.lane.b32.xlu0 %v3248, 2
      %v5091 = vpop.permute.xlu0 %5090
      %5092 = vrot.lane.b32.xlu0 %v3253, 2
      %v5093 = vpop.permute.xlu0 %5092
      %5094 = vrot.lane.b32.xlu0 %v3258, 2
      %v5095 = vpop.permute.xlu0 %5094
      %5096 = vrot.lane.b32.xlu0 %v3263, 2
      %v5097 = vpop.permute.xlu0 %5096
      %5098 = vrot.lane.b32.xlu0 %v3268, 2
      %v5099 = vpop.permute.xlu0 %5098
      %5100 = vrot.lane.b32.xlu0 %v3273, 2
      %v5101 = vpop.permute.xlu0 %5100
      %5102 = vrot.lane.b32.xlu0 %v3278, 2
      %v5103 = vpop.permute.xlu0 %5102
      %5104 = vrot.lane.b32.xlu0 %v3283, 2
      %v5105 = vpop.permute.xlu0 %5104
      %5106 = vrot.lane.b32.xlu0 %v3288, 2
      %v5107 = vpop.permute.xlu0 %5106
      %5108 = vrot.lane.b32.xlu0 %v3293, 2
      %v5109 = vpop.permute.xlu0 %5108
      %5110 = vrot.lane.b32.xlu0 %v3298, 2
      %v5111 = vpop.permute.xlu0 %5110
      %5112 = vrot.lane.b32.xlu0 %v3303, 2
      %v5113 = vpop.permute.xlu0 %5112
      %5114 = vrot.lane.b32.xlu0 %v3308, 2
      %v5115 = vpop.permute.xlu0 %5114
      %5116 = vrot.lane.b32.xlu0 %v3313, 2
      %v5117 = vpop.permute.xlu0 %5116
      %5118 = vrot.lane.b32.xlu0 %v3318, 2
      %v5119 = vpop.permute.xlu0 %5118
      %5120 = vrot.lane.b32.xlu0 %v3323, 2
      %v5121 = vpop.permute.xlu0 %5120
      %5186 = vrot.lane.b32.xlu0 %v4312, 4
      %v5187 = vpop.permute.xlu0 %5186
      %5188 = vrot.lane.b32.xlu0 %v4317, 4
      %v5189 = vpop.permute.xlu0 %5188
      %5190 = vrot.lane.b32.xlu0 %v4322, 4
      %v5191 = vpop.permute.xlu0 %5190
      %5192 = vrot.lane.b32.xlu0 %v4327, 4
      %v5193 = vpop.permute.xlu0 %5192
      %5194 = vrot.lane.b32.xlu0 %v4332, 4
      %v5195 = vpop.permute.xlu0 %5194
      %5196 = vrot.lane.b32.xlu0 %v4337, 4
      %v5197 = vpop.permute.xlu0 %5196
      %5198 = vrot.lane.b32.xlu0 %v4342, 4
      %v5199 = vpop.permute.xlu0 %5198
      %5200 = vrot.lane.b32.xlu0 %v4347, 4
      %v5201 = vpop.permute.xlu0 %5200
      %5202 = vrot.lane.b32.xlu0 %v4352, 4
      %v5203 = vpop.permute.xlu0 %5202
      %5204 = vrot.lane.b32.xlu0 %v4357, 4
      %v5205 = vpop.permute.xlu0 %5204
      %5206 = vrot.lane.b32.xlu0 %v4362, 4
      %v5207 = vpop.permute.xlu0 %5206
      %5208 = vrot.lane.b32.xlu0 %v4367, 4
      %v5209 = vpop.permute.xlu0 %5208
      %5210 = vrot.lane.b32.xlu0 %v4372, 4
      %v5211 = vpop.permute.xlu0 %5210
      %5212 = vrot.lane.b32.xlu0 %v4377, 4
      %v5213 = vpop.permute.xlu0 %5212
      %5214 = vrot.lane.b32.xlu0 %v4382, 4
      %v5215 = vpop.permute.xlu0 %5214
      %5216 = vrot.lane.b32.xlu0 %v4387, 4
      %v5217 = vpop.permute.xlu0 %5216
      %5218 = vrot.lane.b32.xlu0 %v4392, 4
      %v5219 = vpop.permute.xlu0 %5218
      %5220 = vrot.lane.b32.xlu0 %v4397, 4
      %v5221 = vpop.permute.xlu0 %5220
      %5222 = vrot.lane.b32.xlu0 %v4402, 4
      %v5223 = vpop.permute.xlu0 %5222
      %5224 = vrot.lane.b32.xlu0 %v4407, 4
      %v5225 = vpop.permute.xlu0 %5224
      %5226 = vrot.lane.b32.xlu0 %v4412, 4
      %v5227 = vpop.permute.xlu0 %5226
      %5228 = vrot.lane.b32.xlu0 %v4417, 4
      %v5229 = vpop.permute.xlu0 %5228
      %5230 = vrot.lane.b32.xlu0 %v4422, 4
      %v5231 = vpop.permute.xlu0 %5230
      %5232 = vrot.lane.b32.xlu0 %v4427, 4
      %v5233 = vpop.permute.xlu0 %5232
      %5234 = vrot.lane.b32.xlu0 %v4432, 4
      %v5235 = vpop.permute.xlu0 %5234
      %5236 = vrot.lane.b32.xlu0 %v4437, 4
      %v5237 = vpop.permute.xlu0 %5236
      %5238 = vrot.lane.b32.xlu0 %v4442, 4
      %v5239 = vpop.permute.xlu0 %5238
      %5240 = vrot.lane.b32.xlu0 %v4447, 4
      %v5241 = vpop.permute.xlu0 %5240
      %5242 = vrot.lane.b32.xlu0 %v4452, 4
      %v5243 = vpop.permute.xlu0 %5242
      %5244 = vrot.lane.b32.xlu0 %v4457, 4
      %v5245 = vpop.permute.xlu0 %5244
      %5246 = vrot.lane.b32.xlu0 %v4462, 4
      %v5247 = vpop.permute.xlu0 %5246
      %5248 = vrot.lane.b32.xlu0 %v4467, 4
      %v5249 = vpop.permute.xlu0 %5248
      %5314 = vrot.lane.b32.xlu0 %v4868, 6
      %v5315 = vpop.permute.xlu0 %5314
      %5316 = vrot.lane.b32.xlu0 %v4873, 6
      %v5317 = vpop.permute.xlu0 %5316
      %5318 = vrot.lane.b32.xlu0 %v4878, 6
      %v5319 = vpop.permute.xlu0 %5318
      %5320 = vrot.lane.b32.xlu0 %v4883, 6
      %v5321 = vpop.permute.xlu0 %5320
      %5322 = vrot.lane.b32.xlu0 %v4888, 6
      %v5323 = vpop.permute.xlu0 %5322
      %5324 = vrot.lane.b32.xlu0 %v4893, 6
      %v5325 = vpop.permute.xlu0 %5324
      %5326 = vrot.lane.b32.xlu0 %v4898, 6
      %v5327 = vpop.permute.xlu0 %5326
      %5328 = vrot.lane.b32.xlu0 %v4903, 6
      %v5329 = vpop.permute.xlu0 %5328
      %5330 = vrot.lane.b32.xlu0 %v4908, 6
      %v5331 = vpop.permute.xlu0 %5330
      %5332 = vrot.lane.b32.xlu0 %v4913, 6
      %v5333 = vpop.permute.xlu0 %5332
      %5334 = vrot.lane.b32.xlu0 %v4918, 6
      %v5335 = vpop.permute.xlu0 %5334
      %5336 = vrot.lane.b32.xlu0 %v4923, 6
      %v5337 = vpop.permute.xlu0 %5336
      %5338 = vrot.lane.b32.xlu0 %v4928, 6
      %v5339 = vpop.permute.xlu0 %5338
      %5340 = vrot.lane.b32.xlu0 %v4933, 6
      %v5341 = vpop.permute.xlu0 %5340
      %5342 = vrot.lane.b32.xlu0 %v4938, 6
      %v5343 = vpop.permute.xlu0 %5342
      %5344 = vrot.lane.b32.xlu0 %v4943, 6
      %v5345 = vpop.permute.xlu0 %5344
      %5346 = vrot.lane.b32.xlu0 %v4948, 6
      %v5347 = vpop.permute.xlu0 %5346
      %5348 = vrot.lane.b32.xlu0 %v4953, 6
      %v5349 = vpop.permute.xlu0 %5348
      %5350 = vrot.lane.b32.xlu0 %v4958, 6
      %v5351 = vpop.permute.xlu0 %5350
      %5352 = vrot.lane.b32.xlu0 %v4963, 6
      %v5353 = vpop.permute.xlu0 %5352
      %5354 = vrot.lane.b32.xlu0 %v4968, 6
      %v5355 = vpop.permute.xlu0 %5354
      %5356 = vrot.lane.b32.xlu0 %v4973, 6
      %v5357 = vpop.permute.xlu0 %5356
      %5358 = vrot.lane.b32.xlu0 %v4978, 6
      %v5359 = vpop.permute.xlu0 %5358
      %5360 = vrot.lane.b32.xlu0 %v4983, 6
      %v5361 = vpop.permute.xlu0 %5360
      %5362 = vrot.lane.b32.xlu0 %v4988, 6
      %v5363 = vpop.permute.xlu0 %5362
      %5364 = vrot.lane.b32.xlu0 %v4993, 6
      %v5365 = vpop.permute.xlu0 %5364
      %5366 = vrot.lane.b32.xlu0 %v4998, 6
      %v5367 = vpop.permute.xlu0 %5366
      %5368 = vrot.lane.b32.xlu0 %v5003, 6
      %v5369 = vpop.permute.xlu0 %5368
      %5370 = vrot.lane.b32.xlu0 %v5008, 6
      %v5371 = vpop.permute.xlu0 %5370
      %5372 = vrot.lane.b32.xlu0 %v5013, 6
      %v5373 = vpop.permute.xlu0 %5372
      %5374 = vrot.lane.b32.xlu0 %v5018, 6
      %v5375 = vpop.permute.xlu0 %5374
      %5376 = vrot.lane.b32.xlu0 %v5023, 6
      %v5377 = vpop.permute.xlu0 %5376
      %vm5410 = vcmask 15360
      %v5411 = vsel %vm5410, %v1964, %v5059
      %v5412 = vsel %vm5410, %v1969, %v5061
      %v5413 = vsel %vm5410, %v1974, %v5063
      %v5414 = vsel %vm5410, %v1979, %v5065
      %v5415 = vsel %vm5410, %v1984, %v5067
      %v5416 = vsel %vm5410, %v1989, %v5069
      %v5417 = vsel %vm5410, %v1994, %v5071
      %v5418 = vsel %vm5410, %v1999, %v5073
      %v5419 = vsel %vm5410, %v2004, %v5075
      %v5420 = vsel %vm5410, %v2009, %v5077
      %v5421 = vsel %vm5410, %v2014, %v5079
      %v5422 = vsel %vm5410, %v2019, %v5081
      %v5423 = vsel %vm5410, %v2024, %v5083
      %v5424 = vsel %vm5410, %v2029, %v5085
      %v5425 = vsel %vm5410, %v2034, %v5087
      %v5426 = vsel %vm5410, %v2039, %v5089
      %v5427 = vsel %vm5410, %v2044, %v5091
      %v5428 = vsel %vm5410, %v2049, %v5093
      %v5429 = vsel %vm5410, %v2054, %v5095
      %v5430 = vsel %vm5410, %v2059, %v5097
      %v5431 = vsel %vm5410, %v2064, %v5099
      %v5432 = vsel %vm5410, %v2069, %v5101
      %v5433 = vsel %vm5410, %v2074, %v5103
      %v5434 = vsel %vm5410, %v2079, %v5105
      %v5435 = vsel %vm5410, %v2084, %v5107
      %v5436 = vsel %vm5410, %v2089, %v5109
      %v5437 = vsel %vm5410, %v2094, %v5111
      %v5438 = vsel %vm5410, %v2099, %v5113
      %v5439 = vsel %vm5410, %v2104, %v5115
      %v5440 = vsel %vm5410, %v2109, %v5117
      %v5441 = vsel %vm5410, %v2114, %v5119
      %v5442 = vsel %vm5410, %v2119, %v5121
      %vm5443 = vcmask 31744
      %v5444 = vsel %vm5443, %v5411, %v5187
      %v5445 = vsel %vm5443, %v5412, %v5189
      %v5446 = vsel %vm5443, %v5413, %v5191
      %v5447 = vsel %vm5443, %v5414, %v5193
      %v5448 = vsel %vm5443, %v5415, %v5195
      %v5449 = vsel %vm5443, %v5416, %v5197
      %v5450 = vsel %vm5443, %v5417, %v5199
      %v5451 = vsel %vm5443, %v5418, %v5201
      %v5452 = vsel %vm5443, %v5419, %v5203
      %v5453 = vsel %vm5443, %v5420, %v5205
      %v5454 = vsel %vm5443, %v5421, %v5207
      %v5455 = vsel %vm5443, %v5422, %v5209
      %v5456 = vsel %vm5443, %v5423, %v5211
      %v5457 = vsel %vm5443, %v5424, %v5213
      %v5458 = vsel %vm5443, %v5425, %v5215
      %v5459 = vsel %vm5443, %v5426, %v5217
      %v5460 = vsel %vm5443, %v5427, %v5219
      %v5461 = vsel %vm5443, %v5428, %v5221
      %v5462 = vsel %vm5443, %v5429, %v5223
      %v5463 = vsel %vm5443, %v5430, %v5225
      %v5464 = vsel %vm5443, %v5431, %v5227
      %v5465 = vsel %vm5443, %v5432, %v5229
      %v5466 = vsel %vm5443, %v5433, %v5231
      %v5467 = vsel %vm5443, %v5434, %v5233
      %v5468 = vsel %vm5443, %v5435, %v5235
      %v5469 = vsel %vm5443, %v5436, %v5237
      %v5470 = vsel %vm5443, %v5437, %v5239
      %v5471 = vsel %vm5443, %v5438, %v5241
      %v5472 = vsel %vm5443, %v5439, %v5243
      %v5473 = vsel %vm5443, %v5440, %v5245
      %v5474 = vsel %vm5443, %v5441, %v5247
      %v5475 = vsel %vm5443, %v5442, %v5249
      %vm5476 = vcmask 48128
      %v5477 = vsel %vm5476, %v5444, %v5315
      %v5478 = vsel %vm5476, %v5445, %v5317
      %v5479 = vsel %vm5476, %v5446, %v5319
      %v5480 = vsel %vm5476, %v5447, %v5321
      %v5481 = vsel %vm5476, %v5448, %v5323
      %v5482 = vsel %vm5476, %v5449, %v5325
      %v5483 = vsel %vm5476, %v5450, %v5327
      %v5484 = vsel %vm5476, %v5451, %v5329
      %v5485 = vsel %vm5476, %v5452, %v5331
      %v5486 = vsel %vm5476, %v5453, %v5333
      %v5487 = vsel %vm5476, %v5454, %v5335
      %v5488 = vsel %vm5476, %v5455, %v5337
      %v5489 = vsel %vm5476, %v5456, %v5339
      %v5490 = vsel %vm5476, %v5457, %v5341
      %v5491 = vsel %vm5476, %v5458, %v5343
      %v5492 = vsel %vm5476, %v5459, %v5345
      %v5493 = vsel %vm5476, %v5460, %v5347
      %v5494 = vsel %vm5476, %v5461, %v5349
      %v5495 = vsel %vm5476, %v5462, %v5351
      %v5496 = vsel %vm5476, %v5463, %v5353
      %v5497 = vsel %vm5476, %v5464, %v5355
      %v5498 = vsel %vm5476, %v5465, %v5357
      %v5499 = vsel %vm5476, %v5466, %v5359
      %v5500 = vsel %vm5476, %v5467, %v5361
      %v5501 = vsel %vm5476, %v5468, %v5363
      %v5502 = vsel %vm5476, %v5469, %v5365
      %v5503 = vsel %vm5476, %v5470, %v5367
      %v5504 = vsel %vm5476, %v5471, %v5369
      %v5505 = vsel %vm5476, %v5472, %v5371
      %v5506 = vsel %vm5476, %v5473, %v5373
      %v5507 = vsel %vm5476, %v5474, %v5375
      %v5508 = vsel %vm5476, %v5475, %v5377
      %v5509 = vld [vmem:[%s2] sm:$0xff]
      %vm5510 = vcmask 64512
      %v5512 = vsel %vm5510, %v5477, 0
      %v5515 = vsel %vm5510, %v5478, 0
      %v5518 = vsel %vm5510, %v5479, 0
      %v5521 = vsel %vm5510, %v5480, 0
      %v5524 = vsel %vm5510, %v5481, 0
      %v5527 = vsel %vm5510, %v5482, 0
      %v5530 = vsel %vm5510, %v5483, 0
      %v5533 = vsel %vm5510, %v5484, 0
      %v5536 = vsel %vm5510, %v5485, 0
      %v5539 = vsel %vm5510, %v5486, 0
      %v5542 = vsel %vm5510, %v5487, 0
      %v5545 = vsel %vm5510, %v5488, 0
      %v5548 = vsel %vm5510, %v5489, 0
      %v5551 = vsel %vm5510, %v5490, 0
      %v5554 = vsel %vm5510, %v5491, 0
      %v5557 = vsel %vm5510, %v5492, 0
      %v5560 = vsel %vm5510, %v5493, 0
      %v5563 = vsel %vm5510, %v5494, 0
      %v5566 = vsel %vm5510, %v5495, 0
      %v5569 = vsel %vm5510, %v5496, 0
      %v5572 = vsel %vm5510, %v5497, 0
      %v5575 = vsel %vm5510, %v5498, 0
      %v5578 = vsel %vm5510, %v5499, 0
      %v5581 = vsel %vm5510, %v5500, 0
      %v5584 = vsel %vm5510, %v5501, 0
      %v5587 = vsel %vm5510, %v5502, 0
      %v5590 = vsel %vm5510, %v5503, 0
      %v5593 = vsel %vm5510, %v5504, 0
      %v5596 = vsel %vm5510, %v5505, 0
      %v5599 = vsel %vm5510, %v5506, 0
      %v5602 = vsel %vm5510, %v5507, 0
      %v5605 = vsel %vm5510, %v5508, 0
      %5607 = vmatprep.subr.mxu0 0.0
      %5608 = vmatpush1.msra.mxu0 0.0
      %5609 = vmatprep.subr.mxu0 0.0
      %5610 = vmatpush1.msra.mxu0 0.0
      %5611 = vmatprep.subr.mxu0 0.0
      %5612 = vmatpush1.msra.mxu0 0.0
      %5613 = vmatprep.subr.mxu0 0.0
      %5614 = vmatpush1.msra.mxu0 0.0
      %5615 = vmatprep.subr.mxu0 0.0
      %5616 = vmatpush1.msra.mxu0 0.0
      %5617 = vmatprep.subr.mxu0 0.0
      %5618 = vmatpush1.msra.mxu0 0.0
      %5619 = vmatprep.subr.mxu0 0.0
      %5620 = vmatpush1.msra.mxu0 0.0
      %5621 = vmatprep.subr.mxu0 0.0
      %5622 = vmatpush1.msra.mxu0 0.0
      %5623 = vmatprep.subr.mxu0 0.0
      %5624 = vmatpush1.msra.mxu0 0.0
      %5625 = vmatprep.subr.mxu0 0.0
      %5626 = vmatpush1.msra.mxu0 0.0
      %5627 = vmatprep.subr.mxu0 0.0
      %5628 = vmatpush1.msra.mxu0 0.0
      %5629 = vmatprep.subr.mxu0 0.0
      %5630 = vmatpush1.msra.mxu0 0.0
      %5631 = vmatprep.subr.mxu0 0.0
      %5632 = vmatpush1.msra.mxu0 0.0
      %5633 = vmatprep.subr.mxu0 0.0
      %5634 = vmatpush1.msra.mxu0 0.0
      %5635 = vmatprep.subr.mxu0 0.0
      %5636 = vmatpush1.msra.mxu0 0.0
      %5637 = vmatprep.subr.mxu0 0.0
      %5638 = vmatpush1.msra.mxu0 %v5509
      %5639 = vmatprep.subr.mxu0 0.0
      %5640 = vmatpush2.msra.mxu0 0.0
      %5641 = vmatprep.subr.mxu0 0.0
      %5642 = vmatpush2.msra.mxu0 0.0
      %5643 = vmatprep.subr.mxu0 0.0
      %5644 = vmatpush2.msra.mxu0 0.0
      %5645 = vmatprep.subr.mxu0 0.0
      %5646 = vmatpush2.msra.mxu0 0.0
      %5647 = vmatprep.subr.mxu0 0.0
      %5648 = vmatpush2.msra.mxu0 0.0
      %5649 = vmatprep.subr.mxu0 0.0
      %5650 = vmatpush2.msra.mxu0 0.0
      %5651 = vmatprep.subr.mxu0 0.0
      %5652 = vmatpush2.msra.mxu0 0.0
      %5653 = vmatprep.subr.mxu0 0.0
      %5654 = vmatpush2.msra.mxu0 0.0
      %5655 = vmatprep.subr.mxu0 0.0
      %5656 = vmatpush2.msra.mxu0 0.0
      %5657 = vmatprep.subr.mxu0 0.0
      %5658 = vmatpush2.msra.mxu0 0.0
      %5659 = vmatprep.subr.mxu0 0.0
      %5660 = vmatpush2.msra.mxu0 0.0
      %5661 = vmatprep.subr.mxu0 0.0
      %5662 = vmatpush2.msra.mxu0 0.0
      %5663 = vmatprep.subr.mxu0 0.0
      %5664 = vmatpush2.msra.mxu0 0.0
      %5665 = vmatprep.subr.mxu0 0.0
      %5666 = vmatpush2.msra.mxu0 0.0
      %5667 = vmatprep.subr.mxu0 0.0
      %5668 = vmatpush2.msra.mxu0 0.0
      %5669 = vmatprep.subr.mxu0 0.0
      %5670 = vmatpush2.msra.mxu0 0.0
      %5671 = vmatprep.mubr.f32.mxu0 0.0
      %5672 = vmatmul.mubr.f32.gmra.mxu0 %v5512
      %v5673 = vpop.f32.mrf.mxu0
      %v5674 = vadd.f32 0.0, %v5673
      %v5675 = vpop.f32.mrf.mxu0
      %5676 = vmatprep.mubr.f32.mxu0 0.0
      %5677 = vmatmul.mubr.f32.gmra.mxu0 %v5515
      %v5678 = vpop.f32.mrf.mxu0
      %v5679 = vadd.f32 0.0, %v5678
      %v5680 = vpop.f32.mrf.mxu0
      %5681 = vmatprep.mubr.f32.mxu0 0.0
      %5682 = vmatmul.mubr.f32.gmra.mxu0 %v5518
      %v5683 = vpop.f32.mrf.mxu0
      %v5684 = vadd.f32 0.0, %v5683
      %v5685 = vpop.f32.mrf.mxu0
      %5686 = vmatprep.mubr.f32.mxu0 0.0
      %5687 = vmatmul.mubr.f32.gmra.mxu0 %v5521
      %v5688 = vpop.f32.mrf.mxu0
      %v5689 = vadd.f32 0.0, %v5688
      %v5690 = vpop.f32.mrf.mxu0
      %5691 = vmatprep.mubr.f32.mxu0 0.0
      %5692 = vmatmul.mubr.f32.gmra.mxu0 %v5524
      %v5693 = vpop.f32.mrf.mxu0
      %v5694 = vadd.f32 0.0, %v5693
      %v5695 = vpop.f32.mrf.mxu0
      %5696 = vmatprep.mubr.f32.mxu0 0.0
      %5697 = vmatmul.mubr.f32.gmra.mxu0 %v5527
      %v5698 = vpop.f32.mrf.mxu0
      %v5699 = vadd.f32 0.0, %v5698
      %v5700 = vpop.f32.mrf.mxu0
      %5701 = vmatprep.mubr.f32.mxu0 0.0
      %5702 = vmatmul.mubr.f32.gmra.mxu0 %v5530
      %v5703 = vpop.f32.mrf.mxu0
      %v5704 = vadd.f32 0.0, %v5703
      %v5705 = vpop.f32.mrf.mxu0
      %5706 = vmatprep.mubr.f32.mxu0 0.0
      %5707 = vmatmul.mubr.f32.gmra.mxu0 %v5533
      %v5708 = vpop.f32.mrf.mxu0
      %v5709 = vadd.f32 0.0, %v5708
      %v5710 = vpop.f32.mrf.mxu0
      %5711 = vmatprep.mubr.f32.mxu0 0.0
      %5712 = vmatmul.mubr.f32.gmra.mxu0 %v5536
      %v5713 = vpop.f32.mrf.mxu0
      %v5714 = vadd.f32 0.0, %v5713
      %v5715 = vpop.f32.mrf.mxu0
      %5716 = vmatprep.mubr.f32.mxu0 0.0
      %5717 = vmatmul.mubr.f32.gmra.mxu0 %v5539
      %v5718 = vpop.f32.mrf.mxu0
      %v5719 = vadd.f32 0.0, %v5718
      %v5720 = vpop.f32.mrf.mxu0
      %5721 = vmatprep.mubr.f32.mxu0 0.0
      %5722 = vmatmul.mubr.f32.gmra.mxu0 %v5542
      %v5723 = vpop.f32.mrf.mxu0
      %v5724 = vadd.f32 0.0, %v5723
      %v5725 = vpop.f32.mrf.mxu0
      %5726 = vmatprep.mubr.f32.mxu0 0.0
      %5727 = vmatmul.mubr.f32.gmra.mxu0 %v5545
      %v5728 = vpop.f32.mrf.mxu0
      %v5729 = vadd.f32 0.0, %v5728
      %v5730 = vpop.f32.mrf.mxu0
      %5731 = vmatprep.mubr.f32.mxu0 0.0
      %5732 = vmatmul.mubr.f32.gmra.mxu0 %v5548
      %v5733 = vpop.f32.mrf.mxu0
      %v5734 = vadd.f32 0.0, %v5733
      %v5735 = vpop.f32.mrf.mxu0
      %5736 = vmatprep.mubr.f32.mxu0 0.0
      %5737 = vmatmul.mubr.f32.gmra.mxu0 %v5551
      %v5738 = vpop.f32.mrf.mxu0
      %v5739 = vadd.f32 0.0, %v5738
      %v5740 = vpop.f32.mrf.mxu0
      %5741 = vmatprep.mubr.f32.mxu0 0.0
      %5742 = vmatmul.mubr.f32.gmra.mxu0 %v5554
      %v5743 = vpop.f32.mrf.mxu0
      %v5744 = vadd.f32 0.0, %v5743
      %v5745 = vpop.f32.mrf.mxu0
      %5746 = vmatprep.mubr.f32.mxu0 0.0
      %5747 = vmatmul.mubr.f32.gmra.mxu0 %v5557
      %v5748 = vpop.f32.mrf.mxu0
      %v5749 = vadd.f32 0.0, %v5748
      %v5750 = vpop.f32.mrf.mxu0
      %5751 = vmatprep.mubr.f32.mxu0 0.0
      %5752 = vmatmul.mubr.f32.gmra.mxu0 %v5560
      %v5753 = vpop.f32.mrf.mxu0
      %v5754 = vadd.f32 0.0, %v5753
      %v5755 = vpop.f32.mrf.mxu0
      %5756 = vmatprep.mubr.f32.mxu0 0.0
      %5757 = vmatmul.mubr.f32.gmra.mxu0 %v5563
      %v5758 = vpop.f32.mrf.mxu0
      %v5759 = vadd.f32 0.0, %v5758
      %v5760 = vpop.f32.mrf.mxu0
      %5761 = vmatprep.mubr.f32.mxu0 0.0
      %5762 = vmatmul.mubr.f32.gmra.mxu0 %v5566
      %v5763 = vpop.f32.mrf.mxu0
      %v5764 = vadd.f32 0.0, %v5763
      %v5765 = vpop.f32.mrf.mxu0
      %5766 = vmatprep.mubr.f32.mxu0 0.0
      %5767 = vmatmul.mubr.f32.gmra.mxu0 %v5569
      %v5768 = vpop.f32.mrf.mxu0
      %v5769 = vadd.f32 0.0, %v5768
      %v5770 = vpop.f32.mrf.mxu0
      %5771 = vmatprep.mubr.f32.mxu0 0.0
      %5772 = vmatmul.mubr.f32.gmra.mxu0 %v5572
      %v5773 = vpop.f32.mrf.mxu0
      %v5774 = vadd.f32 0.0, %v5773
      %v5775 = vpop.f32.mrf.mxu0
      %5776 = vmatprep.mubr.f32.mxu0 0.0
      %5777 = vmatmul.mubr.f32.gmra.mxu0 %v5575
      %v5778 = vpop.f32.mrf.mxu0
      %v5779 = vadd.f32 0.0, %v5778
      %v5780 = vpop.f32.mrf.mxu0
      %5781 = vmatprep.mubr.f32.mxu0 0.0
      %5782 = vmatmul.mubr.f32.gmra.mxu0 %v5578
      %v5783 = vpop.f32.mrf.mxu0
      %v5784 = vadd.f32 0.0, %v5783
      %v5785 = vpop.f32.mrf.mxu0
      %5786 = vmatprep.mubr.f32.mxu0 0.0
      %5787 = vmatmul.mubr.f32.gmra.mxu0 %v5581
      %v5788 = vpop.f32.mrf.mxu0
      %v5789 = vadd.f32 0.0, %v5788
      %v5790 = vpop.f32.mrf.mxu0
      %5791 = vmatprep.mubr.f32.mxu0 0.0
      %5792 = vmatmul.mubr.f32.gmra.mxu0 %v5584
      %v5793 = vpop.f32.mrf.mxu0
      %v5794 = vadd.f32 0.0, %v5793
      %v5795 = vpop.f32.mrf.mxu0
      %5796 = vmatprep.mubr.f32.mxu0 0.0
      %5797 = vmatmul.mubr.f32.gmra.mxu0 %v5587
      %v5798 = vpop.f32.mrf.mxu0
      %v5799 = vadd.f32 0.0, %v5798
      %v5800 = vpop.f32.mrf.mxu0
      %5801 = vmatprep.mubr.f32.mxu0 0.0
      %5802 = vmatmul.mubr.f32.gmra.mxu0 %v5590
      %v5803 = vpop.f32.mrf.mxu0
      %v5804 = vadd.f32 0.0, %v5803
      %v5805 = vpop.f32.mrf.mxu0
      %5806 = vmatprep.mubr.f32.mxu0 0.0
      %5807 = vmatmul.mubr.f32.gmra.mxu0 %v5593
      %v5808 = vpop.f32.mrf.mxu0
      %v5809 = vadd.f32 0.0, %v5808
      %v5810 = vpop.f32.mrf.mxu0
      %5811 = vmatprep.mubr.f32.mxu0 0.0
      %5812 = vmatmul.mubr.f32.gmra.mxu0 %v5596
      %v5813 = vpop.f32.mrf.mxu0
      %v5814 = vadd.f32 0.0, %v5813
      %v5815 = vpop.f32.mrf.mxu0
      %5816 = vmatprep.mubr.f32.mxu0 0.0
      %5817 = vmatmul.mubr.f32.gmra.mxu0 %v5599
      %v5818 = vpop.f32.mrf.mxu0
      %v5819 = vadd.f32 0.0, %v5818
      %v5820 = vpop.f32.mrf.mxu0
      %5821 = vmatprep.mubr.f32.mxu0 0.0
      %5822 = vmatmul.mubr.f32.gmra.mxu0 %v5602
      %v5823 = vpop.f32.mrf.mxu0
      %v5824 = vadd.f32 0.0, %v5823
      %v5825 = vpop.f32.mrf.mxu0
      %5826 = vmatprep.mubr.f32.mxu0 0.0
      %5827 = vmatmul.mubr.f32.gmra.mxu0 %v5605
      %v5828 = vpop.f32.mrf.mxu0
      %v5829 = vadd.f32 0.0, %v5828
      %v5830 = vpop.f32.mrf.mxu0
      %5831 = vdwg.mxu0
      %v5832 = vld [vmem:[%s3] sm:$0x1]
      %v5834 = vlaneseq
      %v5835 = vshrl.u32 %v5834, 7
      %v5836 = vsub.s32 0, %v5835
      %v5837 = vrot.slane %v5832, %v5836
      %v5839 = vmul.f32 %v5674, %v5837
      %v5840 = vmul.f32 %v5679, %v5837
      %v5841 = vmul.f32 %v5684, %v5837
      %v5842 = vmul.f32 %v5689, %v5837
      %v5843 = vmul.f32 %v5694, %v5837
      %v5844 = vmul.f32 %v5699, %v5837
      %v5845 = vmul.f32 %v5704, %v5837
      %v5846 = vmul.f32 %v5709, %v5837
      %v5847 = vmul.f32 %v5714, %v5837
      %v5848 = vmul.f32 %v5719, %v5837
      %v5849 = vmul.f32 %v5724, %v5837
      %v5850 = vmul.f32 %v5729, %v5837
      %v5851 = vmul.f32 %v5734, %v5837
      %v5852 = vmul.f32 %v5739, %v5837
      %v5853 = vmul.f32 %v5744, %v5837
      %v5854 = vmul.f32 %v5749, %v5837
      %v5855 = vmul.f32 %v5754, %v5837
      %v5856 = vmul.f32 %v5759, %v5837
      %v5857 = vmul.f32 %v5764, %v5837
      %v5858 = vmul.f32 %v5769, %v5837
      %v5859 = vmul.f32 %v5774, %v5837
      %v5860 = vmul.f32 %v5779, %v5837
      %v5861 = vmul.f32 %v5784, %v5837
      %v5862 = vmul.f32 %v5789, %v5837
      %v5863 = vmul.f32 %v5794, %v5837
      %v5864 = vmul.f32 %v5799, %v5837
      %v5865 = vmul.f32 %v5804, %v5837
      %v5866 = vmul.f32 %v5809, %v5837
      %v5867 = vmul.f32 %v5814, %v5837
      %v5868 = vmul.f32 %v5819, %v5837
      %v5869 = vmul.f32 %v5824, %v5837
      %v5870 = vmul.f32 %v5829, %v5837
      %v5871 = vld [vmem:[%s4] sm:$0x1]
      %v5873 = vlaneseq
      %v5874 = vshrl.u32 %v5873, 7
      %v5875 = vsub.s32 0, %v5874
      %v5876 = vrot.slane %v5871, %v5875
      %v5878 = vadd.f32 %v5839, %v5876
      %v5879 = vadd.f32 %v5840, %v5876
      %v5880 = vadd.f32 %v5841, %v5876
      %v5881 = vadd.f32 %v5842, %v5876
      %v5882 = vadd.f32 %v5843, %v5876
      %v5883 = vadd.f32 %v5844, %v5876
      %v5884 = vadd.f32 %v5845, %v5876
      %v5885 = vadd.f32 %v5846, %v5876
      %v5886 = vadd.f32 %v5847, %v5876
      %v5887 = vadd.f32 %v5848, %v5876
      %v5888 = vadd.f32 %v5849, %v5876
      %v5889 = vadd.f32 %v5850, %v5876
      %v5890 = vadd.f32 %v5851, %v5876
      %v5891 = vadd.f32 %v5852, %v5876
      %v5892 = vadd.f32 %v5853, %v5876
      %v5893 = vadd.f32 %v5854, %v5876
      %v5894 = vadd.f32 %v5855, %v5876
      %v5895 = vadd.f32 %v5856, %v5876
      %v5896 = vadd.f32 %v5857, %v5876
      %v5897 = vadd.f32 %v5858, %v5876
      %v5898 = vadd.f32 %v5859, %v5876
      %v5899 = vadd.f32 %v5860, %v5876
      %v5900 = vadd.f32 %v5861, %v5876
      %v5901 = vadd.f32 %v5862, %v5876
      %v5902 = vadd.f32 %v5863, %v5876
      %v5903 = vadd.f32 %v5864, %v5876
      %v5904 = vadd.f32 %v5865, %v5876
      %v5905 = vadd.f32 %v5866, %v5876
      %v5906 = vadd.f32 %v5867, %v5876
      %v5907 = vadd.f32 %v5868, %v5876
      %v5908 = vadd.f32 %v5869, %v5876
      %v5909 = vadd.f32 %v5870, %v5876
      %v5910 = vmax.f32 %v5878, 0.0
      %v5911 = vmax.f32 %v5879, 0.0
      %v5912 = vmax.f32 %v5880, 0.0
      %v5913 = vmax.f32 %v5881, 0.0
      %v5914 = vmax.f32 %v5882, 0.0
      %v5915 = vmax.f32 %v5883, 0.0
      %v5916 = vmax.f32 %v5884, 0.0
      %v5917 = vmax.f32 %v5885, 0.0
      %v5918 = vmax.f32 %v5886, 0.0
      %v5919 = vmax.f32 %v5887, 0.0
      %v5920 = vmax.f32 %v5888, 0.0
      %v5921 = vmax.f32 %v5889, 0.0
      %v5922 = vmax.f32 %v5890, 0.0
      %v5923 = vmax.f32 %v5891, 0.0
      %v5924 = vmax.f32 %v5892, 0.0
      %v5925 = vmax.f32 %v5893, 0.0
      %v5926 = vmax.f32 %v5894, 0.0
      %v5927 = vmax.f32 %v5895, 0.0
      %v5928 = vmax.f32 %v5896, 0.0
      %v5929 = vmax.f32 %v5897, 0.0
      %v5930 = vmax.f32 %v5898, 0.0
      %v5931 = vmax.f32 %v5899, 0.0
      %v5932 = vmax.f32 %v5900, 0.0
      %v5933 = vmax.f32 %v5901, 0.0
      %v5934 = vmax.f32 %v5902, 0.0
      %v5935 = vmax.f32 %v5903, 0.0
      %v5936 = vmax.f32 %v5904, 0.0
      %v5937 = vmax.f32 %v5905, 0.0
      %v5938 = vmax.f32 %v5906, 0.0
      %v5939 = vmax.f32 %v5907, 0.0
      %v5940 = vmax.f32 %v5908, 0.0
      %v5941 = vmax.f32 %v5909, 0.0
      %5942 = vxpose.xlu0.b32.start [1/16] %v5910, 128
      %5943 = vxpose.xlu0.b32.cont [2/16] %v5911, 128
      %5944 = vxpose.xlu0.b32.cont [3/16] %v5912, 128
      %5945 = vxpose.xlu0.b32.cont [4/16] %v5913, 128
      %5946 = vxpose.xlu0.b32.cont [5/16] %v5914, 128
      %5947 = vxpose.xlu0.b32.cont [6/16] %v5915, 128
      %5948 = vxpose.xlu0.b32.cont [7/16] %v5916, 128
      %5949 = vxpose.xlu0.b32.cont [8/16] %v5917, 128
      %5950 = vxpose.xlu0.b32.cont [9/16] %v5918, 128
      %5951 = vxpose.xlu0.b32.cont [10/16] %v5919, 128
      %5952 = vxpose.xlu0.b32.cont [11/16] %v5920, 128
      %5953 = vxpose.xlu0.b32.cont [12/16] %v5921, 128
      %5954 = vxpose.xlu0.b32.cont [13/16] %v5922, 128
      %5955 = vxpose.xlu0.b32.cont [14/16] %v5923, 128
      %5956 = vxpose.xlu0.b32.cont [15/16] %v5924, 128
      %5957 = vxpose.xlu0.b32.end [16/16] %v5925, 128
      %v5958 = vpop.trf.xlu0
      %v5959 = vpop.trf.xlu0
      %v5960 = vpop.trf.xlu0
      %v5961 = vpop.trf.xlu0
      %v5962 = vpop.trf.xlu0
      %v5963 = vpop.trf.xlu0
      %v5964 = vpop.trf.xlu0
      %v5965 = vpop.trf.xlu0
      %v5966 = vpop.trf.xlu0
      %v5967 = vpop.trf.xlu0
      %v5968 = vpop.trf.xlu0
      %v5969 = vpop.trf.xlu0
      %v5970 = vpop.trf.xlu0
      %v5971 = vpop.trf.xlu0
      %v5972 = vpop.trf.xlu0
      %v5973 = vpop.trf.xlu0
      %5974 = vxpose.xlu0.b32.start [1/16] %v5926, 128
      %5975 = vxpose.xlu0.b32.cont [2/16] %v5927, 128
      %5976 = vxpose.xlu0.b32.cont [3/16] %v5928, 128
      %5977 = vxpose.xlu0.b32.cont [4/16] %v5929, 128
      %5978 = vxpose.xlu0.b32.cont [5/16] %v5930, 128
      %5979 = vxpose.xlu0.b32.cont [6/16] %v5931, 128
      %5980 = vxpose.xlu0.b32.cont [7/16] %v5932, 128
      %5981 = vxpose.xlu0.b32.cont [8/16] %v5933, 128
      %5982 = vxpose.xlu0.b32.cont [9/16] %v5934, 128
      %5983 = vxpose.xlu0.b32.cont [10/16] %v5935, 128
      %5984 = vxpose.xlu0.b32.cont [11/16] %v5936, 128
      %5985 = vxpose.xlu0.b32.cont [12/16] %v5937, 128
      %5986 = vxpose.xlu0.b32.cont [13/16] %v5938, 128
      %5987 = vxpose.xlu0.b32.cont [14/16] %v5939, 128
      %5988 = vxpose.xlu0.b32.cont [15/16] %v5940, 128
      %5989 = vxpose.xlu0.b32.end [16/16] %v5941, 128
      %v5990 = vpop.trf.xlu0
      %v5991 = vpop.trf.xlu0
      %v5992 = vpop.trf.xlu0
      %v5993 = vpop.trf.xlu0
      %v5994 = vpop.trf.xlu0
      %v5995 = vpop.trf.xlu0
      %v5996 = vpop.trf.xlu0
      %v5997 = vpop.trf.xlu0
      %v5998 = vpop.trf.xlu0
      %v5999 = vpop.trf.xlu0
      %v6000 = vpop.trf.xlu0
      %v6001 = vpop.trf.xlu0
      %v6002 = vpop.trf.xlu0
      %v6003 = vpop.trf.xlu0
      %v6004 = vpop.trf.xlu0
      %v6005 = vpop.trf.xlu0
      %6006 = vst [vmem:[%s224] sm:$0xff] %v5958
      %6007 = vst [vmem:[%s224 + $0x8] sm:$0xff] %v5990
      %p6008 = scmp.lt.s32.totalorder %s16, 1
      %s6009 = scalar_select %p6008, %s16, 1
      %s6010 = smul.addr %s6009, 2
      %s6011 = smul.addr %s6010, 8
      %s6012 = scalar_lea.vmem %s5, %s6011
      // Predicated region
      $region41: #{lam_forward_pallas.1} parent=39 // pred_check
        %p6013 = pneg %p144
      $region42: #{lam_forward_pallas.1} parent=39 // pred_check_branch
        %6015 = sbr.rel (%p6013) target = $region44
      $region43: #{lam_forward_pallas.1} parent=39 // pred_region
        _
      $region44: #{lam_forward_pallas.1} parent=39 // pred_fallthru
        _
    $region40: #{lam_forward_pallas.1} parent=5 // pred_fallthru
      _
    %p6016 = scmp.le.s32.totalorder 2, %s11
    // Predicated region
    $region45: #{lam_forward_pallas.1} parent=5 // pred_check
      %p6017 = pneg %p6016
    $region46: #{lam_forward_pallas.1} parent=5 // pred_check_branch
      %6019 = sbr.rel (%p6017) target = $region48
    $region47: #{lam_forward_pallas.1} parent=5 // pred_region
      %s6020 = ssub.s32 %s11, 2
      // Predicated region
      $region49: #{lam_forward_pallas.1} parent=47 // pred_check
        %p6021 = pneg %p150
      $region50: #{lam_forward_pallas.1} parent=47 // pred_check_branch
        %6023 = sbr.rel (%p6021) target = $region52
      $region51: #{lam_forward_pallas.1} parent=47 // pred_region
        %p6024 = scmp.lt.s32.totalorder %s17, 1
        %s6025 = scalar_select %p6024, %s17, 1
        %s6026 = smul.addr %s6025, 2
        %s6027 = smul.addr %s6026, 8
        %s6028 = scalar_lea.vmem %s5, %s6027
      $region52: #{lam_forward_pallas.1} parent=47 // pred_fallthru
        _
    $region48: #{lam_forward_pallas.1} parent=5 // pred_fallthru
      _
  $region6: #{lam_forward_pallas.1} parent=0 // loop_footer
    %s15 = sadd.s32 1, %s11
  $region7: #{lam_forward_pallas.1} parent=0 // loop_footer_branch
    %10 = sbr.rel target = $region3
  $region8: #{lam_forward_pallas.1} parent=0 // loop_exit
    _

</llo_original>
